<compile_context>
chip_gen: v7x
topology: tpu7x:2x2x1
jax: 0.10.0
libtpu: 0.0.40
codegen_flags: <defaults>
</compile_context>

<pallas_src>
import jax
import jax.numpy as jnp
from jax.experimental import pallas as pl
from jax.experimental.pallas import tpu as pltpu

INPUT_SIZE = 100      # latent dim
H1, H2, H3, H4 = 128, 256, 512, 1024
OUT_FEATURES = 784    # 1 x 28 x 28
K_PAD = 128           # input contraction dim padded to one full lane group
OUT_PAD = 896         # 7 * 128: lane-dense output store
BN_EPS = 1e-5


def _round_up(n, m):
    return ((n + m - 1) // m) * m


def _leaky_relu(x, slope=0.2):
    # max(x, slope*x) == LeakyReLU(slope) for 0 < slope < 1.
    # 2 VALU ops (mul + max) instead of 3 (cmp + mul + select) from jnp.where.
    return jnp.maximum(x, slope * x)


def generator_kernel(x_ref,
                     w1_ref, c1_ref,
                     w2_ref, c2_ref,
                     w3_ref, c3_ref,
                     w4_ref, c4_ref,
                     w5_ref, c5_ref,
                     o_ref):
    """Fused 5-layer MLP: matmuls on the MXU (f32 accumulation), elementwise
    in f32.  Eval-mode BatchNorm is pre-folded into the weights/biases."""
    cdt = w1_ref.dtype  # matmul-input dtype (bf16 by default, f32 optional)

    # Layer 1: (tb, 128) @ (128, 128) + bias -> LeakyReLU
    h = jnp.dot(x_ref[...], w1_ref[...], preferred_element_type=jnp.float32)
    h = _leaky_relu(h + c1_ref[...])

    # Layer 2: (tb, 128) @ (128, 256) + (bias+BN) -> LeakyReLU
    h = jnp.dot(h.astype(cdt), w2_ref[...], preferred_element_type=jnp.float32)
    h = _leaky_relu(h + c2_ref[...])

    # Layer 3: (tb, 256) @ (256, 512) + (bias+BN) -> LeakyReLU
    h = jnp.dot(h.astype(cdt), w3_ref[...], preferred_element_type=jnp.float32)
    h = _leaky_relu(h + c3_ref[...])

    # Layer 4: (tb, 512) @ (512, 1024) + (bias+BN) -> LeakyReLU
    h = jnp.dot(h.astype(cdt), w4_ref[...], preferred_element_type=jnp.float32)
    h = _leaky_relu(h + c4_ref[...])

    # Layer 5: (tb, 1024) @ (1024, 896) + bias -> Tanh (EUP), lane-dense store
    h = jnp.dot(h.astype(cdt), w5_ref[...], preferred_element_type=jnp.float32)
    o_ref[...] = jnp.tanh(h + c5_ref[...]).astype(o_ref.dtype)


def _fold_params(params, matmul_dtype):
    """Fold eval-mode BatchNorm into the preceding Linear and pad for lanes."""
    (w1, b1), l2, l3, l4, (w5, b5) = params

    # Pad the input contraction dim 100 -> 128 with zero rows.
    w1p = jnp.zeros((K_PAD, H1), jnp.float32).at[:INPUT_SIZE, :].set(w1)
    c1 = b1.reshape(1, H1)

    def fold_bn(layer):
        w, b, g, be, m, v = layer
        scale = g / jnp.sqrt(v + BN_EPS)       # (out,)
        wf = w * scale[None, :]                # BN scale folded into weight
        c = (b - m) * scale + be               # bias + BN shift
        return wf, c.reshape(1, -1)

    w2f, c2 = fold_bn(l2)
    w3f, c3 = fold_bn(l3)
    w4f, c4 = fold_bn(l4)

    # Pad the output dim 784 -> 896 (7*128) with zero columns (lane-dense store).
    w5p = jnp.zeros((H4, OUT_PAD), jnp.float32).at[:, :OUT_FEATURES].set(w5)
    c5 = jnp.zeros((1, OUT_PAD), jnp.float32).at[0, :OUT_FEATURES].set(b5)

    ws = tuple(w.astype(matmul_dtype) for w in (w1p, w2f, w3f, w4f, w5p))
    cs = tuple(c.astype(jnp.float32) for c in (c1, c2, c3, c4, c5))
    return ws, cs


def _single_buffer_kwargs():
    """Single-buffer the constant (weight/bias) blocks: their index_map never
    changes so double-buffering buys nothing; this halves resident weight VMEM.
    Fall back to the default if this JAX build rejects pipeline_mode."""
    try:
        kw = dict(pipeline_mode=pl.Buffered(1))
        pl.BlockSpec((8, 128), lambda i: (0, 0), **kw)
        return kw
    except Exception:
        return {}


def generator_forward(x, params, *, tile_b=512, matmul_dtype=jnp.bfloat16,
                      out_dtype=jnp.bfloat16):
    """x: (B, 100) float32 latent.  Returns (B, 1, 28, 28) in `out_dtype`."""
    B = x.shape[0]
    x2d = x.reshape(B, -1).astype(jnp.float32)
    assert x2d.shape[1] == INPUT_SIZE

    (w1, w2, w3, w4, w5), (c1, c2, c3, c4, c5) = _fold_params(params, matmul_dtype)

    # ---- batch tiling -------------------------------------------------------
    #  * 16-row granularity for bf16 (full packed sublanes per vreg), 8 for f32
    #  * >= 2 grid steps whenever the batch can be split: keeps both v7x
    #    TensorCores busy on the "parallel" grid axis (cheap elsewhere)
    #  * balance the tile so padded-row waste stays under one granule
    #    (e.g. B=300 -> tb=160, bp=320 rather than tb=256, bp=512)
    gran = 16 if matmul_dtype == jnp.bfloat16 else 8
    n_tiles = max(pl.cdiv(B, tile_b), 2 if B >= 2 * gran else 1)
    tb = _round_up(pl.cdiv(B, n_tiles), gran)
    bp = _round_up(B, tb)
    grid = (bp // tb,)

    xp = jnp.zeros((bp, K_PAD), matmul_dtype).at[:B, :INPUT_SIZE].set(
        x2d.astype(matmul_dtype))

    sb = _single_buffer_kwargs()
    const = lambda shape: pl.BlockSpec(shape, lambda i: (0, 0), **sb)

    out = pl.pallas_call(
        generator_kernel,
        out_shape=jax.ShapeDtypeStruct((bp, OUT_PAD), out_dtype),
        grid_spec=pltpu.PrefetchScalarGridSpec(
            num_scalar_prefetch=0,
            grid=grid,
            in_specs=[
                pl.BlockSpec((tb, K_PAD), lambda i: (i, 0)),   # x batch tile
                const((K_PAD, H1)),   const((1, H1)),          # layer 1
                const((H1, H2)),      const((1, H2)),          # layer 2 (+BN)
                const((H2, H3)),      const((1, H3)),          # layer 3 (+BN)
                const((H3, H4)),      const((1, H4)),          # layer 4 (+BN)
                const((H4, OUT_PAD)), const((1, OUT_PAD)),     # layer 5
            ],
            out_specs=pl.BlockSpec((tb, OUT_PAD), lambda i: (i, 0)),
        ),
        compiler_params=pltpu.CompilerParams(
            dimension_semantics=("parallel",),
            vmem_limit_bytes=32 * 1024 * 1024,
        ),
    )(xp, w1, c1, w2, c2, w3, c3, w4, c4, w5, c5)

    # Slice off padded rows/cols in out_dtype (bf16 by default -> half the
    # copy traffic of an f32 slice).  Callers wanting zero extra copies can
    # consume the padded (bp, 896) buffer directly.
    return out[:B, :OUT_FEATURES].reshape(B, 1, 28, 28)


def init_params(key):
    """Mimics nn.Linear U(-1/sqrt(fan_in), 1/sqrt(fan_in)); BN stats are
    nontrivial so the eval-mode BN fold is actually exercised."""
    ks = iter(jax.random.split(key, 22))

    def linear(fan_in, fan_out):
        bound = 1.0 / (fan_in ** 0.5)
        w = jax.random.uniform(next(ks), (fan_in, fan_out), jnp.float32, -bound, bound)
        b = jax.random.uniform(next(ks), (fan_out,), jnp.float32, -bound, bound)
        return w, b

    def bn(n):
        g = jax.random.uniform(next(ks), (n,), jnp.float32, 0.5, 1.5)
        be = jax.random.uniform(next(ks), (n,), jnp.float32, -0.2, 0.2)
        m = 0.2 * jax.random.normal(next(ks), (n,), jnp.float32)
        v = jax.random.uniform(next(ks), (n,), jnp.float32, 0.5, 1.5)
        return g, be, m, v

    w1, b1 = linear(INPUT_SIZE, H1)
    w2, b2 = linear(H1, H2); g2, be2, m2, v2 = bn(H2)
    w3, b3 = linear(H2, H3); g3, be3, m3, v3 = bn(H3)
    w4, b4 = linear(H3, H4); g4, be4, m4, v4 = bn(H4)
    w5, b5 = linear(H4, OUT_FEATURES)
    return ((w1, b1),
            (w2, b2, g2, be2, m2, v2),
            (w3, b3, g3, be3, m3, v3),
            (w4, b4, g4, be4, m4, v4),
            (w5, b5))


def _reference_forward(x, params):
    """Pure-JAX f32 reference (eval-mode BatchNorm), HIGHEST matmul precision."""
    (w1, b1), (w2, b2, g2, be2, m2, v2), (w3, b3, g3, be3, m3, v3), \
        (w4, b4, g4, be4, m4, v4), (w5, b5) = params
    hi = jax.lax.Precision.HIGHEST
    leaky = lambda t: jnp.where(t > 0, t, 0.2 * t)
    bn = lambda z, g, be, m, v: (z - m) / jnp.sqrt(v + BN_EPS) * g + be

    h = x.reshape(x.shape[0], -1)
    h = leaky(jnp.dot(h, w1, precision=hi) + b1)
    h = leaky(bn(jnp.dot(h, w2, precision=hi) + b2, g2, be2, m2, v2))
    h = leaky(bn(jnp.dot(h, w3, precision=hi) + b3, g3, be3, m3, v3))
    h = leaky(bn(jnp.dot(h, w4, precision=hi) + b4, g4, be4, m4, v4))
    y = jnp.tanh(jnp.dot(h, w5, precision=hi) + b5)
    return y.reshape(x.shape[0], 1, 28, 28)


if __name__ == "__main__":
    key = jax.random.PRNGKey(0)
    k_x, k_p, k_x2 = jax.random.split(key, 3)
    params = init_params(k_p)

    # Small batch (single tile on bf16 path, 2 tiles on f32 path).
    B = 16
    x = jax.random.normal(k_x, (B, INPUT_SIZE), jnp.float32)
    y_ref = _reference_forward(x, params)

    # Exact-ish f32 path: f32 matmul inputs, f32 writeback.
    y_f32 = jax.block_until_ready(
        generator_forward(x, params, matmul_dtype=jnp.float32,
                          out_dtype=jnp.float32))
    assert y_f32.shape == (B, 1, 28, 28)
    assert jnp.allclose(y_f32, y_ref, atol=2e-3, rtol=2e-3), "f32 path mismatch"

    # Default bf16 path (bf16 matmul inputs + bf16 writeback).
    y_bf16 = jax.block_until_ready(generator_forward(x, params))
    assert y_bf16.shape == (B, 1, 28, 28)
    assert y_bf16.dtype == jnp.bfloat16
    assert jnp.allclose(y_bf16.astype(jnp.float32), y_ref,
                        atol=6e-2, rtol=6e-2), "bf16 path mismatch"

    # Odd-sized batch: exercises the balanced-tile / multi-grid-step path
    # (B=300 -> tb=160, padded batch 320, grid of 2 parallel steps).
    B2 = 300
    x2 = jax.random.normal(k_x2, (B2, INPUT_SIZE), jnp.float32)
    y2_ref = _reference_forward(x2, params)
    y2 = jax.block_until_ready(generator_forward(x2, params))
    assert y2.shape == (B2, 1, 28, 28)
    assert jnp.allclose(y2.astype(jnp.float32), y2_ref,
                        atol=6e-2, rtol=6e-2), "multi-tile bf16 mismatch"

    print("KERNEL_OK")
</pallas_src>

<mosaic_0001>
module attributes {stable_mosaic.version = 11 : i64} {
  func.func @generator_kernel(%arg0: i32, %arg1: memref<8x128xf32, #tpu.memory_space<vmem>>, %arg2: memref<128x128xf32, #tpu.memory_space<vmem>>, %arg3: memref<1x128xf32, #tpu.memory_space<vmem>>, %arg4: memref<128x256xf32, #tpu.memory_space<vmem>>, %arg5: memref<1x256xf32, #tpu.memory_space<vmem>>, %arg6: memref<256x512xf32, #tpu.memory_space<vmem>>, %arg7: memref<1x512xf32, #tpu.memory_space<vmem>>, %arg8: memref<512x1024xf32, #tpu.memory_space<vmem>>, %arg9: memref<1x1024xf32, #tpu.memory_space<vmem>>, %arg10: memref<1024x896xf32, #tpu.memory_space<vmem>>, %arg11: memref<1x896xf32, #tpu.memory_space<vmem>>, %arg12: memref<8x896xf32, #tpu.memory_space<vmem>>) attributes {dimension_semantics = [#tpu.dimension_semantics<parallel>], iteration_bounds = array<i64: 2>, scalar_prefetch = 0 : i64, scratch_operands = 0 : i64, tpu.core_type = #tpu.core_type<tc>, window_params = [{transform_indices = @transform_0, window_bounds = array<i64: 8, 128>}, {pipeline_mode = #tpu.pipeline_mode<synchronous>, transform_indices = @transform_1, window_bounds = array<i64: 128, 128>}, {pipeline_mode = #tpu.pipeline_mode<synchronous>, transform_indices = @transform_2, window_bounds = array<i64: 1, 128>}, {pipeline_mode = #tpu.pipeline_mode<synchronous>, transform_indices = @transform_3, window_bounds = array<i64: 128, 256>}, {pipeline_mode = #tpu.pipeline_mode<synchronous>, transform_indices = @transform_4, window_bounds = array<i64: 1, 256>}, {pipeline_mode = #tpu.pipeline_mode<synchronous>, transform_indices = @transform_5, window_bounds = array<i64: 256, 512>}, {pipeline_mode = #tpu.pipeline_mode<synchronous>, transform_indices = @transform_6, window_bounds = array<i64: 1, 512>}, {pipeline_mode = #tpu.pipeline_mode<synchronous>, transform_indices = @transform_7, window_bounds = array<i64: 512, 1024>}, {pipeline_mode = #tpu.pipeline_mode<synchronous>, transform_indices = @transform_8, window_bounds = array<i64: 1, 1024>}, {pipeline_mode = #tpu.pipeline_mode<synchronous>, transform_indices = @transform_9, window_bounds = array<i64: 1024, 896>}, {pipeline_mode = #tpu.pipeline_mode<synchronous>, transform_indices = @transform_10, window_bounds = array<i64: 1, 896>}, {transform_indices = @transform_11, window_bounds = array<i64: 8, 896>}]} {
    %c0 = arith.constant 0 : index
    %c0_0 = arith.constant 0 : index
    %0 = vector.load %arg1[%c0, %c0_0] : memref<8x128xf32, #tpu.memory_space<vmem>>, vector<8x128xf32>
    %c0_1 = arith.constant 0 : index
    %c0_2 = arith.constant 0 : index
    %1 = vector.load %arg2[%c0_1, %c0_2] : memref<128x128xf32, #tpu.memory_space<vmem>>, vector<128x128xf32>
    %cst = arith.constant dense<0.000000e+00> : vector<8x128xf32>
    %2 = tpu.matmul %0, %1, %cst {dimension_numbers = #tpu.dot_dimension_numbers<[1], [0], [0], [1], [0, 0, 1, 1], [], []>} : vector<8x128xf32>, vector<128x128xf32>, vector<8x128xf32> -> vector<8x128xf32>
    %c0_3 = arith.constant 0 : index
    %c0_4 = arith.constant 0 : index
    %3 = vector.load %arg3[%c0_3, %c0_4] : memref<1x128xf32, #tpu.memory_space<vmem>>, vector<1x128xf32>
    %4 = vector.broadcast %3 : vector<1x128xf32> to vector<8x128xf32>
    %5 = arith.addf %2, %4 : vector<8x128xf32>
    %cst_5 = arith.constant 2.000000e-01 : f32
    %6 = vector.broadcast %cst_5 : f32 to vector<8x128xf32>
    %7 = arith.mulf %6, %5 : vector<8x128xf32>
    %8 = arith.maximumf %5, %7 : vector<8x128xf32>
    %c0_6 = arith.constant 0 : index
    %c0_7 = arith.constant 0 : index
    %9 = vector.load %arg4[%c0_6, %c0_7] : memref<128x256xf32, #tpu.memory_space<vmem>>, vector<128x256xf32>
    %cst_8 = arith.constant dense<0.000000e+00> : vector<8x256xf32>
    %10 = tpu.matmul %8, %9, %cst_8 {dimension_numbers = #tpu.dot_dimension_numbers<[1], [0], [0], [1], [0, 0, 1, 1], [], []>} : vector<8x128xf32>, vector<128x256xf32>, vector<8x256xf32> -> vector<8x256xf32>
    %c0_9 = arith.constant 0 : index
    %c0_10 = arith.constant 0 : index
    %11 = vector.load %arg5[%c0_9, %c0_10] : memref<1x256xf32, #tpu.memory_space<vmem>>, vector<1x256xf32>
    %12 = vector.broadcast %11 : vector<1x256xf32> to vector<8x256xf32>
    %13 = arith.addf %10, %12 : vector<8x256xf32>
    %cst_11 = arith.constant 2.000000e-01 : f32
    %14 = vector.broadcast %cst_11 : f32 to vector<8x256xf32>
    %15 = arith.mulf %14, %13 : vector<8x256xf32>
    %16 = arith.maximumf %13, %15 : vector<8x256xf32>
    %c0_12 = arith.constant 0 : index
    %c0_13 = arith.constant 0 : index
    %17 = vector.load %arg6[%c0_12, %c0_13] : memref<256x512xf32, #tpu.memory_space<vmem>>, vector<256x512xf32>
    %cst_14 = arith.constant dense<0.000000e+00> : vector<8x512xf32>
    %18 = tpu.matmul %16, %17, %cst_14 {dimension_numbers = #tpu.dot_dimension_numbers<[1], [0], [0], [1], [0, 0, 1, 1], [], []>} : vector<8x256xf32>, vector<256x512xf32>, vector<8x512xf32> -> vector<8x512xf32>
    %c0_15 = arith.constant 0 : index
    %c0_16 = arith.constant 0 : index
    %19 = vector.load %arg7[%c0_15, %c0_16] : memref<1x512xf32, #tpu.memory_space<vmem>>, vector<1x512xf32>
    %20 = vector.broadcast %19 : vector<1x512xf32> to vector<8x512xf32>
    %21 = arith.addf %18, %20 : vector<8x512xf32>
    %cst_17 = arith.constant 2.000000e-01 : f32
    %22 = vector.broadcast %cst_17 : f32 to vector<8x512xf32>
    %23 = arith.mulf %22, %21 : vector<8x512xf32>
    %24 = arith.maximumf %21, %23 : vector<8x512xf32>
    %c0_18 = arith.constant 0 : index
    %c0_19 = arith.constant 0 : index
    %25 = vector.load %arg8[%c0_18, %c0_19] : memref<512x1024xf32, #tpu.memory_space<vmem>>, vector<512x1024xf32>
    %cst_20 = arith.constant dense<0.000000e+00> : vector<8x1024xf32>
    %26 = tpu.matmul %24, %25, %cst_20 {dimension_numbers = #tpu.dot_dimension_numbers<[1], [0], [0], [1], [0, 0, 1, 1], [], []>} : vector<8x512xf32>, vector<512x1024xf32>, vector<8x1024xf32> -> vector<8x1024xf32>
    %c0_21 = arith.constant 0 : index
    %c0_22 = arith.constant 0 : index
    %27 = vector.load %arg9[%c0_21, %c0_22] : memref<1x1024xf32, #tpu.memory_space<vmem>>, vector<1x1024xf32>
    %28 = vector.broadcast %27 : vector<1x1024xf32> to vector<8x1024xf32>
    %29 = arith.addf %26, %28 : vector<8x1024xf32>
    %cst_23 = arith.constant 2.000000e-01 : f32
    %30 = vector.broadcast %cst_23 : f32 to vector<8x1024xf32>
    %31 = arith.mulf %30, %29 : vector<8x1024xf32>
    %32 = arith.maximumf %29, %31 : vector<8x1024xf32>
    %c0_24 = arith.constant 0 : index
    %c0_25 = arith.constant 0 : index
    %33 = vector.load %arg10[%c0_24, %c0_25] : memref<1024x896xf32, #tpu.memory_space<vmem>>, vector<1024x896xf32>
    %cst_26 = arith.constant dense<0.000000e+00> : vector<8x896xf32>
    %34 = tpu.matmul %32, %33, %cst_26 {dimension_numbers = #tpu.dot_dimension_numbers<[1], [0], [0], [1], [0, 0, 1, 1], [], []>} : vector<8x1024xf32>, vector<1024x896xf32>, vector<8x896xf32> -> vector<8x896xf32>
    %c0_27 = arith.constant 0 : index
    %c0_28 = arith.constant 0 : index
    %35 = vector.load %arg11[%c0_27, %c0_28] : memref<1x896xf32, #tpu.memory_space<vmem>>, vector<1x896xf32>
    %36 = vector.broadcast %35 : vector<1x896xf32> to vector<8x896xf32>
    %37 = arith.addf %34, %36 : vector<8x896xf32>
    %38 = math.tanh %37 : vector<8x896xf32>
    %c0_29 = arith.constant 0 : index
    %c0_30 = arith.constant 0 : index
    %39 = vector.load %arg12[%c0_29, %c0_30] : memref<8x896xf32, #tpu.memory_space<vmem>>, vector<8x896xf32>
    tpu.vector_store %arg12[%c0_29, %c0_30], %38 {strides = array<i32>} : memref<8x896xf32, #tpu.memory_space<vmem>>, vector<8x896xf32>,
    return
  }
  func.func @transform_0(%arg0: i32) -> (i32, i32) {
    %c0_i32 = arith.constant 0 : i32
    %c0_i32_0 = arith.constant 0 : i32
    return %arg0, %c0_i32 : i32, i32
  }
  func.func @transform_1(%arg0: i32) -> (i32, i32) {
    %c0_i32 = arith.constant 0 : i32
    %c0_i32_0 = arith.constant 0 : i32
    %c0_i32_1 = arith.constant 0 : i32
    return %c0_i32, %c0_i32_0 : i32, i32
  }
  func.func @transform_2(%arg0: i32) -> (i32, i32) {
    %c0_i32 = arith.constant 0 : i32
    %c0_i32_0 = arith.constant 0 : i32
    %c0_i32_1 = arith.constant 0 : i32
    return %c0_i32, %c0_i32_0 : i32, i32
  }
  func.func @transform_3(%arg0: i32) -> (i32, i32) {
    %c0_i32 = arith.constant 0 : i32
    %c0_i32_0 = arith.constant 0 : i32
    %c0_i32_1 = arith.constant 0 : i32
    return %c0_i32, %c0_i32_0 : i32, i32
  }
  func.func @transform_4(%arg0: i32) -> (i32, i32) {
    %c0_i32 = arith.constant 0 : i32
    %c0_i32_0 = arith.constant 0 : i32
    %c0_i32_1 = arith.constant 0 : i32
    return %c0_i32, %c0_i32_0 : i32, i32
  }
  func.func @transform_5(%arg0: i32) -> (i32, i32) {
    %c0_i32 = arith.constant 0 : i32
    %c0_i32_0 = arith.constant 0 : i32
    %c0_i32_1 = arith.constant 0 : i32
    return %c0_i32, %c0_i32_0 : i32, i32
  }
  func.func @transform_6(%arg0: i32) -> (i32, i32) {
    %c0_i32 = arith.constant 0 : i32
    %c0_i32_0 = arith.constant 0 : i32
    %c0_i32_1 = arith.constant 0 : i32
    return %c0_i32, %c0_i32_0 : i32, i32
  }
  func.func @transform_7(%arg0: i32) -> (i32, i32) {
    %c0_i32 = arith.constant 0 : i32
    %c0_i32_0 = arith.constant 0 : i32
    %c0_i32_1 = arith.constant 0 : i32
    return %c0_i32, %c0_i32_0 : i32, i32
  }
  func.func @transform_8(%arg0: i32) -> (i32, i32) {
    %c0_i32 = arith.constant 0 : i32
    %c0_i32_0 = arith.constant 0 : i32
    %c0_i32_1 = arith.constant 0 : i32
    return %c0_i32, %c0_i32_0 : i32, i32
  }
  func.func @transform_9(%arg0: i32) -> (i32, i32) {
    %c0_i32 = arith.constant 0 : i32
    %c0_i32_0 = arith.constant 0 : i32
    %c0_i32_1 = arith.constant 0 : i32
    return %c0_i32, %c0_i32_0 : i32, i32
  }
  func.func @transform_10(%arg0: i32) -> (i32, i32) {
    %c0_i32 = arith.constant 0 : i32
    %c0_i32_0 = arith.constant 0 : i32
    %c0_i32_1 = arith.constant 0 : i32
    return %c0_i32, %c0_i32_0 : i32, i32
  }
  func.func @transform_11(%arg0: i32) -> (i32, i32) {
    %c0_i32 = arith.constant 0 : i32
    %c0_i32_0 = arith.constant 0 : i32
    return %arg0, %c0_i32 : i32, i32
  }
}

</mosaic_0001>

<llo_original>
// kernel: tpu_custom_call.1
$region0: #{tpu_custom_call.1}
  #allocation0 [shape = 'u32[]', space=smem, size = 0x4, offset = 0x4, fixed_abs, tag = 'smem constant byte address 0x4 - core index']
  #allocation1 [shape = 'u32[144,128]{1,0:T(1,128)}', space=vmem, size = 0x12000, scoped, tag = 'internal scratch']
  %s0 = inlined_call_operand.hbm [shape: f32[16,128], index: 0, kind: input, shape index: {}]
  %s1 = inlined_call_operand.hbm [shape: f32[128,128], index: 1, kind: input, shape index: {}]
  %s2 = inlined_call_operand.hbm [shape: f32[1,128], index: 2, kind: input, shape index: {}]
  %s3 = inlined_call_operand.hbm [shape: f32[128,256], index: 3, kind: input, shape index: {}]
  %s4 = inlined_call_operand.hbm [shape: f32[1,256], index: 4, kind: input, shape index: {}]
  %s5 = inlined_call_operand.hbm [shape: f32[256,512], index: 5, kind: input, shape index: {}]
  %s6 = inlined_call_operand.hbm [shape: f32[1,512], index: 6, kind: input, shape index: {}]
  %s7 = inlined_call_operand.hbm [shape: f32[512,1024], index: 7, kind: input, shape index: {}]
  %s8 = inlined_call_operand.hbm [shape: f32[1,1024], index: 8, kind: input, shape index: {}]
  %s9 = inlined_call_operand.hbm [shape: f32[1024,896], index: 9, kind: input, shape index: {}]
  %s10 = inlined_call_operand.hbm [shape: f32[1,896], index: 10, kind: input, shape index: {}]
  %s11 = inlined_call_operand.hbm [shape: f32[16,896], index: 11, kind: output, shape index: {}]
  %s12 = sld [smem:[#allocation0]]
  $region121: #{tpu_custom_call.1} parent=0
    _
  %s14 = ssub.s32 1, %s12
  %s15 = scalar_select 0, %s14, %s12
  $region1: #{tpu_custom_call.1} parent=0
    #allocation2 [shape = 'u8[8192]{0}', space=vmem, size = 0x2000, scoped, tag = 'input window, operand 0']
    #allocation3 [shape = 's32[2]{0}', space=sflag, size = 0x8, scoped, tag = 'scoped memory for tpu_custom_call.1']
    #allocation4 [shape = 's32[2]{0}', space=sflag, size = 0x8, scoped, tag = 'scoped memory for tpu_custom_call.1']
    #allocation5 [shape = 'u8[65536]{0}', space=vmem, size = 0x10000, scoped, tag = 'input window, operand 1, single buffered']
    #allocation6 [shape = 's32[1]{0}', space=sflag, size = 0x4, scoped, tag = 'scoped memory for tpu_custom_call.1']
    #allocation7 [shape = 'u8[512]{0}', space=vmem, size = 0x400, scoped, tag = 'input window, operand 2, single buffered']
    #allocation8 [shape = 'u8[131072]{0}', space=vmem, size = 0x20000, scoped, tag = 'input window, operand 3, single buffered']
    #allocation9 [shape = 's32[1]{0}', space=sflag, size = 0x4, scoped, tag = 'scoped memory for tpu_custom_call.1']
    #allocation10 [shape = 'u8[1024]{0}', space=vmem, size = 0x400, scoped, tag = 'input window, operand 4, single buffered']
    #allocation11 [shape = 'u8[524288]{0}', space=vmem, size = 0x80000, scoped, tag = 'input window, operand 5, single buffered']
    #allocation12 [shape = 's32[1]{0}', space=sflag, size = 0x4, scoped, tag = 'scoped memory for tpu_custom_call.1']
    #allocation13 [shape = 'u8[2048]{0}', space=vmem, size = 0x800, scoped, tag = 'input window, operand 6, single buffered']
    #allocation14 [shape = 'u8[2097152]{0}', space=vmem, size = 0x200000, scoped, tag = 'input window, operand 7, single buffered']
    #allocation15 [shape = 's32[1]{0}', space=sflag, size = 0x4, scoped, tag = 'scoped memory for tpu_custom_call.1']
    #allocation16 [shape = 'u8[4096]{0}', space=vmem, size = 0x1000, scoped, tag = 'input window, operand 8, single buffered']
    #allocation17 [shape = 'u8[3670016]{0}', space=vmem, size = 0x380000, scoped, tag = 'input window, operand 9, single buffered']
    #allocation18 [shape = 's32[1]{0}', space=sflag, size = 0x4, scoped, tag = 'scoped memory for tpu_custom_call.1']
    #allocation19 [shape = 'u8[3584]{0}', space=vmem, size = 0x1000, scoped, tag = 'input window, operand 10, single buffered']
    #allocation20 [shape = 'u8[57344]{0}', space=vmem, size = 0xe000, scoped, tag = 'output window, operand 0']
    %16 = vsyncpa [#allocation3], 0
    %s17 = scalar_lea.sflag [#allocation3], 1
    %18 = vsyncpa %s17, 0
    %19 = vsyncpa [#allocation6], 0
    %20 = vsyncpa [#allocation9], 0
    %21 = vsyncpa [#allocation12], 0
    %22 = vsyncpa [#allocation15], 0
    %23 = vsyncpa [#allocation18], 0
    %24 = vsyncpa [#allocation4], 0
    %s25 = scalar_lea.sflag [#allocation4], 1
    %26 = vsyncpa %s25, 0
    loop: start=0, step=1, limit=4
    $region2: #{tpu_custom_call.1} parent=1 // loop_pre_header
      _
    $region3: #{tpu_custom_call.1} parent=1 // loop_header
      %s28 = sphi 0, %s32
      %p29 = scmp.ge.s32.totalorder %s28, 4
      %s38 = sphi 0, %s40
      %s41 = sphi 0, %s38
      %s42 = sphi 0, %s41
      %s58 = sphi 0, %s42
      %s62 = sphi 0, %s62
      %s64 = sphi 0, %s62
      %s65 = sphi 0, %s64
      %s79 = sphi 0, %s65
      %s83 = sphi 0, %s83
      %s85 = sphi 0, %s83
      %s86 = sphi 0, %s85
      %s100 = sphi 0, %s86
      %s104 = sphi 0, %s104
      %s106 = sphi 0, %s104
      %s107 = sphi 0, %s106
      %s121 = sphi 0, %s107
      %s125 = sphi 0, %s125
      %s127 = sphi 0, %s125
      %s128 = sphi 0, %s127
      %s142 = sphi 0, %s128
      %s146 = sphi 0, %s146
      %s148 = sphi 0, %s146
      %s149 = sphi 0, %s148
      %s163 = sphi 0, %s149
      %s167 = sphi 0, %s167
      %s169 = sphi 0, %s167
      %s170 = sphi 0, %s169
      %s184 = sphi 0, %s170
      %s188 = sphi 0, %s188
      %s190 = sphi 0, %s188
      %s191 = sphi 0, %s190
      %s205 = sphi 0, %s191
      %s209 = sphi 0, %s209
      %s211 = sphi 0, %s209
      %s212 = sphi 0, %s211
      %s226 = sphi 0, %s212
      %s230 = sphi 0, %s230
      %s232 = sphi 0, %s230
      %s233 = sphi 0, %s232
      %s247 = sphi 0, %s233
      %s251 = sphi 0, %s251
      %s253 = sphi 0, %s251
      %s254 = sphi 0, %s253
      %s268 = sphi 0, %s254
      %s274 = sphi 0, %s276
      %s277 = sphi 0, %s274
      %s278 = sphi 0, %s277
      %s294 = sphi 0, %s278
    $region4: #{tpu_custom_call.1} parent=1 // loop_header_branch
      %31 = sbr.rel (%p29) target = $region8
    $region5: #{tpu_custom_call.1} parent=1 // loop_body
      %s33 = ssub.s32 %s28, 1
      %s34 = ssub.s32 %s28, 2
      %s35 = sadd.s32 %s28, 1
      %s36 = ssub.s32 %s28, %s35
      %p37 = scmp.eq.s32.totalorder %s36, 0
      %s39 = sadd.s32 %s38, 1
      %s40 = scalar_select %p37, %s38, %s39
      %p43 = pneg %p37
      %p44 = scmp.eq.s32.totalorder %s28, 1
      %p45 = por %p43, %p44
      %p46 = scmp.ne.s32.totalorder %s38, %s41
      %p47 = scmp.eq.s32.totalorder %s28, 0
      %p48 = por %p46, %p47
      %p49 = scmp.ne.s32.totalorder %s38, %s41
      %p50 = scmp.eq.s32.totalorder %s33, 1
      %p51 = por %p49, %p50
      %p52 = scmp.ne.s32.totalorder %s41, %s42
      %p53 = scmp.eq.s32.totalorder %s33, 0
      %p54 = por %p52, %p53
      %p55 = scmp.ne.s32.totalorder %s41, %s42
      %p56 = scmp.eq.s32.totalorder %s34, 1
      %p57 = por %p55, %p56
      %p59 = scmp.ne.s32.totalorder %s42, %s58
      %p60 = scmp.eq.s32.totalorder %s34, 0
      %p61 = por %p59, %p60
      %s63 = sadd.s32 %s62, 1
      %p66 = scmp.eq.s32.totalorder %s28, 1
      %p67 = scmp.ne.s32.totalorder %s62, %s64
      %p68 = scmp.eq.s32.totalorder %s28, 0
      %p69 = por %p67, %p68
      %p70 = scmp.ne.s32.totalorder %s62, %s64
      %p71 = scmp.eq.s32.totalorder %s33, 1
      %p72 = por %p70, %p71
      %p73 = scmp.ne.s32.totalorder %s64, %s65
      %p74 = scmp.eq.s32.totalorder %s33, 0
      %p75 = por %p73, %p74
      %p76 = scmp.ne.s32.totalorder %s64, %s65
      %p77 = scmp.eq.s32.totalorder %s34, 1
      %p78 = por %p76, %p77
      %p80 = scmp.ne.s32.totalorder %s65, %s79
      %p81 = scmp.eq.s32.totalorder %s34, 0
      %p82 = por %p80, %p81
      %s84 = sadd.s32 %s83, 1
      %p87 = scmp.eq.s32.totalorder %s28, 1
      %p88 = scmp.ne.s32.totalorder %s83, %s85
      %p89 = scmp.eq.s32.totalorder %s28, 0
      %p90 = por %p88, %p89
      %p91 = scmp.ne.s32.totalorder %s83, %s85
      %p92 = scmp.eq.s32.totalorder %s33, 1
      %p93 = por %p91, %p92
      %p94 = scmp.ne.s32.totalorder %s85, %s86
      %p95 = scmp.eq.s32.totalorder %s33, 0
      %p96 = por %p94, %p95
      %p97 = scmp.ne.s32.totalorder %s85, %s86
      %p98 = scmp.eq.s32.totalorder %s34, 1
      %p99 = por %p97, %p98
      %p101 = scmp.ne.s32.totalorder %s86, %s100
      %p102 = scmp.eq.s32.totalorder %s34, 0
      %p103 = por %p101, %p102
      %s105 = sadd.s32 %s104, 1
      %p108 = scmp.eq.s32.totalorder %s28, 1
      %p109 = scmp.ne.s32.totalorder %s104, %s106
      %p110 = scmp.eq.s32.totalorder %s28, 0
      %p111 = por %p109, %p110
      %p112 = scmp.ne.s32.totalorder %s104, %s106
      %p113 = scmp.eq.s32.totalorder %s33, 1
      %p114 = por %p112, %p113
      %p115 = scmp.ne.s32.totalorder %s106, %s107
      %p116 = scmp.eq.s32.totalorder %s33, 0
      %p117 = por %p115, %p116
      %p118 = scmp.ne.s32.totalorder %s106, %s107
      %p119 = scmp.eq.s32.totalorder %s34, 1
      %p120 = por %p118, %p119
      %p122 = scmp.ne.s32.totalorder %s107, %s121
      %p123 = scmp.eq.s32.totalorder %s34, 0
      %p124 = por %p122, %p123
      %s126 = sadd.s32 %s125, 1
      %p129 = scmp.eq.s32.totalorder %s28, 1
      %p130 = scmp.ne.s32.totalorder %s125, %s127
      %p131 = scmp.eq.s32.totalorder %s28, 0
      %p132 = por %p130, %p131
      %p133 = scmp.ne.s32.totalorder %s125, %s127
      %p134 = scmp.eq.s32.totalorder %s33, 1
      %p135 = por %p133, %p134
      %p136 = scmp.ne.s32.totalorder %s127, %s128
      %p137 = scmp.eq.s32.totalorder %s33, 0
      %p138 = por %p136, %p137
      %p139 = scmp.ne.s32.totalorder %s127, %s128
      %p140 = scmp.eq.s32.totalorder %s34, 1
      %p141 = por %p139, %p140
      %p143 = scmp.ne.s32.totalorder %s128, %s142
      %p144 = scmp.eq.s32.totalorder %s34, 0
      %p145 = por %p143, %p144
      %s147 = sadd.s32 %s146, 1
      %p150 = scmp.eq.s32.totalorder %s28, 1
      %p151 = scmp.ne.s32.totalorder %s146, %s148
      %p152 = scmp.eq.s32.totalorder %s28, 0
      %p153 = por %p151, %p152
      %p154 = scmp.ne.s32.totalorder %s146, %s148
      %p155 = scmp.eq.s32.totalorder %s33, 1
      %p156 = por %p154, %p155
      %p157 = scmp.ne.s32.totalorder %s148, %s149
      %p158 = scmp.eq.s32.totalorder %s33, 0
      %p159 = por %p157, %p158
      %p160 = scmp.ne.s32.totalorder %s148, %s149
      %p161 = scmp.eq.s32.totalorder %s34, 1
      %p162 = por %p160, %p161
      %p164 = scmp.ne.s32.totalorder %s149, %s163
      %p165 = scmp.eq.s32.totalorder %s34, 0
      %p166 = por %p164, %p165
      %s168 = sadd.s32 %s167, 1
      %p171 = scmp.eq.s32.totalorder %s28, 1
      %p172 = scmp.ne.s32.totalorder %s167, %s169
      %p173 = scmp.eq.s32.totalorder %s28, 0
      %p174 = por %p172, %p173
      %p175 = scmp.ne.s32.totalorder %s167, %s169
      %p176 = scmp.eq.s32.totalorder %s33, 1
      %p177 = por %p175, %p176
      %p178 = scmp.ne.s32.totalorder %s169, %s170
      %p179 = scmp.eq.s32.totalorder %s33, 0
      %p180 = por %p178, %p179
      %p181 = scmp.ne.s32.totalorder %s169, %s170
      %p182 = scmp.eq.s32.totalorder %s34, 1
      %p183 = por %p181, %p182
      %p185 = scmp.ne.s32.totalorder %s170, %s184
      %p186 = scmp.eq.s32.totalorder %s34, 0
      %p187 = por %p185, %p186
      %s189 = sadd.s32 %s188, 1
      %p192 = scmp.eq.s32.totalorder %s28, 1
      %p193 = scmp.ne.s32.totalorder %s188, %s190
      %p194 = scmp.eq.s32.totalorder %s28, 0
      %p195 = por %p193, %p194
      %p196 = scmp.ne.s32.totalorder %s188, %s190
      %p197 = scmp.eq.s32.totalorder %s33, 1
      %p198 = por %p196, %p197
      %p199 = scmp.ne.s32.totalorder %s190, %s191
      %p200 = scmp.eq.s32.totalorder %s33, 0
      %p201 = por %p199, %p200
      %p202 = scmp.ne.s32.totalorder %s190, %s191
      %p203 = scmp.eq.s32.totalorder %s34, 1
      %p204 = por %p202, %p203
      %p206 = scmp.ne.s32.totalorder %s191, %s205
      %p207 = scmp.eq.s32.totalorder %s34, 0
      %p208 = por %p206, %p207
      %s210 = sadd.s32 %s209, 1
      %p213 = scmp.eq.s32.totalorder %s28, 1
      %p214 = scmp.ne.s32.totalorder %s209, %s211
      %p215 = scmp.eq.s32.totalorder %s28, 0
      %p216 = por %p214, %p215
      %p217 = scmp.ne.s32.totalorder %s209, %s211
      %p218 = scmp.eq.s32.totalorder %s33, 1
      %p219 = por %p217, %p218
      %p220 = scmp.ne.s32.totalorder %s211, %s212
      %p221 = scmp.eq.s32.totalorder %s33, 0
      %p222 = por %p220, %p221
      %p223 = scmp.ne.s32.totalorder %s211, %s212
      %p224 = scmp.eq.s32.totalorder %s34, 1
      %p225 = por %p223, %p224
      %p227 = scmp.ne.s32.totalorder %s212, %s226
      %p228 = scmp.eq.s32.totalorder %s34, 0
      %p229 = por %p227, %p228
      %s231 = sadd.s32 %s230, 1
      %p234 = scmp.eq.s32.totalorder %s28, 1
      %p235 = scmp.ne.s32.totalorder %s230, %s232
      %p236 = scmp.eq.s32.totalorder %s28, 0
      %p237 = por %p235, %p236
      %p238 = scmp.ne.s32.totalorder %s230, %s232
      %p239 = scmp.eq.s32.totalorder %s33, 1
      %p240 = por %p238, %p239
      %p241 = scmp.ne.s32.totalorder %s232, %s233
      %p242 = scmp.eq.s32.totalorder %s33, 0
      %p243 = por %p241, %p242
      %p244 = scmp.ne.s32.totalorder %s232, %s233
      %p245 = scmp.eq.s32.totalorder %s34, 1
      %p246 = por %p244, %p245
      %p248 = scmp.ne.s32.totalorder %s233, %s247
      %p249 = scmp.eq.s32.totalorder %s34, 0
      %p250 = por %p248, %p249
      %s252 = sadd.s32 %s251, 1
      %p255 = scmp.eq.s32.totalorder %s28, 1
      %p256 = scmp.ne.s32.totalorder %s251, %s253
      %p257 = scmp.eq.s32.totalorder %s28, 0
      %p258 = por %p256, %p257
      %p259 = scmp.ne.s32.totalorder %s251, %s253
      %p260 = scmp.eq.s32.totalorder %s33, 1
      %p261 = por %p259, %p260
      %p262 = scmp.ne.s32.totalorder %s253, %s254
      %p263 = scmp.eq.s32.totalorder %s33, 0
      %p264 = por %p262, %p263
      %p265 = scmp.ne.s32.totalorder %s253, %s254
      %p266 = scmp.eq.s32.totalorder %s34, 1
      %p267 = por %p265, %p266
      %p269 = scmp.ne.s32.totalorder %s254, %s268
      %p270 = scmp.eq.s32.totalorder %s34, 0
      %p271 = por %p269, %p270
      %s272 = ssub.s32 %s28, %s35
      %p273 = scmp.eq.s32.totalorder %s272, 0
      %s275 = sadd.s32 %s274, 1
      %s276 = scalar_select %p273, %s274, %s275
      %p279 = pneg %p273
      %p280 = scmp.eq.s32.totalorder %s28, 1
      %p281 = por %p279, %p280
      %p282 = scmp.ne.s32.totalorder %s274, %s277
      %p283 = scmp.eq.s32.totalorder %s28, 0
      %p284 = por %p282, %p283
      %p285 = scmp.ne.s32.totalorder %s274, %s277
      %p286 = scmp.eq.s32.totalorder %s33, 1
      %p287 = por %p285, %p286
      %p288 = scmp.ne.s32.totalorder %s277, %s278
      %p289 = scmp.eq.s32.totalorder %s33, 0
      %p290 = por %p288, %p289
      %p291 = scmp.ne.s32.totalorder %s277, %s278
      %p292 = scmp.eq.s32.totalorder %s34, 1
      %p293 = por %p291, %p292
      %p295 = scmp.ne.s32.totalorder %s278, %s294
      %p296 = scmp.eq.s32.totalorder %s34, 0
      %p297 = por %p295, %p296
      %p298 = scmp.le.s32.totalorder 1, %s28
      %p299 = scmp.lt.s32.totalorder %s28, 3
      %p300 = pnand %p298, %p299
      %p301 = pneg %p300
      // Predicated region
      $region9: #{tpu_custom_call.1} parent=5 // pred_check
        _
      $region10: #{tpu_custom_call.1} parent=5 // pred_check_branch
        %303 = sbr.rel (%p300) target = $region12
      $region11: #{tpu_custom_call.1} parent=5 // pred_region
        %s304 = ssub.s32 %s28, 1
        // Predicated region
        $region13: #{tpu_custom_call.1} parent=11 // pred_check
          %p305 = pneg %p75
        $region14: #{tpu_custom_call.1} parent=11 // pred_check_branch
          %307 = sbr.rel (%p305) target = $region16
        $region15: #{tpu_custom_call.1} parent=11 // pred_region
          %s309 = ssub.s32 2048, 2048
          %310 = vsyncadd [#allocation6], %s309
          %s311 = sshll.u32 [#allocation5], 4
          %s312 = int_to_ptr.vmem [resolvable:$true] %s311
          %317 = dma.hbm_to_vmem [thread:$0]  %s1, 2048, %s312, [#allocation6], 128, 128, 8
        $region16: #{tpu_custom_call.1} parent=11 // pred_fallthru
          _
        // Predicated region
        $region17: #{tpu_custom_call.1} parent=11 // pred_check
          %p318 = pneg %p96
        $region18: #{tpu_custom_call.1} parent=11 // pred_check_branch
          %320 = sbr.rel (%p318) target = $region20
        $region19: #{tpu_custom_call.1} parent=11 // pred_region
          %s322 = ssub.s32 16, 16
          %323 = vsyncadd [#allocation6], %s322
          %s325 = sshll.u32 [#allocation7], 4
          %s326 = int_to_ptr.vmem [resolvable:$true] %s325
          %328 = dma.hbm_to_vmem [thread:$0]  %s2, 16, %s326, [#allocation6]
        $region20: #{tpu_custom_call.1} parent=11 // pred_fallthru
          _
        // Predicated region
        $region21: #{tpu_custom_call.1} parent=11 // pred_check
          %p329 = pneg %p117
        $region22: #{tpu_custom_call.1} parent=11 // pred_check_branch
          %331 = sbr.rel (%p329) target = $region24
        $region23: #{tpu_custom_call.1} parent=11 // pred_region
          %s333 = ssub.s32 4096, 4096
          %334 = vsyncadd [#allocation9], %s333
          %s335 = sshll.u32 [#allocation8], 4
          %s336 = int_to_ptr.vmem [resolvable:$true] %s335
          %341 = dma.hbm_to_vmem [thread:$0]  %s3, 4096, %s336, [#allocation9], 256, 256, 16
        $region24: #{tpu_custom_call.1} parent=11 // pred_fallthru
          _
        // Predicated region
        $region25: #{tpu_custom_call.1} parent=11 // pred_check
          %p342 = pneg %p138
        $region26: #{tpu_custom_call.1} parent=11 // pred_check_branch
          %344 = sbr.rel (%p342) target = $region28
        $region27: #{tpu_custom_call.1} parent=11 // pred_region
          %s346 = ssub.s32 32, 32
          %347 = vsyncadd [#allocation9], %s346
          %s349 = sshll.u32 [#allocation10], 4
          %s350 = int_to_ptr.vmem [resolvable:$true] %s349
          %352 = dma.hbm_to_vmem [thread:$0]  %s4, 32, %s350, [#allocation9]
        $region28: #{tpu_custom_call.1} parent=11 // pred_fallthru
          _
        // Predicated region
        $region29: #{tpu_custom_call.1} parent=11 // pred_check
          %p353 = pneg %p159
        $region30: #{tpu_custom_call.1} parent=11 // pred_check_branch
          %355 = sbr.rel (%p353) target = $region32
        $region31: #{tpu_custom_call.1} parent=11 // pred_region
          %s357 = ssub.s32 16384, 16384
          %358 = vsyncadd [#allocation12], %s357
          %s359 = sshll.u32 [#allocation11], 4
          %s360 = int_to_ptr.vmem [resolvable:$true] %s359
          %365 = dma.hbm_to_vmem [thread:$0]  %s5, 16384, %s360, [#allocation12], 512, 512, 32
        $region32: #{tpu_custom_call.1} parent=11 // pred_fallthru
          _
        // Predicated region
        $region33: #{tpu_custom_call.1} parent=11 // pred_check
          %p366 = pneg %p180
        $region34: #{tpu_custom_call.1} parent=11 // pred_check_branch
          %368 = sbr.rel (%p366) target = $region36
        $region35: #{tpu_custom_call.1} parent=11 // pred_region
          %s370 = ssub.s32 64, 64
          %371 = vsyncadd [#allocation12], %s370
          %s373 = sshll.u32 [#allocation13], 4
          %s374 = int_to_ptr.vmem [resolvable:$true] %s373
          %376 = dma.hbm_to_vmem [thread:$0]  %s6, 64, %s374, [#allocation12]
        $region36: #{tpu_custom_call.1} parent=11 // pred_fallthru
          _
        // Predicated region
        $region37: #{tpu_custom_call.1} parent=11 // pred_check
          %p377 = pneg %p201
        $region38: #{tpu_custom_call.1} parent=11 // pred_check_branch
          %379 = sbr.rel (%p377) target = $region40
        $region39: #{tpu_custom_call.1} parent=11 // pred_region
          %s381 = ssub.s32 65536, 65536
          %382 = vsyncadd [#allocation15], %s381
          %s383 = sshll.u32 [#allocation14], 4
          %s384 = int_to_ptr.vmem [resolvable:$true] %s383
          %389 = dma.hbm_to_vmem [thread:$0]  %s7, 65536, %s384, [#allocation15], 1024, 1024, 64
        $region40: #{tpu_custom_call.1} parent=11 // pred_fallthru
          _
        // Predicated region
        $region41: #{tpu_custom_call.1} parent=11 // pred_check
          %p390 = pneg %p222
        $region42: #{tpu_custom_call.1} parent=11 // pred_check_branch
          %392 = sbr.rel (%p390) target = $region44
        $region43: #{tpu_custom_call.1} parent=11 // pred_region
          %s394 = ssub.s32 128, 128
          %395 = vsyncadd [#allocation15], %s394
          %s397 = sshll.u32 [#allocation16], 4
          %s398 = int_to_ptr.vmem [resolvable:$true] %s397
          %400 = dma.hbm_to_vmem [thread:$0]  %s8, 128, %s398, [#allocation15]
        $region44: #{tpu_custom_call.1} parent=11 // pred_fallthru
          _
        // Predicated region
        $region45: #{tpu_custom_call.1} parent=11 // pred_check
          %p401 = pneg %p243
        $region46: #{tpu_custom_call.1} parent=11 // pred_check_branch
          %403 = sbr.rel (%p401) target = $region48
        $region47: #{tpu_custom_call.1} parent=11 // pred_region
          %s405 = ssub.s32 114688, 114688
          %406 = vsyncadd [#allocation18], %s405
          %s407 = sshll.u32 [#allocation17], 4
          %s408 = int_to_ptr.vmem [resolvable:$true] %s407
          %413 = dma.hbm_to_vmem [thread:$0]  %s9, 114688, %s408, [#allocation18], 896, 896, 56
        $region48: #{tpu_custom_call.1} parent=11 // pred_fallthru
          _
        // Predicated region
        $region49: #{tpu_custom_call.1} parent=11 // pred_check
          %p414 = pneg %p264
        $region50: #{tpu_custom_call.1} parent=11 // pred_check_branch
          %416 = sbr.rel (%p414) target = $region52
        $region51: #{tpu_custom_call.1} parent=11 // pred_region
          %s418 = ssub.s32 112, 112
          %419 = vsyncadd [#allocation18], %s418
          %s421 = sshll.u32 [#allocation19], 4
          %s422 = int_to_ptr.vmem [resolvable:$true] %s421
          %424 = dma.hbm_to_vmem [thread:$0]  %s10, 112, %s422, [#allocation18]
        $region52: #{tpu_custom_call.1} parent=11 // pred_fallthru
          _
      $region12: #{tpu_custom_call.1} parent=5 // pred_fallthru
        _
      %p425 = scmp.lt.s32.totalorder %s28, 2
      // Predicated region
      $region53: #{tpu_custom_call.1} parent=5 // pred_check
        %p426 = pneg %p425
      $region54: #{tpu_custom_call.1} parent=5 // pred_check_branch
        %428 = sbr.rel (%p426) target = $region56
      $region55: #{tpu_custom_call.1} parent=5 // pred_region
        // Predicated region
        $region57: #{tpu_custom_call.1} parent=55 // pred_check
          %p429 = pneg %p48
        $region58: #{tpu_custom_call.1} parent=55 // pred_check_branch
          %431 = sbr.rel (%p429) target = $region60
        $region59: #{tpu_custom_call.1} parent=55 // pred_region
          %s432 = sand.u32 %s38, 1
          %s433 = scalar_lea.sflag [#allocation3], %s432
          %s434 = sand.u32 %s38, 1
          %s435 = smul.addr %s434, 8
          %s436 = scalar_lea.vmem [#allocation2], %s435
          %s438 = ssub.s32 128, 128
          %439 = vsyncadd %s433, %s438
          %s440 = smul.addr %s28, 128
          %s441 = scalar_lea.hbm %s0, %s440
          %s443 = sshll.u32 %s436, 4
          %s444 = int_to_ptr.vmem [resolvable:$true] %s443
          %446 = dma.hbm_to_vmem [thread:$0]  %s441, 128, %s444, %s433
        $region60: #{tpu_custom_call.1} parent=55 // pred_fallthru
          _
      $region56: #{tpu_custom_call.1} parent=5 // pred_fallthru
        _
      %p447 = scmp.le.s32.totalorder 1, %s28
      %p448 = scmp.lt.s32.totalorder %s28, 3
      %p449 = pnand %p447, %p448
      %p450 = pneg %p449
      // Predicated region
      $region61: #{tpu_custom_call.1} parent=5 // pred_check
        _
      $region62: #{tpu_custom_call.1} parent=5 // pred_check_branch
        %452 = sbr.rel (%p449) target = $region64
      $region63: #{tpu_custom_call.1} parent=5 // pred_region
        %s453 = ssub.s32 %s28, 1
        %s454 = sand.u32 %s41, 1
        %s455 = scalar_lea.sflag [#allocation3], %s454
        %s456 = sand.u32 %s41, 1
        %s457 = smul.addr %s456, 8
        %s458 = scalar_lea.vmem [#allocation2], %s457
        // Predicated region
        $region65: #{tpu_custom_call.1} parent=63 // pred_check
          %p459 = pneg %p54
        $region66: #{tpu_custom_call.1} parent=63 // pred_check_branch
          %461 = sbr.rel (%p459) target = $region68
        $region67: #{tpu_custom_call.1} parent=63 // pred_region
          %462 = dma.done %s455, 128
        $region68: #{tpu_custom_call.1} parent=63 // pred_fallthru
          _
        // Predicated region
        $region69: #{tpu_custom_call.1} parent=63 // pred_check
          %p463 = pneg %p75
        $region70: #{tpu_custom_call.1} parent=63 // pred_check_branch
          %465 = sbr.rel (%p463) target = $region72
        $region71: #{tpu_custom_call.1} parent=63 // pred_region
          %466 = dma.done [#allocation6], 2048
        $region72: #{tpu_custom_call.1} parent=63 // pred_fallthru
          _
        // Predicated region
        $region73: #{tpu_custom_call.1} parent=63 // pred_check
          %p467 = pneg %p96
        $region74: #{tpu_custom_call.1} parent=63 // pred_check_branch
          %469 = sbr.rel (%p467) target = $region76
        $region75: #{tpu_custom_call.1} parent=63 // pred_region
          %470 = dma.done [#allocation6], 16
        $region76: #{tpu_custom_call.1} parent=63 // pred_fallthru
          _
        // Predicated region
        $region77: #{tpu_custom_call.1} parent=63 // pred_check
          %p471 = pneg %p117
        $region78: #{tpu_custom_call.1} parent=63 // pred_check_branch
          %473 = sbr.rel (%p471) target = $region80
        $region79: #{tpu_custom_call.1} parent=63 // pred_region
          %474 = dma.done [#allocation9], 4096
        $region80: #{tpu_custom_call.1} parent=63 // pred_fallthru
          _
        // Predicated region
        $region81: #{tpu_custom_call.1} parent=63 // pred_check
          %p475 = pneg %p138
        $region82: #{tpu_custom_call.1} parent=63 // pred_check_branch
          %477 = sbr.rel (%p475) target = $region84
        $region83: #{tpu_custom_call.1} parent=63 // pred_region
          %478 = dma.done [#allocation9], 32
        $region84: #{tpu_custom_call.1} parent=63 // pred_fallthru
          _
        // Predicated region
        $region85: #{tpu_custom_call.1} parent=63 // pred_check
          %p479 = pneg %p159
        $region86: #{tpu_custom_call.1} parent=63 // pred_check_branch
          %481 = sbr.rel (%p479) target = $region88
        $region87: #{tpu_custom_call.1} parent=63 // pred_region
          %482 = dma.done [#allocation12], 16384
        $region88: #{tpu_custom_call.1} parent=63 // pred_fallthru
          _
        // Predicated region
        $region89: #{tpu_custom_call.1} parent=63 // pred_check
          %p483 = pneg %p180
        $region90: #{tpu_custom_call.1} parent=63 // pred_check_branch
          %485 = sbr.rel (%p483) target = $region92
        $region91: #{tpu_custom_call.1} parent=63 // pred_region
          %486 = dma.done [#allocation12], 64
        $region92: #{tpu_custom_call.1} parent=63 // pred_fallthru
          _
        // Predicated region
        $region93: #{tpu_custom_call.1} parent=63 // pred_check
          %p487 = pneg %p201
        $region94: #{tpu_custom_call.1} parent=63 // pred_check_branch
          %489 = sbr.rel (%p487) target = $region96
        $region95: #{tpu_custom_call.1} parent=63 // pred_region
          %490 = dma.done [#allocation15], 65536
        $region96: #{tpu_custom_call.1} parent=63 // pred_fallthru
          _
        // Predicated region
        $region97: #{tpu_custom_call.1} parent=63 // pred_check
          %p491 = pneg %p222
        $region98: #{tpu_custom_call.1} parent=63 // pred_check_branch
          %493 = sbr.rel (%p491) target = $region100
        $region99: #{tpu_custom_call.1} parent=63 // pred_region
          %494 = dma.done [#allocation15], 128
        $region100: #{tpu_custom_call.1} parent=63 // pred_fallthru
          _
        // Predicated region
        $region101: #{tpu_custom_call.1} parent=63 // pred_check
          %p495 = pneg %p243
        $region102: #{tpu_custom_call.1} parent=63 // pred_check_branch
          %497 = sbr.rel (%p495) target = $region104
        $region103: #{tpu_custom_call.1} parent=63 // pred_region
          %498 = dma.done [#allocation18], 114688
        $region104: #{tpu_custom_call.1} parent=63 // pred_fallthru
          _
        // Predicated region
        $region105: #{tpu_custom_call.1} parent=63 // pred_check
          %p499 = pneg %p264
        $region106: #{tpu_custom_call.1} parent=63 // pred_check_branch
          %501 = sbr.rel (%p499) target = $region108
        $region107: #{tpu_custom_call.1} parent=63 // pred_region
          %502 = dma.done [#allocation18], 112
        $region108: #{tpu_custom_call.1} parent=63 // pred_fallthru
          _
        %s503 = sand.u32 %s41, 1
        %s504 = scalar_lea.sflag [#allocation3], %s503
        %s505 = sand.u32 %s41, 1
        %s506 = smul.addr %s505, 8
        %s507 = scalar_lea.vmem [#allocation2], %s506
        %p508 = pneg %p54
        %p509 = pneg %p51
        %p510 = pneg %p75
        %p511 = pneg %p72
        %p512 = pneg %p96
        %p513 = pneg %p93
        %p514 = pneg %p117
        %p515 = pneg %p114
        %p516 = pneg %p138
        %p517 = pneg %p135
        %p518 = pneg %p159
        %p519 = pneg %p156
        %p520 = pneg %p180
        %p521 = pneg %p177
        %p522 = pneg %p201
        %p523 = pneg %p198
        %p524 = pneg %p222
        %p525 = pneg %p219
        %p526 = pneg %p243
        %p527 = pneg %p240
        %p528 = pneg %p264
        %p529 = pneg %p261
        %p530 = pneg %p290
        %p531 = pneg %p287
        %s532 = sand.u32 %s277, 1
        %s533 = scalar_lea.sflag [#allocation4], %s532
        %s534 = sand.u32 %s277, 1
        %s535 = smul.addr %s534, 56
        %s536 = scalar_lea.vmem [#allocation20], %s535
        %v537 = vld [vmem:[%s458] sm:$0xff]
        %v538 = vld [vmem:[#allocation5] sm:$0xff]
        %v539 = vld [vmem:[#allocation5 + $0x8] sm:$0xff]
        %v540 = vld [vmem:[#allocation5 + $0x10] sm:$0xff]
        %v541 = vld [vmem:[#allocation5 + $0x18] sm:$0xff]
        %v542 = vld [vmem:[#allocation5 + $0x20] sm:$0xff]
        %v543 = vld [vmem:[#allocation5 + $0x28] sm:$0xff]
        %v544 = vld [vmem:[#allocation5 + $0x30] sm:$0xff]
        %v545 = vld [vmem:[#allocation5 + $0x38] sm:$0xff]
        %v546 = vld [vmem:[#allocation5 + $0x40] sm:$0xff]
        %v547 = vld [vmem:[#allocation5 + $0x48] sm:$0xff]
        %v548 = vld [vmem:[#allocation5 + $0x50] sm:$0xff]
        %v549 = vld [vmem:[#allocation5 + $0x58] sm:$0xff]
        %v550 = vld [vmem:[#allocation5 + $0x60] sm:$0xff]
        %v551 = vld [vmem:[#allocation5 + $0x68] sm:$0xff]
        %v552 = vld [vmem:[#allocation5 + $0x70] sm:$0xff]
        %v553 = vld [vmem:[#allocation5 + $0x78] sm:$0xff]
        %v554 = vld [vmem:[#allocation7] sm:$0x1]
        %v556 = vlaneseq
        %v557 = vshrl.u32 %v556, 7
        %v558 = vsub.s32 0, %v557
        %v559 = vrot.slane %v554, %v558
        %561 = vmatprep.subr.mxu0 0.0
        %562 = vmatpush1.msra.mxu0 %v538
        %563 = vmatprep.subr.mxu0 0.0
        %564 = vmatpush1.msra.mxu0 %v539
        %565 = vmatprep.subr.mxu0 0.0
        %566 = vmatpush1.msra.mxu0 %v540
        %567 = vmatprep.subr.mxu0 0.0
        %568 = vmatpush1.msra.mxu0 %v541
        %569 = vmatprep.subr.mxu0 0.0
        %570 = vmatpush1.msra.mxu0 %v542
        %571 = vmatprep.subr.mxu0 0.0
        %572 = vmatpush1.msra.mxu0 %v543
        %573 = vmatprep.subr.mxu0 0.0
        %574 = vmatpush1.msra.mxu0 %v544
        %575 = vmatprep.subr.mxu0 0.0
        %576 = vmatpush1.msra.mxu0 %v545
        %577 = vmatprep.subr.mxu0 0.0
        %578 = vmatpush1.msra.mxu0 %v546
        %579 = vmatprep.subr.mxu0 0.0
        %580 = vmatpush1.msra.mxu0 %v547
        %581 = vmatprep.subr.mxu0 0.0
        %582 = vmatpush1.msra.mxu0 %v548
        %583 = vmatprep.subr.mxu0 0.0
        %584 = vmatpush1.msra.mxu0 %v549
        %585 = vmatprep.subr.mxu0 0.0
        %586 = vmatpush1.msra.mxu0 %v550
        %587 = vmatprep.subr.mxu0 0.0
        %588 = vmatpush1.msra.mxu0 %v551
        %589 = vmatprep.subr.mxu0 0.0
        %590 = vmatpush1.msra.mxu0 %v552
        %591 = vmatprep.subr.mxu0 0.0
        %592 = vmatpush1.msra.mxu0 %v553
        %593 = vmatprep.subr.mxu0 0.0
        %594 = vmatpush1.msra.mxu0 0.0
        %595 = vmatprep.subr.mxu0 0.0
        %596 = vmatpush1.msra.mxu0 0.0
        %597 = vmatprep.subr.mxu0 0.0
        %598 = vmatpush1.msra.mxu0 0.0
        %599 = vmatprep.subr.mxu0 0.0
        %600 = vmatpush1.msra.mxu0 0.0
        %601 = vmatprep.subr.mxu0 0.0
        %602 = vmatpush1.msra.mxu0 0.0
        %603 = vmatprep.subr.mxu0 0.0
        %604 = vmatpush1.msra.mxu0 0.0
        %605 = vmatprep.subr.mxu0 0.0
        %606 = vmatpush1.msra.mxu0 0.0
        %607 = vmatprep.subr.mxu0 0.0
        %608 = vmatpush1.msra.mxu0 0.0
        %609 = vmatprep.subr.mxu0 0.0
        %610 = vmatpush1.msra.mxu0 0.0
        %611 = vmatprep.subr.mxu0 0.0
        %612 = vmatpush1.msra.mxu0 0.0
        %613 = vmatprep.subr.mxu0 0.0
        %614 = vmatpush1.msra.mxu0 0.0
        %615 = vmatprep.subr.mxu0 0.0
        %616 = vmatpush1.msra.mxu0 0.0
        %617 = vmatprep.subr.mxu0 0.0
        %618 = vmatpush1.msra.mxu0 0.0
        %619 = vmatprep.subr.mxu0 0.0
        %620 = vmatpush1.msra.mxu0 0.0
        %621 = vmatprep.subr.mxu0 0.0
        %622 = vmatpush1.msra.mxu0 0.0
        %623 = vmatprep.subr.mxu0 0.0
        %624 = vmatpush1.msra.mxu0 0.0
        %625 = vmatprep.mubr.f32.mxu0 0.0
        %626 = vmatmul.mubr.f32.gmra.mrb[0].mxu0 %v537
        %v627 = vpop.f32.mrb[0].mxu0
        %v628 = vadd.f32 %v559, %v627
        %v629 = vpop.f32.mrb[0].mxu0
        %630 = vdwg.mxu0
        %v631 = vmul.f32 %v628, 0.2
        %v632 = vmax.f32 %v628, %v631
        %v633 = vld [vmem:[#allocation8] sm:$0xff]
        %v634 = vld [vmem:[#allocation8 + $0x8] sm:$0xff]
        %v635 = vld [vmem:[#allocation8 + $0x10] sm:$0xff]
        %v636 = vld [vmem:[#allocation8 + $0x18] sm:$0xff]
        %v637 = vld [vmem:[#allocation8 + $0x20] sm:$0xff]
        %v638 = vld [vmem:[#allocation8 + $0x28] sm:$0xff]
        %v639 = vld [vmem:[#allocation8 + $0x30] sm:$0xff]
        %v640 = vld [vmem:[#allocation8 + $0x38] sm:$0xff]
        %v641 = vld [vmem:[#allocation8 + $0x40] sm:$0xff]
        %v642 = vld [vmem:[#allocation8 + $0x48] sm:$0xff]
        %v643 = vld [vmem:[#allocation8 + $0x50] sm:$0xff]
        %v644 = vld [vmem:[#allocation8 + $0x58] sm:$0xff]
        %v645 = vld [vmem:[#allocation8 + $0x60] sm:$0xff]
        %v646 = vld [vmem:[#allocation8 + $0x68] sm:$0xff]
        %v647 = vld [vmem:[#allocation8 + $0x70] sm:$0xff]
        %v648 = vld [vmem:[#allocation8 + $0x78] sm:$0xff]
        %v649 = vld [vmem:[#allocation8 + $0x80] sm:$0xff]
        %v650 = vld [vmem:[#allocation8 + $0x88] sm:$0xff]
        %v651 = vld [vmem:[#allocation8 + $0x90] sm:$0xff]
        %v652 = vld [vmem:[#allocation8 + $0x98] sm:$0xff]
        %v653 = vld [vmem:[#allocation8 + $0xa0] sm:$0xff]
        %v654 = vld [vmem:[#allocation8 + $0xa8] sm:$0xff]
        %v655 = vld [vmem:[#allocation8 + $0xb0] sm:$0xff]
        %v656 = vld [vmem:[#allocation8 + $0xb8] sm:$0xff]
        %v657 = vld [vmem:[#allocation8 + $0xc0] sm:$0xff]
        %v658 = vld [vmem:[#allocation8 + $0xc8] sm:$0xff]
        %v659 = vld [vmem:[#allocation8 + $0xd0] sm:$0xff]
        %v660 = vld [vmem:[#allocation8 + $0xd8] sm:$0xff]
        %v661 = vld [vmem:[#allocation8 + $0xe0] sm:$0xff]
        %v662 = vld [vmem:[#allocation8 + $0xe8] sm:$0xff]
        %v663 = vld [vmem:[#allocation8 + $0xf0] sm:$0xff]
        %v664 = vld [vmem:[#allocation8 + $0xf8] sm:$0xff]
        %v665 = vld [vmem:[#allocation10] sm:$0x3]
        %v667 = vlaneseq
        %v668 = vshrl.u32 %v667, 7
        %v669 = vsub.s32 0, %v668
        %v670 = vrot.slane %v665, %v669
        %v671 = vlaneseq
        %v672 = vshrl.u32 %v671, 7
        %v673 = vsub.s32 1, %v672
        %v674 = vrot.slane %v665, %v673
        %677 = vmatprep.subr.mxu0 %v634
        %678 = vmatpush1.msra.mxu0 %v633
        %679 = vmatprep.subr.mxu0 %v636
        %680 = vmatpush1.msra.mxu0 %v635
        %681 = vmatprep.subr.mxu0 %v638
        %682 = vmatpush1.msra.mxu0 %v637
        %683 = vmatprep.subr.mxu0 %v640
        %684 = vmatpush1.msra.mxu0 %v639
        %685 = vmatprep.subr.mxu0 %v642
        %686 = vmatpush1.msra.mxu0 %v641
        %687 = vmatprep.subr.mxu0 %v644
        %688 = vmatpush1.msra.mxu0 %v643
        %689 = vmatprep.subr.mxu0 %v646
        %690 = vmatpush1.msra.mxu0 %v645
        %691 = vmatprep.subr.mxu0 %v648
        %692 = vmatpush1.msra.mxu0 %v647
        %693 = vmatprep.subr.mxu0 %v650
        %694 = vmatpush1.msra.mxu0 %v649
        %695 = vmatprep.subr.mxu0 %v652
        %696 = vmatpush1.msra.mxu0 %v651
        %697 = vmatprep.subr.mxu0 %v654
        %698 = vmatpush1.msra.mxu0 %v653
        %699 = vmatprep.subr.mxu0 %v656
        %700 = vmatpush1.msra.mxu0 %v655
        %701 = vmatprep.subr.mxu0 %v658
        %702 = vmatpush1.msra.mxu0 %v657
        %703 = vmatprep.subr.mxu0 %v660
        %704 = vmatpush1.msra.mxu0 %v659
        %705 = vmatprep.subr.mxu0 %v662
        %706 = vmatpush1.msra.mxu0 %v661
        %707 = vmatprep.subr.mxu0 %v664
        %708 = vmatpush1.msra.mxu0 %v663
        %709 = vmatprep.subr.mxu0 0.0
        %710 = vmatpush1.msra.mxu0 0.0
        %711 = vmatprep.subr.mxu0 0.0
        %712 = vmatpush1.msra.mxu0 0.0
        %713 = vmatprep.subr.mxu0 0.0
        %714 = vmatpush1.msra.mxu0 0.0
        %715 = vmatprep.subr.mxu0 0.0
        %716 = vmatpush1.msra.mxu0 0.0
        %717 = vmatprep.subr.mxu0 0.0
        %718 = vmatpush1.msra.mxu0 0.0
        %719 = vmatprep.subr.mxu0 0.0
        %720 = vmatpush1.msra.mxu0 0.0
        %721 = vmatprep.subr.mxu0 0.0
        %722 = vmatpush1.msra.mxu0 0.0
        %723 = vmatprep.subr.mxu0 0.0
        %724 = vmatpush1.msra.mxu0 0.0
        %725 = vmatprep.subr.mxu0 0.0
        %726 = vmatpush1.msra.mxu0 0.0
        %727 = vmatprep.subr.mxu0 0.0
        %728 = vmatpush1.msra.mxu0 0.0
        %729 = vmatprep.subr.mxu0 0.0
        %730 = vmatpush1.msra.mxu0 0.0
        %731 = vmatprep.subr.mxu0 0.0
        %732 = vmatpush1.msra.mxu0 0.0
        %733 = vmatprep.subr.mxu0 0.0
        %734 = vmatpush1.msra.mxu0 0.0
        %735 = vmatprep.subr.mxu0 0.0
        %736 = vmatpush1.msra.mxu0 0.0
        %737 = vmatprep.subr.mxu0 0.0
        %738 = vmatpush1.msra.mxu0 0.0
        %739 = vmatprep.subr.mxu0 0.0
        %740 = vmatpush1.msra.mxu0 0.0
        %741 = vmatprep.mubr.f32.mxu0 0.0
        %742 = vmatmul.mubr.f32.gmra.mrb[0].mxu0 %v632
        %v743 = vpop.f32.mrb[0].mxu0
        %v744 = vadd.f32 %v670, %v743
        %v745 = vpop.f32.mrb[0].mxu0
        %v746 = vadd.f32 %v674, %v745
        %747 = vdwg.mxu0
        %v748 = vmul.f32 %v744, 0.2
        %v749 = vmul.f32 %v746, 0.2
        %v750 = vmax.f32 %v744, %v748
        %v751 = vmax.f32 %v746, %v749
        %v752 = vld [vmem:[#allocation11] sm:$0xff]
        %v753 = vld [vmem:[#allocation11 + $0x8] sm:$0xff]
        %v754 = vld [vmem:[#allocation11 + $0x10] sm:$0xff]
        %v755 = vld [vmem:[#allocation11 + $0x18] sm:$0xff]
        %v756 = vld [vmem:[#allocation11 + $0x20] sm:$0xff]
        %v757 = vld [vmem:[#allocation11 + $0x28] sm:$0xff]
        %v758 = vld [vmem:[#allocation11 + $0x30] sm:$0xff]
        %v759 = vld [vmem:[#allocation11 + $0x38] sm:$0xff]
        %v760 = vld [vmem:[#allocation11 + $0x40] sm:$0xff]
        %v761 = vld [vmem:[#allocation11 + $0x48] sm:$0xff]
        %v762 = vld [vmem:[#allocation11 + $0x50] sm:$0xff]
        %v763 = vld [vmem:[#allocation11 + $0x58] sm:$0xff]
        %v764 = vld [vmem:[#allocation11 + $0x60] sm:$0xff]
        %v765 = vld [vmem:[#allocation11 + $0x68] sm:$0xff]
        %v766 = vld [vmem:[#allocation11 + $0x70] sm:$0xff]
        %v767 = vld [vmem:[#allocation11 + $0x78] sm:$0xff]
        %v768 = vld [vmem:[#allocation11 + $0x80] sm:$0xff]
        %v769 = vld [vmem:[#allocation11 + $0x88] sm:$0xff]
        %v770 = vld [vmem:[#allocation11 + $0x90] sm:$0xff]
        %v771 = vld [vmem:[#allocation11 + $0x98] sm:$0xff]
        %v772 = vld [vmem:[#allocation11 + $0xa0] sm:$0xff]
        %v773 = vld [vmem:[#allocation11 + $0xa8] sm:$0xff]
        %v774 = vld [vmem:[#allocation11 + $0xb0] sm:$0xff]
        %v775 = vld [vmem:[#allocation11 + $0xb8] sm:$0xff]
        %v776 = vld [vmem:[#allocation11 + $0xc0] sm:$0xff]
        %v777 = vld [vmem:[#allocation11 + $0xc8] sm:$0xff]
        %v778 = vld [vmem:[#allocation11 + $0xd0] sm:$0xff]
        %v779 = vld [vmem:[#allocation11 + $0xd8] sm:$0xff]
        %v780 = vld [vmem:[#allocation11 + $0xe0] sm:$0xff]
        %v781 = vld [vmem:[#allocation11 + $0xe8] sm:$0xff]
        %v782 = vld [vmem:[#allocation11 + $0xf0] sm:$0xff]
        %v783 = vld [vmem:[#allocation11 + $0xf8] sm:$0xff]
        %v784 = vld [vmem:[#allocation11 + $0x100] sm:$0xff]
        %v785 = vld [vmem:[#allocation11 + $0x108] sm:$0xff]
        %v786 = vld [vmem:[#allocation11 + $0x110] sm:$0xff]
        %v787 = vld [vmem:[#allocation11 + $0x118] sm:$0xff]
        %v788 = vld [vmem:[#allocation11 + $0x120] sm:$0xff]
        %v789 = vld [vmem:[#allocation11 + $0x128] sm:$0xff]
        %v790 = vld [vmem:[#allocation11 + $0x130] sm:$0xff]
        %v791 = vld [vmem:[#allocation11 + $0x138] sm:$0xff]
        %v792 = vld [vmem:[#allocation11 + $0x140] sm:$0xff]
        %v793 = vld [vmem:[#allocation11 + $0x148] sm:$0xff]
        %v794 = vld [vmem:[#allocation11 + $0x150] sm:$0xff]
        %v795 = vld [vmem:[#allocation11 + $0x158] sm:$0xff]
        %v796 = vld [vmem:[#allocation11 + $0x160] sm:$0xff]
        %v797 = vld [vmem:[#allocation11 + $0x168] sm:$0xff]
        %v798 = vld [vmem:[#allocation11 + $0x170] sm:$0xff]
        %v799 = vld [vmem:[#allocation11 + $0x178] sm:$0xff]
        %v800 = vld [vmem:[#allocation11 + $0x180] sm:$0xff]
        %v801 = vld [vmem:[#allocation11 + $0x188] sm:$0xff]
        %v802 = vld [vmem:[#allocation11 + $0x190] sm:$0xff]
        %v803 = vld [vmem:[#allocation11 + $0x198] sm:$0xff]
        %v804 = vld [vmem:[#allocation11 + $0x1a0] sm:$0xff]
        %v805 = vld [vmem:[#allocation11 + $0x1a8] sm:$0xff]
        %v806 = vld [vmem:[#allocation11 + $0x1b0] sm:$0xff]
        %v807 = vld [vmem:[#allocation11 + $0x1b8] sm:$0xff]
        %v808 = vld [vmem:[#allocation11 + $0x1c0] sm:$0xff]
        %v809 = vld [vmem:[#allocation11 + $0x1c8] sm:$0xff]
        %v810 = vld [vmem:[#allocation11 + $0x1d0] sm:$0xff]
        %v811 = vld [vmem:[#allocation11 + $0x1d8] sm:$0xff]
        %v812 = vld [vmem:[#allocation11 + $0x1e0] sm:$0xff]
        %v813 = vld [vmem:[#allocation11 + $0x1e8] sm:$0xff]
        %v814 = vld [vmem:[#allocation11 + $0x1f0] sm:$0xff]
        %v815 = vld [vmem:[#allocation11 + $0x1f8] sm:$0xff]
        %v816 = vld [vmem:[#allocation11 + $0x200] sm:$0xff]
        %v817 = vld [vmem:[#allocation11 + $0x208] sm:$0xff]
        %v818 = vld [vmem:[#allocation11 + $0x210] sm:$0xff]
        %v819 = vld [vmem:[#allocation11 + $0x218] sm:$0xff]
        %v820 = vld [vmem:[#allocation11 + $0x220] sm:$0xff]
        %v821 = vld [vmem:[#allocation11 + $0x228] sm:$0xff]
        %v822 = vld [vmem:[#allocation11 + $0x230] sm:$0xff]
        %v823 = vld [vmem:[#allocation11 + $0x238] sm:$0xff]
        %v824 = vld [vmem:[#allocation11 + $0x240] sm:$0xff]
        %v825 = vld [vmem:[#allocation11 + $0x248] sm:$0xff]
        %v826 = vld [vmem:[#allocation11 + $0x250] sm:$0xff]
        %v827 = vld [vmem:[#allocation11 + $0x258] sm:$0xff]
        %v828 = vld [vmem:[#allocation11 + $0x260] sm:$0xff]
        %v829 = vld [vmem:[#allocation11 + $0x268] sm:$0xff]
        %v830 = vld [vmem:[#allocation11 + $0x270] sm:$0xff]
        %v831 = vld [vmem:[#allocation11 + $0x278] sm:$0xff]
        %v832 = vld [vmem:[#allocation11 + $0x280] sm:$0xff]
        %v833 = vld [vmem:[#allocation11 + $0x288] sm:$0xff]
        %v834 = vld [vmem:[#allocation11 + $0x290] sm:$0xff]
        %v835 = vld [vmem:[#allocation11 + $0x298] sm:$0xff]
        %v836 = vld [vmem:[#allocation11 + $0x2a0] sm:$0xff]
        %v837 = vld [vmem:[#allocation11 + $0x2a8] sm:$0xff]
        %v838 = vld [vmem:[#allocation11 + $0x2b0] sm:$0xff]
        %v839 = vld [vmem:[#allocation11 + $0x2b8] sm:$0xff]
        %v840 = vld [vmem:[#allocation11 + $0x2c0] sm:$0xff]
        %v841 = vld [vmem:[#allocation11 + $0x2c8] sm:$0xff]
        %v842 = vld [vmem:[#allocation11 + $0x2d0] sm:$0xff]
        %v843 = vld [vmem:[#allocation11 + $0x2d8] sm:$0xff]
        %v844 = vld [vmem:[#allocation11 + $0x2e0] sm:$0xff]
        %v845 = vld [vmem:[#allocation11 + $0x2e8] sm:$0xff]
        %v846 = vld [vmem:[#allocation11 + $0x2f0] sm:$0xff]
        %v847 = vld [vmem:[#allocation11 + $0x2f8] sm:$0xff]
        %v848 = vld [vmem:[#allocation11 + $0x300] sm:$0xff]
        %v849 = vld [vmem:[#allocation11 + $0x308] sm:$0xff]
        %v850 = vld [vmem:[#allocation11 + $0x310] sm:$0xff]
        %v851 = vld [vmem:[#allocation11 + $0x318] sm:$0xff]
        %v852 = vld [vmem:[#allocation11 + $0x320] sm:$0xff]
        %v853 = vld [vmem:[#allocation11 + $0x328] sm:$0xff]
        %v854 = vld [vmem:[#allocation11 + $0x330] sm:$0xff]
        %v855 = vld [vmem:[#allocation11 + $0x338] sm:$0xff]
        %v856 = vld [vmem:[#allocation11 + $0x340] sm:$0xff]
        %v857 = vld [vmem:[#allocation11 + $0x348] sm:$0xff]
        %v858 = vld [vmem:[#allocation11 + $0x350] sm:$0xff]
        %v859 = vld [vmem:[#allocation11 + $0x358] sm:$0xff]
        %v860 = vld [vmem:[#allocation11 + $0x360] sm:$0xff]
        %v861 = vld [vmem:[#allocation11 + $0x368] sm:$0xff]
        %v862 = vld [vmem:[#allocation11 + $0x370] sm:$0xff]
        %v863 = vld [vmem:[#allocation11 + $0x378] sm:$0xff]
        %v864 = vld [vmem:[#allocation11 + $0x380] sm:$0xff]
        %v865 = vld [vmem:[#allocation11 + $0x388] sm:$0xff]
        %v866 = vld [vmem:[#allocation11 + $0x390] sm:$0xff]
        %v867 = vld [vmem:[#allocation11 + $0x398] sm:$0xff]
        %v868 = vld [vmem:[#allocation11 + $0x3a0] sm:$0xff]
        %v869 = vld [vmem:[#allocation11 + $0x3a8] sm:$0xff]
        %v870 = vld [vmem:[#allocation11 + $0x3b0] sm:$0xff]
        %v871 = vld [vmem:[#allocation11 + $0x3b8] sm:$0xff]
        %v872 = vld [vmem:[#allocation11 + $0x3c0] sm:$0xff]
        %v873 = vld [vmem:[#allocation11 + $0x3c8] sm:$0xff]
        %v874 = vld [vmem:[#allocation11 + $0x3d0] sm:$0xff]
        %v875 = vld [vmem:[#allocation11 + $0x3d8] sm:$0xff]
        %v876 = vld [vmem:[#allocation11 + $0x3e0] sm:$0xff]
        %v877 = vld [vmem:[#allocation11 + $0x3e8] sm:$0xff]
        %v878 = vld [vmem:[#allocation11 + $0x3f0] sm:$0xff]
        %v879 = vld [vmem:[#allocation11 + $0x3f8] sm:$0xff]
        %v880 = vld [vmem:[#allocation13] sm:$0xf]
        %v882 = vlaneseq
        %v883 = vshrl.u32 %v882, 7
        %v884 = vsub.s32 0, %v883
        %v885 = vrot.slane %v880, %v884
        %v886 = vlaneseq
        %v887 = vshrl.u32 %v886, 7
        %v888 = vsub.s32 1, %v887
        %v889 = vrot.slane %v880, %v888
        %v890 = vlaneseq
        %v891 = vshrl.u32 %v890, 7
        %v892 = vsub.s32 2, %v891
        %v893 = vrot.slane %v880, %v892
        %v894 = vlaneseq
        %v895 = vshrl.u32 %v894, 7
        %v896 = vsub.s32 3, %v895
        %v897 = vrot.slane %v880, %v896
        %902 = vmatprep.subr.mxu0 %v753
        %903 = vmatpush1.msra.mxu0 %v752
        %904 = vmatprep.subr.mxu0 %v757
        %905 = vmatpush1.msra.mxu0 %v756
        %906 = vmatprep.subr.mxu0 %v761
        %907 = vmatpush1.msra.mxu0 %v760
        %908 = vmatprep.subr.mxu0 %v765
        %909 = vmatpush1.msra.mxu0 %v764
        %910 = vmatprep.subr.mxu0 %v769
        %911 = vmatpush1.msra.mxu0 %v768
        %912 = vmatprep.subr.mxu0 %v773
        %913 = vmatpush1.msra.mxu0 %v772
        %914 = vmatprep.subr.mxu0 %v777
        %915 = vmatpush1.msra.mxu0 %v776
        %916 = vmatprep.subr.mxu0 %v781
        %917 = vmatpush1.msra.mxu0 %v780
        %918 = vmatprep.subr.mxu0 %v785
        %919 = vmatpush1.msra.mxu0 %v784
        %920 = vmatprep.subr.mxu0 %v789
        %921 = vmatpush1.msra.mxu0 %v788
        %922 = vmatprep.subr.mxu0 %v793
        %923 = vmatpush1.msra.mxu0 %v792
        %924 = vmatprep.subr.mxu0 %v797
        %925 = vmatpush1.msra.mxu0 %v796
        %926 = vmatprep.subr.mxu0 %v801
        %927 = vmatpush1.msra.mxu0 %v800
        %928 = vmatprep.subr.mxu0 %v805
        %929 = vmatpush1.msra.mxu0 %v804
        %930 = vmatprep.subr.mxu0 %v809
        %931 = vmatpush1.msra.mxu0 %v808
        %932 = vmatprep.subr.mxu0 %v813
        %933 = vmatpush1.msra.mxu0 %v812
        %934 = vmatprep.subr.mxu0 %v817
        %935 = vmatpush1.msra.mxu0 %v816
        %936 = vmatprep.subr.mxu0 %v821
        %937 = vmatpush1.msra.mxu0 %v820
        %938 = vmatprep.subr.mxu0 %v825
        %939 = vmatpush1.msra.mxu0 %v824
        %940 = vmatprep.subr.mxu0 %v829
        %941 = vmatpush1.msra.mxu0 %v828
        %942 = vmatprep.subr.mxu0 %v833
        %943 = vmatpush1.msra.mxu0 %v832
        %944 = vmatprep.subr.mxu0 %v837
        %945 = vmatpush1.msra.mxu0 %v836
        %946 = vmatprep.subr.mxu0 %v841
        %947 = vmatpush1.msra.mxu0 %v840
        %948 = vmatprep.subr.mxu0 %v845
        %949 = vmatpush1.msra.mxu0 %v844
        %950 = vmatprep.subr.mxu0 %v849
        %951 = vmatpush1.msra.mxu0 %v848
        %952 = vmatprep.subr.mxu0 %v853
        %953 = vmatpush1.msra.mxu0 %v852
        %954 = vmatprep.subr.mxu0 %v857
        %955 = vmatpush1.msra.mxu0 %v856
        %956 = vmatprep.subr.mxu0 %v861
        %957 = vmatpush1.msra.mxu0 %v860
        %958 = vmatprep.subr.mxu0 %v865
        %959 = vmatpush1.msra.mxu0 %v864
        %960 = vmatprep.subr.mxu0 %v869
        %961 = vmatpush1.msra.mxu0 %v868
        %962 = vmatprep.subr.mxu0 %v873
        %963 = vmatpush1.msra.mxu0 %v872
        %964 = vmatprep.subr.mxu0 %v877
        %965 = vmatpush1.msra.mxu0 %v876
        %966 = vmatprep.mubr.f32.mxu0 %v751
        %967 = vmatmul.mubr.f32.gmra.mrb[0].mxu0 %v750
        %v968 = vpop.f32.mrb[0].mxu0
        %v969 = vadd.f32 %v885, %v968
        %v970 = vpop.f32.mrb[0].mxu0
        %v971 = vadd.f32 %v889, %v970
        %972 = vdwg.mxu0
        %973 = vmatprep.subr.mxu0 %v755
        %974 = vmatpush1.msra.mxu0 %v754
        %975 = vmatprep.subr.mxu0 %v759
        %976 = vmatpush1.msra.mxu0 %v758
        %977 = vmatprep.subr.mxu0 %v763
        %978 = vmatpush1.msra.mxu0 %v762
        %979 = vmatprep.subr.mxu0 %v767
        %980 = vmatpush1.msra.mxu0 %v766
        %981 = vmatprep.subr.mxu0 %v771
        %982 = vmatpush1.msra.mxu0 %v770
        %983 = vmatprep.subr.mxu0 %v775
        %984 = vmatpush1.msra.mxu0 %v774
        %985 = vmatprep.subr.mxu0 %v779
        %986 = vmatpush1.msra.mxu0 %v778
        %987 = vmatprep.subr.mxu0 %v783
        %988 = vmatpush1.msra.mxu0 %v782
        %989 = vmatprep.subr.mxu0 %v787
        %990 = vmatpush1.msra.mxu0 %v786
        %991 = vmatprep.subr.mxu0 %v791
        %992 = vmatpush1.msra.mxu0 %v790
        %993 = vmatprep.subr.mxu0 %v795
        %994 = vmatpush1.msra.mxu0 %v794
        %995 = vmatprep.subr.mxu0 %v799
        %996 = vmatpush1.msra.mxu0 %v798
        %997 = vmatprep.subr.mxu0 %v803
        %998 = vmatpush1.msra.mxu0 %v802
        %999 = vmatprep.subr.mxu0 %v807
        %1000 = vmatpush1.msra.mxu0 %v806
        %1001 = vmatprep.subr.mxu0 %v811
        %1002 = vmatpush1.msra.mxu0 %v810
        %1003 = vmatprep.subr.mxu0 %v815
        %1004 = vmatpush1.msra.mxu0 %v814
        %1005 = vmatprep.subr.mxu0 %v819
        %1006 = vmatpush1.msra.mxu0 %v818
        %1007 = vmatprep.subr.mxu0 %v823
        %1008 = vmatpush1.msra.mxu0 %v822
        %1009 = vmatprep.subr.mxu0 %v827
        %1010 = vmatpush1.msra.mxu0 %v826
        %1011 = vmatprep.subr.mxu0 %v831
        %1012 = vmatpush1.msra.mxu0 %v830
        %1013 = vmatprep.subr.mxu0 %v835
        %1014 = vmatpush1.msra.mxu0 %v834
        %1015 = vmatprep.subr.mxu0 %v839
        %1016 = vmatpush1.msra.mxu0 %v838
        %1017 = vmatprep.subr.mxu0 %v843
        %1018 = vmatpush1.msra.mxu0 %v842
        %1019 = vmatprep.subr.mxu0 %v847
        %1020 = vmatpush1.msra.mxu0 %v846
        %1021 = vmatprep.subr.mxu0 %v851
        %1022 = vmatpush1.msra.mxu0 %v850
        %1023 = vmatprep.subr.mxu0 %v855
        %1024 = vmatpush1.msra.mxu0 %v854
        %1025 = vmatprep.subr.mxu0 %v859
        %1026 = vmatpush1.msra.mxu0 %v858
        %1027 = vmatprep.subr.mxu0 %v863
        %1028 = vmatpush1.msra.mxu0 %v862
        %1029 = vmatprep.subr.mxu0 %v867
        %1030 = vmatpush1.msra.mxu0 %v866
        %1031 = vmatprep.subr.mxu0 %v871
        %1032 = vmatpush1.msra.mxu0 %v870
        %1033 = vmatprep.subr.mxu0 %v875
        %1034 = vmatpush1.msra.mxu0 %v874
        %1035 = vmatprep.subr.mxu0 %v879
        %1036 = vmatpush1.msra.mxu0 %v878
        %1037 = vmatprep.mubr.f32.mxu0 %v751
        %1038 = vmatmul.mubr.f32.gmra.mrb[0].mxu0 %v750
        %v1039 = vpop.f32.mrb[0].mxu0
        %v1040 = vadd.f32 %v893, %v1039
        %v1041 = vpop.f32.mrb[0].mxu0
        %v1042 = vadd.f32 %v897, %v1041
        %1043 = vdwg.mxu0
        %v1044 = vmul.f32 %v969, 0.2
        %v1045 = vmul.f32 %v971, 0.2
        %v1046 = vmul.f32 %v1040, 0.2
        %v1047 = vmul.f32 %v1042, 0.2
        %v1048 = vmax.f32 %v969, %v1044
        %v1049 = vmax.f32 %v971, %v1045
        %v1050 = vmax.f32 %v1040, %v1046
        %v1051 = vmax.f32 %v1042, %v1047
        %v1052 = vld [vmem:[#allocation14] sm:$0xff]
        %v1053 = vld [vmem:[#allocation14 + $0x8] sm:$0xff]
        %v1054 = vld [vmem:[#allocation14 + $0x10] sm:$0xff]
        %v1055 = vld [vmem:[#allocation14 + $0x18] sm:$0xff]
        %v1056 = vld [vmem:[#allocation14 + $0x20] sm:$0xff]
        %v1057 = vld [vmem:[#allocation14 + $0x28] sm:$0xff]
        %v1058 = vld [vmem:[#allocation14 + $0x30] sm:$0xff]
        %v1059 = vld [vmem:[#allocation14 + $0x38] sm:$0xff]
        %v1060 = vld [vmem:[#allocation14 + $0x40] sm:$0xff]
        %v1061 = vld [vmem:[#allocation14 + $0x48] sm:$0xff]
        %v1062 = vld [vmem:[#allocation14 + $0x50] sm:$0xff]
        %v1063 = vld [vmem:[#allocation14 + $0x58] sm:$0xff]
        %v1064 = vld [vmem:[#allocation14 + $0x60] sm:$0xff]
        %v1065 = vld [vmem:[#allocation14 + $0x68] sm:$0xff]
        %v1066 = vld [vmem:[#allocation14 + $0x70] sm:$0xff]
        %v1067 = vld [vmem:[#allocation14 + $0x78] sm:$0xff]
        %v1068 = vld [vmem:[#allocation14 + $0x80] sm:$0xff]
        %v1069 = vld [vmem:[#allocation14 + $0x88] sm:$0xff]
        %v1070 = vld [vmem:[#allocation14 + $0x90] sm:$0xff]
        %v1071 = vld [vmem:[#allocation14 + $0x98] sm:$0xff]
        %v1072 = vld [vmem:[#allocation14 + $0xa0] sm:$0xff]
        %v1073 = vld [vmem:[#allocation14 + $0xa8] sm:$0xff]
        %v1074 = vld [vmem:[#allocation14 + $0xb0] sm:$0xff]
        %v1075 = vld [vmem:[#allocation14 + $0xb8] sm:$0xff]
        %v1076 = vld [vmem:[#allocation14 + $0xc0] sm:$0xff]
        %v1077 = vld [vmem:[#allocation14 + $0xc8] sm:$0xff]
        %v1078 = vld [vmem:[#allocation14 + $0xd0] sm:$0xff]
        %v1079 = vld [vmem:[#allocation14 + $0xd8] sm:$0xff]
        %v1080 = vld [vmem:[#allocation14 + $0xe0] sm:$0xff]
        %v1081 = vld [vmem:[#allocation14 + $0xe8] sm:$0xff]
        %v1082 = vld [vmem:[#allocation14 + $0xf0] sm:$0xff]
        %v1083 = vld [vmem:[#allocation14 + $0xf8] sm:$0xff]
        %v1084 = vld [vmem:[#allocation14 + $0x100] sm:$0xff]
        %v1085 = vld [vmem:[#allocation14 + $0x108] sm:$0xff]
        %v1086 = vld [vmem:[#allocation14 + $0x110] sm:$0xff]
        %v1087 = vld [vmem:[#allocation14 + $0x118] sm:$0xff]
        %v1088 = vld [vmem:[#allocation14 + $0x120] sm:$0xff]
        %v1089 = vld [vmem:[#allocation14 + $0x128] sm:$0xff]
        %v1090 = vld [vmem:[#allocation14 + $0x130] sm:$0xff]
        %v1091 = vld [vmem:[#allocation14 + $0x138] sm:$0xff]
        %v1092 = vld [vmem:[#allocation14 + $0x140] sm:$0xff]
        %v1093 = vld [vmem:[#allocation14 + $0x148] sm:$0xff]
        %v1094 = vld [vmem:[#allocation14 + $0x150] sm:$0xff]
        %v1095 = vld [vmem:[#allocation14 + $0x158] sm:$0xff]
        %v1096 = vld [vmem:[#allocation14 + $0x160] sm:$0xff]
        %v1097 = vld [vmem:[#allocation14 + $0x168] sm:$0xff]
        %v1098 = vld [vmem:[#allocation14 + $0x170] sm:$0xff]
        %v1099 = vld [vmem:[#allocation14 + $0x178] sm:$0xff]
        %v1100 = vld [vmem:[#allocation14 + $0x180] sm:$0xff]
        %v1101 = vld [vmem:[#allocation14 + $0x188] sm:$0xff]
        %v1102 = vld [vmem:[#allocation14 + $0x190] sm:$0xff]
        %v1103 = vld [vmem:[#allocation14 + $0x198] sm:$0xff]
        %v1104 = vld [vmem:[#allocation14 + $0x1a0] sm:$0xff]
        %v1105 = vld [vmem:[#allocation14 + $0x1a8] sm:$0xff]
        %v1106 = vld [vmem:[#allocation14 + $0x1b0] sm:$0xff]
        %v1107 = vld [vmem:[#allocation14 + $0x1b8] sm:$0xff]
        %v1108 = vld [vmem:[#allocation14 + $0x1c0] sm:$0xff]
        %v1109 = vld [vmem:[#allocation14 + $0x1c8] sm:$0xff]
        %v1110 = vld [vmem:[#allocation14 + $0x1d0] sm:$0xff]
        %v1111 = vld [vmem:[#allocation14 + $0x1d8] sm:$0xff]
        %v1112 = vld [vmem:[#allocation14 + $0x1e0] sm:$0xff]
        %v1113 = vld [vmem:[#allocation14 + $0x1e8] sm:$0xff]
        %v1114 = vld [vmem:[#allocation14 + $0x1f0] sm:$0xff]
        %v1115 = vld [vmem:[#allocation14 + $0x1f8] sm:$0xff]
        %v1116 = vld [vmem:[#allocation14 + $0x200] sm:$0xff]
        %v1117 = vld [vmem:[#allocation14 + $0x208] sm:$0xff]
        %v1118 = vld [vmem:[#allocation14 + $0x210] sm:$0xff]
        %v1119 = vld [vmem:[#allocation14 + $0x218] sm:$0xff]
        %v1120 = vld [vmem:[#allocation14 + $0x220] sm:$0xff]
        %v1121 = vld [vmem:[#allocation14 + $0x228] sm:$0xff]
        %v1122 = vld [vmem:[#allocation14 + $0x230] sm:$0xff]
        %v1123 = vld [vmem:[#allocation14 + $0x238] sm:$0xff]
        %v1124 = vld [vmem:[#allocation14 + $0x240] sm:$0xff]
        %v1125 = vld [vmem:[#allocation14 + $0x248] sm:$0xff]
        %v1126 = vld [vmem:[#allocation14 + $0x250] sm:$0xff]
        %v1127 = vld [vmem:[#allocation14 + $0x258] sm:$0xff]
        %v1128 = vld [vmem:[#allocation14 + $0x260] sm:$0xff]
        %v1129 = vld [vmem:[#allocation14 + $0x268] sm:$0xff]
        %v1130 = vld [vmem:[#allocation14 + $0x270] sm:$0xff]
        %v1131 = vld [vmem:[#allocation14 + $0x278] sm:$0xff]
        %v1132 = vld [vmem:[#allocation14 + $0x280] sm:$0xff]
        %v1133 = vld [vmem:[#allocation14 + $0x288] sm:$0xff]
        %v1134 = vld [vmem:[#allocation14 + $0x290] sm:$0xff]
        %v1135 = vld [vmem:[#allocation14 + $0x298] sm:$0xff]
        %v1136 = vld [vmem:[#allocation14 + $0x2a0] sm:$0xff]
        %v1137 = vld [vmem:[#allocation14 + $0x2a8] sm:$0xff]
        %v1138 = vld [vmem:[#allocation14 + $0x2b0] sm:$0xff]
        %v1139 = vld [vmem:[#allocation14 + $0x2b8] sm:$0xff]
        %v1140 = vld [vmem:[#allocation14 + $0x2c0] sm:$0xff]
        %v1141 = vld [vmem:[#allocation14 + $0x2c8] sm:$0xff]
        %v1142 = vld [vmem:[#allocation14 + $0x2d0] sm:$0xff]
        %v1143 = vld [vmem:[#allocation14 + $0x2d8] sm:$0xff]
        %v1144 = vld [vmem:[#allocation14 + $0x2e0] sm:$0xff]
        %v1145 = vld [vmem:[#allocation14 + $0x2e8] sm:$0xff]
        %v1146 = vld [vmem:[#allocation14 + $0x2f0] sm:$0xff]
        %v1147 = vld [vmem:[#allocation14 + $0x2f8] sm:$0xff]
        %v1148 = vld [vmem:[#allocation14 + $0x300] sm:$0xff]
        %v1149 = vld [vmem:[#allocation14 + $0x308] sm:$0xff]
        %v1150 = vld [vmem:[#allocation14 + $0x310] sm:$0xff]
        %v1151 = vld [vmem:[#allocation14 + $0x318] sm:$0xff]
        %v1152 = vld [vmem:[#allocation14 + $0x320] sm:$0xff]
        %v1153 = vld [vmem:[#allocation14 + $0x328] sm:$0xff]
        %v1154 = vld [vmem:[#allocation14 + $0x330] sm:$0xff]
        %v1155 = vld [vmem:[#allocation14 + $0x338] sm:$0xff]
        %v1156 = vld [vmem:[#allocation14 + $0x340] sm:$0xff]
        %v1157 = vld [vmem:[#allocation14 + $0x348] sm:$0xff]
        %v1158 = vld [vmem:[#allocation14 + $0x350] sm:$0xff]
        %v1159 = vld [vmem:[#allocation14 + $0x358] sm:$0xff]
        %v1160 = vld [vmem:[#allocation14 + $0x360] sm:$0xff]
        %v1161 = vld [vmem:[#allocation14 + $0x368] sm:$0xff]
        %v1162 = vld [vmem:[#allocation14 + $0x370] sm:$0xff]
        %v1163 = vld [vmem:[#allocation14 + $0x378] sm:$0xff]
        %v1164 = vld [vmem:[#allocation14 + $0x380] sm:$0xff]
        %v1165 = vld [vmem:[#allocation14 + $0x388] sm:$0xff]
        %v1166 = vld [vmem:[#allocation14 + $0x390] sm:$0xff]
        %v1167 = vld [vmem:[#allocation14 + $0x398] sm:$0xff]
        %v1168 = vld [vmem:[#allocation14 + $0x3a0] sm:$0xff]
        %v1169 = vld [vmem:[#allocation14 + $0x3a8] sm:$0xff]
        %v1170 = vld [vmem:[#allocation14 + $0x3b0] sm:$0xff]
        %v1171 = vld [vmem:[#allocation14 + $0x3b8] sm:$0xff]
        %v1172 = vld [vmem:[#allocation14 + $0x3c0] sm:$0xff]
        %v1173 = vld [vmem:[#allocation14 + $0x3c8] sm:$0xff]
        %v1174 = vld [vmem:[#allocation14 + $0x3d0] sm:$0xff]
        %v1175 = vld [vmem:[#allocation14 + $0x3d8] sm:$0xff]
        %v1176 = vld [vmem:[#allocation14 + $0x3e0] sm:$0xff]
        %v1177 = vld [vmem:[#allocation14 + $0x3e8] sm:$0xff]
        %v1178 = vld [vmem:[#allocation14 + $0x3f0] sm:$0xff]
        %v1179 = vld [vmem:[#allocation14 + $0x3f8] sm:$0xff]
        %v1180 = vld [vmem:[#allocation14 + $0x400] sm:$0xff]
        %v1181 = vld [vmem:[#allocation14 + $0x408] sm:$0xff]
        %v1182 = vld [vmem:[#allocation14 + $0x410] sm:$0xff]
        %v1183 = vld [vmem:[#allocation14 + $0x418] sm:$0xff]
        %v1184 = vld [vmem:[#allocation14 + $0x420] sm:$0xff]
        %v1185 = vld [vmem:[#allocation14 + $0x428] sm:$0xff]
        %v1186 = vld [vmem:[#allocation14 + $0x430] sm:$0xff]
        %v1187 = vld [vmem:[#allocation14 + $0x438] sm:$0xff]
        %v1188 = vld [vmem:[#allocation14 + $0x440] sm:$0xff]
        %v1189 = vld [vmem:[#allocation14 + $0x448] sm:$0xff]
        %v1190 = vld [vmem:[#allocation14 + $0x450] sm:$0xff]
        %v1191 = vld [vmem:[#allocation14 + $0x458] sm:$0xff]
        %v1192 = vld [vmem:[#allocation14 + $0x460] sm:$0xff]
        %v1193 = vld [vmem:[#allocation14 + $0x468] sm:$0xff]
        %v1194 = vld [vmem:[#allocation14 + $0x470] sm:$0xff]
        %v1195 = vld [vmem:[#allocation14 + $0x478] sm:$0xff]
        %v1196 = vld [vmem:[#allocation14 + $0x480] sm:$0xff]
        %v1197 = vld [vmem:[#allocation14 + $0x488] sm:$0xff]
        %v1198 = vld [vmem:[#allocation14 + $0x490] sm:$0xff]
        %v1199 = vld [vmem:[#allocation14 + $0x498] sm:$0xff]
        %v1200 = vld [vmem:[#allocation14 + $0x4a0] sm:$0xff]
        %v1201 = vld [vmem:[#allocation14 + $0x4a8] sm:$0xff]
        %v1202 = vld [vmem:[#allocation14 + $0x4b0] sm:$0xff]
        %v1203 = vld [vmem:[#allocation14 + $0x4b8] sm:$0xff]
        %v1204 = vld [vmem:[#allocation14 + $0x4c0] sm:$0xff]
        %v1205 = vld [vmem:[#allocation14 + $0x4c8] sm:$0xff]
        %v1206 = vld [vmem:[#allocation14 + $0x4d0] sm:$0xff]
        %v1207 = vld [vmem:[#allocation14 + $0x4d8] sm:$0xff]
        %v1208 = vld [vmem:[#allocation14 + $0x4e0] sm:$0xff]
        %v1209 = vld [vmem:[#allocation14 + $0x4e8] sm:$0xff]
        %v1210 = vld [vmem:[#allocation14 + $0x4f0] sm:$0xff]
        %v1211 = vld [vmem:[#allocation14 + $0x4f8] sm:$0xff]
        %v1212 = vld [vmem:[#allocation14 + $0x500] sm:$0xff]
        %v1213 = vld [vmem:[#allocation14 + $0x508] sm:$0xff]
        %v1214 = vld [vmem:[#allocation14 + $0x510] sm:$0xff]
        %v1215 = vld [vmem:[#allocation14 + $0x518] sm:$0xff]
        %v1216 = vld [vmem:[#allocation14 + $0x520] sm:$0xff]
        %v1217 = vld [vmem:[#allocation14 + $0x528] sm:$0xff]
        %v1218 = vld [vmem:[#allocation14 + $0x530] sm:$0xff]
        %v1219 = vld [vmem:[#allocation14 + $0x538] sm:$0xff]
        %v1220 = vld [vmem:[#allocation14 + $0x540] sm:$0xff]
        %v1221 = vld [vmem:[#allocation14 + $0x548] sm:$0xff]
        %v1222 = vld [vmem:[#allocation14 + $0x550] sm:$0xff]
        %v1223 = vld [vmem:[#allocation14 + $0x558] sm:$0xff]
        %v1224 = vld [vmem:[#allocation14 + $0x560] sm:$0xff]
        %v1225 = vld [vmem:[#allocation14 + $0x568] sm:$0xff]
        %v1226 = vld [vmem:[#allocation14 + $0x570] sm:$0xff]
        %v1227 = vld [vmem:[#allocation14 + $0x578] sm:$0xff]
        %v1228 = vld [vmem:[#allocation14 + $0x580] sm:$0xff]
        %v1229 = vld [vmem:[#allocation14 + $0x588] sm:$0xff]
        %v1230 = vld [vmem:[#allocation14 + $0x590] sm:$0xff]
        %v1231 = vld [vmem:[#allocation14 + $0x598] sm:$0xff]
        %v1232 = vld [vmem:[#allocation14 + $0x5a0] sm:$0xff]
        %v1233 = vld [vmem:[#allocation14 + $0x5a8] sm:$0xff]
        %v1234 = vld [vmem:[#allocation14 + $0x5b0] sm:$0xff]
        %v1235 = vld [vmem:[#allocation14 + $0x5b8] sm:$0xff]
        %v1236 = vld [vmem:[#allocation14 + $0x5c0] sm:$0xff]
        %v1237 = vld [vmem:[#allocation14 + $0x5c8] sm:$0xff]
        %v1238 = vld [vmem:[#allocation14 + $0x5d0] sm:$0xff]
        %v1239 = vld [vmem:[#allocation14 + $0x5d8] sm:$0xff]
        %v1240 = vld [vmem:[#allocation14 + $0x5e0] sm:$0xff]
        %v1241 = vld [vmem:[#allocation14 + $0x5e8] sm:$0xff]
        %v1242 = vld [vmem:[#allocation14 + $0x5f0] sm:$0xff]
        %v1243 = vld [vmem:[#allocation14 + $0x5f8] sm:$0xff]
        %v1244 = vld [vmem:[#allocation14 + $0x600] sm:$0xff]
        %v1245 = vld [vmem:[#allocation14 + $0x608] sm:$0xff]
        %v1246 = vld [vmem:[#allocation14 + $0x610] sm:$0xff]
        %v1247 = vld [vmem:[#allocation14 + $0x618] sm:$0xff]
        %v1248 = vld [vmem:[#allocation14 + $0x620] sm:$0xff]
        %v1249 = vld [vmem:[#allocation14 + $0x628] sm:$0xff]
        %v1250 = vld [vmem:[#allocation14 + $0x630] sm:$0xff]
        %v1251 = vld [vmem:[#allocation14 + $0x638] sm:$0xff]
        %v1252 = vld [vmem:[#allocation14 + $0x640] sm:$0xff]
        %v1253 = vld [vmem:[#allocation14 + $0x648] sm:$0xff]
        %v1254 = vld [vmem:[#allocation14 + $0x650] sm:$0xff]
        %v1255 = vld [vmem:[#allocation14 + $0x658] sm:$0xff]
        %v1256 = vld [vmem:[#allocation14 + $0x660] sm:$0xff]
        %v1257 = vld [vmem:[#allocation14 + $0x668] sm:$0xff]
        %v1258 = vld [vmem:[#allocation14 + $0x670] sm:$0xff]
        %v1259 = vld [vmem:[#allocation14 + $0x678] sm:$0xff]
        %v1260 = vld [vmem:[#allocation14 + $0x680] sm:$0xff]
        %v1261 = vld [vmem:[#allocation14 + $0x688] sm:$0xff]
        %v1262 = vld [vmem:[#allocation14 + $0x690] sm:$0xff]
        %v1263 = vld [vmem:[#allocation14 + $0x698] sm:$0xff]
        %v1264 = vld [vmem:[#allocation14 + $0x6a0] sm:$0xff]
        %v1265 = vld [vmem:[#allocation14 + $0x6a8] sm:$0xff]
        %v1266 = vld [vmem:[#allocation14 + $0x6b0] sm:$0xff]
        %v1267 = vld [vmem:[#allocation14 + $0x6b8] sm:$0xff]
        %v1268 = vld [vmem:[#allocation14 + $0x6c0] sm:$0xff]
        %v1269 = vld [vmem:[#allocation14 + $0x6c8] sm:$0xff]
        %v1270 = vld [vmem:[#allocation14 + $0x6d0] sm:$0xff]
        %v1271 = vld [vmem:[#allocation14 + $0x6d8] sm:$0xff]
        %v1272 = vld [vmem:[#allocation14 + $0x6e0] sm:$0xff]
        %v1273 = vld [vmem:[#allocation14 + $0x6e8] sm:$0xff]
        %v1274 = vld [vmem:[#allocation14 + $0x6f0] sm:$0xff]
        %v1275 = vld [vmem:[#allocation14 + $0x6f8] sm:$0xff]
        %v1276 = vld [vmem:[#allocation14 + $0x700] sm:$0xff]
        %v1277 = vld [vmem:[#allocation14 + $0x708] sm:$0xff]
        %v1278 = vld [vmem:[#allocation14 + $0x710] sm:$0xff]
        %v1279 = vld [vmem:[#allocation14 + $0x718] sm:$0xff]
        %v1280 = vld [vmem:[#allocation14 + $0x720] sm:$0xff]
        %v1281 = vld [vmem:[#allocation14 + $0x728] sm:$0xff]
        %v1282 = vld [vmem:[#allocation14 + $0x730] sm:$0xff]
        %v1283 = vld [vmem:[#allocation14 + $0x738] sm:$0xff]
        %v1284 = vld [vmem:[#allocation14 + $0x740] sm:$0xff]
        %v1285 = vld [vmem:[#allocation14 + $0x748] sm:$0xff]
        %v1286 = vld [vmem:[#allocation14 + $0x750] sm:$0xff]
        %v1287 = vld [vmem:[#allocation14 + $0x758] sm:$0xff]
        %v1288 = vld [vmem:[#allocation14 + $0x760] sm:$0xff]
        %v1289 = vld [vmem:[#allocation14 + $0x768] sm:$0xff]
        %v1290 = vld [vmem:[#allocation14 + $0x770] sm:$0xff]
        %v1291 = vld [vmem:[#allocation14 + $0x778] sm:$0xff]
        %v1292 = vld [vmem:[#allocation14 + $0x780] sm:$0xff]
        %v1293 = vld [vmem:[#allocation14 + $0x788] sm:$0xff]
        %v1294 = vld [vmem:[#allocation14 + $0x790] sm:$0xff]
        %v1295 = vld [vmem:[#allocation14 + $0x798] sm:$0xff]
        %v1296 = vld [vmem:[#allocation14 + $0x7a0] sm:$0xff]
        %v1297 = vld [vmem:[#allocation14 + $0x7a8] sm:$0xff]
        %v1298 = vld [vmem:[#allocation14 + $0x7b0] sm:$0xff]
        %v1299 = vld [vmem:[#allocation14 + $0x7b8] sm:$0xff]
        %v1300 = vld [vmem:[#allocation14 + $0x7c0] sm:$0xff]
        %v1301 = vld [vmem:[#allocation14 + $0x7c8] sm:$0xff]
        %v1302 = vld [vmem:[#allocation14 + $0x7d0] sm:$0xff]
        %v1303 = vld [vmem:[#allocation14 + $0x7d8] sm:$0xff]
        %v1304 = vld [vmem:[#allocation14 + $0x7e0] sm:$0xff]
        %v1305 = vld [vmem:[#allocation14 + $0x7e8] sm:$0xff]
        %v1306 = vld [vmem:[#allocation14 + $0x7f0] sm:$0xff]
        %v1307 = vld [vmem:[#allocation14 + $0x7f8] sm:$0xff]
        %v1308 = vld [vmem:[#allocation14 + $0x800] sm:$0xff]
        %v1309 = vld [vmem:[#allocation14 + $0x808] sm:$0xff]
        %v1310 = vld [vmem:[#allocation14 + $0x810] sm:$0xff]
        %v1311 = vld [vmem:[#allocation14 + $0x818] sm:$0xff]
        %v1312 = vld [vmem:[#allocation14 + $0x820] sm:$0xff]
        %v1313 = vld [vmem:[#allocation14 + $0x828] sm:$0xff]
        %v1314 = vld [vmem:[#allocation14 + $0x830] sm:$0xff]
        %v1315 = vld [vmem:[#allocation14 + $0x838] sm:$0xff]
        %v1316 = vld [vmem:[#allocation14 + $0x840] sm:$0xff]
        %v1317 = vld [vmem:[#allocation14 + $0x848] sm:$0xff]
        %v1318 = vld [vmem:[#allocation14 + $0x850] sm:$0xff]
        %v1319 = vld [vmem:[#allocation14 + $0x858] sm:$0xff]
        %v1320 = vld [vmem:[#allocation14 + $0x860] sm:$0xff]
        %v1321 = vld [vmem:[#allocation14 + $0x868] sm:$0xff]
        %v1322 = vld [vmem:[#allocation14 + $0x870] sm:$0xff]
        %v1323 = vld [vmem:[#allocation14 + $0x878] sm:$0xff]
        %v1324 = vld [vmem:[#allocation14 + $0x880] sm:$0xff]
        %v1325 = vld [vmem:[#allocation14 + $0x888] sm:$0xff]
        %v1326 = vld [vmem:[#allocation14 + $0x890] sm:$0xff]
        %v1327 = vld [vmem:[#allocation14 + $0x898] sm:$0xff]
        %v1328 = vld [vmem:[#allocation14 + $0x8a0] sm:$0xff]
        %v1329 = vld [vmem:[#allocation14 + $0x8a8] sm:$0xff]
        %v1330 = vld [vmem:[#allocation14 + $0x8b0] sm:$0xff]
        %v1331 = vld [vmem:[#allocation14 + $0x8b8] sm:$0xff]
        %v1332 = vld [vmem:[#allocation14 + $0x8c0] sm:$0xff]
        %v1333 = vld [vmem:[#allocation14 + $0x8c8] sm:$0xff]
        %v1334 = vld [vmem:[#allocation14 + $0x8d0] sm:$0xff]
        %v1335 = vld [vmem:[#allocation14 + $0x8d8] sm:$0xff]
        %v1336 = vld [vmem:[#allocation14 + $0x8e0] sm:$0xff]
        %v1337 = vld [vmem:[#allocation14 + $0x8e8] sm:$0xff]
        %v1338 = vld [vmem:[#allocation14 + $0x8f0] sm:$0xff]
        %v1339 = vld [vmem:[#allocation14 + $0x8f8] sm:$0xff]
        %v1340 = vld [vmem:[#allocation14 + $0x900] sm:$0xff]
        %v1341 = vld [vmem:[#allocation14 + $0x908] sm:$0xff]
        %v1342 = vld [vmem:[#allocation14 + $0x910] sm:$0xff]
        %v1343 = vld [vmem:[#allocation14 + $0x918] sm:$0xff]
        %v1344 = vld [vmem:[#allocation14 + $0x920] sm:$0xff]
        %v1345 = vld [vmem:[#allocation14 + $0x928] sm:$0xff]
        %v1346 = vld [vmem:[#allocation14 + $0x930] sm:$0xff]
        %v1347 = vld [vmem:[#allocation14 + $0x938] sm:$0xff]
        %v1348 = vld [vmem:[#allocation14 + $0x940] sm:$0xff]
        %v1349 = vld [vmem:[#allocation14 + $0x948] sm:$0xff]
        %v1350 = vld [vmem:[#allocation14 + $0x950] sm:$0xff]
        %v1351 = vld [vmem:[#allocation14 + $0x958] sm:$0xff]
        %v1352 = vld [vmem:[#allocation14 + $0x960] sm:$0xff]
        %v1353 = vld [vmem:[#allocation14 + $0x968] sm:$0xff]
        %v1354 = vld [vmem:[#allocation14 + $0x970] sm:$0xff]
        %v1355 = vld [vmem:[#allocation14 + $0x978] sm:$0xff]
        %v1356 = vld [vmem:[#allocation14 + $0x980] sm:$0xff]
        %v1357 = vld [vmem:[#allocation14 + $0x988] sm:$0xff]
        %v1358 = vld [vmem:[#allocation14 + $0x990] sm:$0xff]
        %v1359 = vld [vmem:[#allocation14 + $0x998] sm:$0xff]
        %v1360 = vld [vmem:[#allocation14 + $0x9a0] sm:$0xff]
        %v1361 = vld [vmem:[#allocation14 + $0x9a8] sm:$0xff]
        %v1362 = vld [vmem:[#allocation14 + $0x9b0] sm:$0xff]
        %v1363 = vld [vmem:[#allocation14 + $0x9b8] sm:$0xff]
        %v1364 = vld [vmem:[#allocation14 + $0x9c0] sm:$0xff]
        %v1365 = vld [vmem:[#allocation14 + $0x9c8] sm:$0xff]
        %v1366 = vld [vmem:[#allocation14 + $0x9d0] sm:$0xff]
        %v1367 = vld [vmem:[#allocation14 + $0x9d8] sm:$0xff]
        %v1368 = vld [vmem:[#allocation14 + $0x9e0] sm:$0xff]
        %v1369 = vld [vmem:[#allocation14 + $0x9e8] sm:$0xff]
        %v1370 = vld [vmem:[#allocation14 + $0x9f0] sm:$0xff]
        %v1371 = vld [vmem:[#allocation14 + $0x9f8] sm:$0xff]
        %v1372 = vld [vmem:[#allocation14 + $0xa00] sm:$0xff]
        %v1373 = vld [vmem:[#allocation14 + $0xa08] sm:$0xff]
        %v1374 = vld [vmem:[#allocation14 + $0xa10] sm:$0xff]
        %v1375 = vld [vmem:[#allocation14 + $0xa18] sm:$0xff]
        %v1376 = vld [vmem:[#allocation14 + $0xa20] sm:$0xff]
        %v1377 = vld [vmem:[#allocation14 + $0xa28] sm:$0xff]
        %v1378 = vld [vmem:[#allocation14 + $0xa30] sm:$0xff]
        %v1379 = vld [vmem:[#allocation14 + $0xa38] sm:$0xff]
        %v1380 = vld [vmem:[#allocation14 + $0xa40] sm:$0xff]
        %v1381 = vld [vmem:[#allocation14 + $0xa48] sm:$0xff]
        %v1382 = vld [vmem:[#allocation14 + $0xa50] sm:$0xff]
        %v1383 = vld [vmem:[#allocation14 + $0xa58] sm:$0xff]
        %v1384 = vld [vmem:[#allocation14 + $0xa60] sm:$0xff]
        %v1385 = vld [vmem:[#allocation14 + $0xa68] sm:$0xff]
        %v1386 = vld [vmem:[#allocation14 + $0xa70] sm:$0xff]
        %v1387 = vld [vmem:[#allocation14 + $0xa78] sm:$0xff]
        %v1388 = vld [vmem:[#allocation14 + $0xa80] sm:$0xff]
        %v1389 = vld [vmem:[#allocation14 + $0xa88] sm:$0xff]
        %v1390 = vld [vmem:[#allocation14 + $0xa90] sm:$0xff]
        %v1391 = vld [vmem:[#allocation14 + $0xa98] sm:$0xff]
        %v1392 = vld [vmem:[#allocation14 + $0xaa0] sm:$0xff]
        %v1393 = vld [vmem:[#allocation14 + $0xaa8] sm:$0xff]
        %v1394 = vld [vmem:[#allocation14 + $0xab0] sm:$0xff]
        %v1395 = vld [vmem:[#allocation14 + $0xab8] sm:$0xff]
        %v1396 = vld [vmem:[#allocation14 + $0xac0] sm:$0xff]
        %v1397 = vld [vmem:[#allocation14 + $0xac8] sm:$0xff]
        %v1398 = vld [vmem:[#allocation14 + $0xad0] sm:$0xff]
        %v1399 = vld [vmem:[#allocation14 + $0xad8] sm:$0xff]
        %v1400 = vld [vmem:[#allocation14 + $0xae0] sm:$0xff]
        %v1401 = vld [vmem:[#allocation14 + $0xae8] sm:$0xff]
        %v1402 = vld [vmem:[#allocation14 + $0xaf0] sm:$0xff]
        %v1403 = vld [vmem:[#allocation14 + $0xaf8] sm:$0xff]
        %v1404 = vld [vmem:[#allocation14 + $0xb00] sm:$0xff]
        %v1405 = vld [vmem:[#allocation14 + $0xb08] sm:$0xff]
        %v1406 = vld [vmem:[#allocation14 + $0xb10] sm:$0xff]
        %v1407 = vld [vmem:[#allocation14 + $0xb18] sm:$0xff]
        %v1408 = vld [vmem:[#allocation14 + $0xb20] sm:$0xff]
        %v1409 = vld [vmem:[#allocation14 + $0xb28] sm:$0xff]
        %v1410 = vld [vmem:[#allocation14 + $0xb30] sm:$0xff]
        %v1411 = vld [vmem:[#allocation14 + $0xb38] sm:$0xff]
        %v1412 = vld [vmem:[#allocation14 + $0xb40] sm:$0xff]
        %v1413 = vld [vmem:[#allocation14 + $0xb48] sm:$0xff]
        %v1414 = vld [vmem:[#allocation14 + $0xb50] sm:$0xff]
        %v1415 = vld [vmem:[#allocation14 + $0xb58] sm:$0xff]
        %v1416 = vld [vmem:[#allocation14 + $0xb60] sm:$0xff]
        %v1417 = vld [vmem:[#allocation14 + $0xb68] sm:$0xff]
        %v1418 = vld [vmem:[#allocation14 + $0xb70] sm:$0xff]
        %v1419 = vld [vmem:[#allocation14 + $0xb78] sm:$0xff]
        %v1420 = vld [vmem:[#allocation14 + $0xb80] sm:$0xff]
        %v1421 = vld [vmem:[#allocation14 + $0xb88] sm:$0xff]
        %v1422 = vld [vmem:[#allocation14 + $0xb90] sm:$0xff]
        %v1423 = vld [vmem:[#allocation14 + $0xb98] sm:$0xff]
        %v1424 = vld [vmem:[#allocation14 + $0xba0] sm:$0xff]
        %v1425 = vld [vmem:[#allocation14 + $0xba8] sm:$0xff]
        %v1426 = vld [vmem:[#allocation14 + $0xbb0] sm:$0xff]
        %v1427 = vld [vmem:[#allocation14 + $0xbb8] sm:$0xff]
        %v1428 = vld [vmem:[#allocation14 + $0xbc0] sm:$0xff]
        %v1429 = vld [vmem:[#allocation14 + $0xbc8] sm:$0xff]
        %v1430 = vld [vmem:[#allocation14 + $0xbd0] sm:$0xff]
        %v1431 = vld [vmem:[#allocation14 + $0xbd8] sm:$0xff]
        %v1432 = vld [vmem:[#allocation14 + $0xbe0] sm:$0xff]
        %v1433 = vld [vmem:[#allocation14 + $0xbe8] sm:$0xff]
        %v1434 = vld [vmem:[#allocation14 + $0xbf0] sm:$0xff]
        %v1435 = vld [vmem:[#allocation14 + $0xbf8] sm:$0xff]
        %v1436 = vld [vmem:[#allocation14 + $0xc00] sm:$0xff]
        %v1437 = vld [vmem:[#allocation14 + $0xc08] sm:$0xff]
        %v1438 = vld [vmem:[#allocation14 + $0xc10] sm:$0xff]
        %v1439 = vld [vmem:[#allocation14 + $0xc18] sm:$0xff]
        %v1440 = vld [vmem:[#allocation14 + $0xc20] sm:$0xff]
        %v1441 = vld [vmem:[#allocation14 + $0xc28] sm:$0xff]
        %v1442 = vld [vmem:[#allocation14 + $0xc30] sm:$0xff]
        %v1443 = vld [vmem:[#allocation14 + $0xc38] sm:$0xff]
        %v1444 = vld [vmem:[#allocation14 + $0xc40] sm:$0xff]
        %v1445 = vld [vmem:[#allocation14 + $0xc48] sm:$0xff]
        %v1446 = vld [vmem:[#allocation14 + $0xc50] sm:$0xff]
        %v1447 = vld [vmem:[#allocation14 + $0xc58] sm:$0xff]
        %v1448 = vld [vmem:[#allocation14 + $0xc60] sm:$0xff]
        %v1449 = vld [vmem:[#allocation14 + $0xc68] sm:$0xff]
        %v1450 = vld [vmem:[#allocation14 + $0xc70] sm:$0xff]
        %v1451 = vld [vmem:[#allocation14 + $0xc78] sm:$0xff]
        %v1452 = vld [vmem:[#allocation14 + $0xc80] sm:$0xff]
        %v1453 = vld [vmem:[#allocation14 + $0xc88] sm:$0xff]
        %v1454 = vld [vmem:[#allocation14 + $0xc90] sm:$0xff]
        %v1455 = vld [vmem:[#allocation14 + $0xc98] sm:$0xff]
        %v1456 = vld [vmem:[#allocation14 + $0xca0] sm:$0xff]
        %v1457 = vld [vmem:[#allocation14 + $0xca8] sm:$0xff]
        %v1458 = vld [vmem:[#allocation14 + $0xcb0] sm:$0xff]
        %v1459 = vld [vmem:[#allocation14 + $0xcb8] sm:$0xff]
        %v1460 = vld [vmem:[#allocation14 + $0xcc0] sm:$0xff]
        %v1461 = vld [vmem:[#allocation14 + $0xcc8] sm:$0xff]
        %v1462 = vld [vmem:[#allocation14 + $0xcd0] sm:$0xff]
        %v1463 = vld [vmem:[#allocation14 + $0xcd8] sm:$0xff]
        %v1464 = vld [vmem:[#allocation14 + $0xce0] sm:$0xff]
        %v1465 = vld [vmem:[#allocation14 + $0xce8] sm:$0xff]
        %v1466 = vld [vmem:[#allocation14 + $0xcf0] sm:$0xff]
        %v1467 = vld [vmem:[#allocation14 + $0xcf8] sm:$0xff]
        %v1468 = vld [vmem:[#allocation14 + $0xd00] sm:$0xff]
        %v1469 = vld [vmem:[#allocation14 + $0xd08] sm:$0xff]
        %v1470 = vld [vmem:[#allocation14 + $0xd10] sm:$0xff]
        %v1471 = vld [vmem:[#allocation14 + $0xd18] sm:$0xff]
        %v1472 = vld [vmem:[#allocation14 + $0xd20] sm:$0xff]
        %v1473 = vld [vmem:[#allocation14 + $0xd28] sm:$0xff]
        %v1474 = vld [vmem:[#allocation14 + $0xd30] sm:$0xff]
        %v1475 = vld [vmem:[#allocation14 + $0xd38] sm:$0xff]
        %v1476 = vld [vmem:[#allocation14 + $0xd40] sm:$0xff]
        %v1477 = vld [vmem:[#allocation14 + $0xd48] sm:$0xff]
        %v1478 = vld [vmem:[#allocation14 + $0xd50] sm:$0xff]
        %v1479 = vld [vmem:[#allocation14 + $0xd58] sm:$0xff]
        %v1480 = vld [vmem:[#allocation14 + $0xd60] sm:$0xff]
        %v1481 = vld [vmem:[#allocation14 + $0xd68] sm:$0xff]
        %v1482 = vld [vmem:[#allocation14 + $0xd70] sm:$0xff]
        %v1483 = vld [vmem:[#allocation14 + $0xd78] sm:$0xff]
        %v1484 = vld [vmem:[#allocation14 + $0xd80] sm:$0xff]
        %v1485 = vld [vmem:[#allocation14 + $0xd88] sm:$0xff]
        %v1486 = vld [vmem:[#allocation14 + $0xd90] sm:$0xff]
        %v1487 = vld [vmem:[#allocation14 + $0xd98] sm:$0xff]
        %v1488 = vld [vmem:[#allocation14 + $0xda0] sm:$0xff]
        %v1489 = vld [vmem:[#allocation14 + $0xda8] sm:$0xff]
        %v1490 = vld [vmem:[#allocation14 + $0xdb0] sm:$0xff]
        %v1491 = vld [vmem:[#allocation14 + $0xdb8] sm:$0xff]
        %v1492 = vld [vmem:[#allocation14 + $0xdc0] sm:$0xff]
        %v1493 = vld [vmem:[#allocation14 + $0xdc8] sm:$0xff]
        %v1494 = vld [vmem:[#allocation14 + $0xdd0] sm:$0xff]
        %v1495 = vld [vmem:[#allocation14 + $0xdd8] sm:$0xff]
        %v1496 = vld [vmem:[#allocation14 + $0xde0] sm:$0xff]
        %v1497 = vld [vmem:[#allocation14 + $0xde8] sm:$0xff]
        %v1498 = vld [vmem:[#allocation14 + $0xdf0] sm:$0xff]
        %v1499 = vld [vmem:[#allocation14 + $0xdf8] sm:$0xff]
        %v1500 = vld [vmem:[#allocation14 + $0xe00] sm:$0xff]
        %v1501 = vld [vmem:[#allocation14 + $0xe08] sm:$0xff]
        %v1502 = vld [vmem:[#allocation14 + $0xe10] sm:$0xff]
        %v1503 = vld [vmem:[#allocation14 + $0xe18] sm:$0xff]
        %v1504 = vld [vmem:[#allocation14 + $0xe20] sm:$0xff]
        %v1505 = vld [vmem:[#allocation14 + $0xe28] sm:$0xff]
        %v1506 = vld [vmem:[#allocation14 + $0xe30] sm:$0xff]
        %v1507 = vld [vmem:[#allocation14 + $0xe38] sm:$0xff]
        %v1508 = vld [vmem:[#allocation14 + $0xe40] sm:$0xff]
        %v1509 = vld [vmem:[#allocation14 + $0xe48] sm:$0xff]
        %v1510 = vld [vmem:[#allocation14 + $0xe50] sm:$0xff]
        %v1511 = vld [vmem:[#allocation14 + $0xe58] sm:$0xff]
        %v1512 = vld [vmem:[#allocation14 + $0xe60] sm:$0xff]
        %v1513 = vld [vmem:[#allocation14 + $0xe68] sm:$0xff]
        %v1514 = vld [vmem:[#allocation14 + $0xe70] sm:$0xff]
        %v1515 = vld [vmem:[#allocation14 + $0xe78] sm:$0xff]
        %v1516 = vld [vmem:[#allocation14 + $0xe80] sm:$0xff]
        %v1517 = vld [vmem:[#allocation14 + $0xe88] sm:$0xff]
        %v1518 = vld [vmem:[#allocation14 + $0xe90] sm:$0xff]
        %v1519 = vld [vmem:[#allocation14 + $0xe98] sm:$0xff]
        %v1520 = vld [vmem:[#allocation14 + $0xea0] sm:$0xff]
        %v1521 = vld [vmem:[#allocation14 + $0xea8] sm:$0xff]
        %v1522 = vld [vmem:[#allocation14 + $0xeb0] sm:$0xff]
        %v1523 = vld [vmem:[#allocation14 + $0xeb8] sm:$0xff]
        %v1524 = vld [vmem:[#allocation14 + $0xec0] sm:$0xff]
        %v1525 = vld [vmem:[#allocation14 + $0xec8] sm:$0xff]
        %v1526 = vld [vmem:[#allocation14 + $0xed0] sm:$0xff]
        %v1527 = vld [vmem:[#allocation14 + $0xed8] sm:$0xff]
        %v1528 = vld [vmem:[#allocation14 + $0xee0] sm:$0xff]
        %v1529 = vld [vmem:[#allocation14 + $0xee8] sm:$0xff]
        %v1530 = vld [vmem:[#allocation14 + $0xef0] sm:$0xff]
        %v1531 = vld [vmem:[#allocation14 + $0xef8] sm:$0xff]
        %v1532 = vld [vmem:[#allocation14 + $0xf00] sm:$0xff]
        %v1533 = vld [vmem:[#allocation14 + $0xf08] sm:$0xff]
        %v1534 = vld [vmem:[#allocation14 + $0xf10] sm:$0xff]
        %v1535 = vld [vmem:[#allocation14 + $0xf18] sm:$0xff]
        %v1536 = vld [vmem:[#allocation14 + $0xf20] sm:$0xff]
        %v1537 = vld [vmem:[#allocation14 + $0xf28] sm:$0xff]
        %v1538 = vld [vmem:[#allocation14 + $0xf30] sm:$0xff]
        %v1539 = vld [vmem:[#allocation14 + $0xf38] sm:$0xff]
        %v1540 = vld [vmem:[#allocation14 + $0xf40] sm:$0xff]
        %v1541 = vld [vmem:[#allocation14 + $0xf48] sm:$0xff]
        %v1542 = vld [vmem:[#allocation14 + $0xf50] sm:$0xff]
        %v1543 = vld [vmem:[#allocation14 + $0xf58] sm:$0xff]
        %v1544 = vld [vmem:[#allocation14 + $0xf60] sm:$0xff]
        %v1545 = vld [vmem:[#allocation14 + $0xf68] sm:$0xff]
        %v1546 = vld [vmem:[#allocation14 + $0xf70] sm:$0xff]
        %v1547 = vld [vmem:[#allocation14 + $0xf78] sm:$0xff]
        %v1548 = vld [vmem:[#allocation14 + $0xf80] sm:$0xff]
        %v1549 = vld [vmem:[#allocation14 + $0xf88] sm:$0xff]
        %v1550 = vld [vmem:[#allocation14 + $0xf90] sm:$0xff]
        %v1551 = vld [vmem:[#allocation14 + $0xf98] sm:$0xff]
        %v1552 = vld [vmem:[#allocation14 + $0xfa0] sm:$0xff]
        %v1553 = vld [vmem:[#allocation14 + $0xfa8] sm:$0xff]
        %v1554 = vld [vmem:[#allocation14 + $0xfb0] sm:$0xff]
        %v1555 = vld [vmem:[#allocation14 + $0xfb8] sm:$0xff]
        %v1556 = vld [vmem:[#allocation14 + $0xfc0] sm:$0xff]
        %v1557 = vld [vmem:[#allocation14 + $0xfc8] sm:$0xff]
        %v1558 = vld [vmem:[#allocation14 + $0xfd0] sm:$0xff]
        %v1559 = vld [vmem:[#allocation14 + $0xfd8] sm:$0xff]
        %v1560 = vld [vmem:[#allocation14 + $0xfe0] sm:$0xff]
        %v1561 = vld [vmem:[#allocation14 + $0xfe8] sm:$0xff]
        %v1562 = vld [vmem:[#allocation14 + $0xff0] sm:$0xff]
        %v1563 = vld [vmem:[#allocation14 + $0xff8] sm:$0xff]
        %v1564 = vld [vmem:[#allocation16] sm:$0xff]
        %v1566 = vlaneseq
        %v1567 = vshrl.u32 %v1566, 7
        %v1568 = vsub.s32 0, %v1567
        %v1569 = vrot.slane %v1564, %v1568
        %v1570 = vlaneseq
        %v1571 = vshrl.u32 %v1570, 7
        %v1572 = vsub.s32 1, %v1571
        %v1573 = vrot.slane %v1564, %v1572
        %v1574 = vlaneseq
        %v1575 = vshrl.u32 %v1574, 7
        %v1576 = vsub.s32 2, %v1575
        %v1577 = vrot.slane %v1564, %v1576
        %v1578 = vlaneseq
        %v1579 = vshrl.u32 %v1578, 7
        %v1580 = vsub.s32 3, %v1579
        %v1581 = vrot.slane %v1564, %v1580
        %v1582 = vlaneseq
        %v1583 = vshrl.u32 %v1582, 7
        %v1584 = vsub.s32 4, %v1583
        %v1585 = vrot.slane %v1564, %v1584
        %v1586 = vlaneseq
        %v1587 = vshrl.u32 %v1586, 7
        %v1588 = vsub.s32 5, %v1587
        %v1589 = vrot.slane %v1564, %v1588
        %v1590 = vlaneseq
        %v1591 = vshrl.u32 %v1590, 7
        %v1592 = vsub.s32 6, %v1591
        %v1593 = vrot.slane %v1564, %v1592
        %v1594 = vlaneseq
        %v1595 = vshrl.u32 %v1594, 7
        %v1596 = vsub.s32 7, %v1595
        %v1597 = vrot.slane %v1564, %v1596
        %1606 = vmatprep.subr.mxu0 %v1053
        %1607 = vmatpush1.msra.mxu0 %v1052
        %1608 = vmatprep.subr.mxu0 %v1061
        %1609 = vmatpush1.msra.mxu0 %v1060
        %1610 = vmatprep.subr.mxu0 %v1069
        %1611 = vmatpush1.msra.mxu0 %v1068
        %1612 = vmatprep.subr.mxu0 %v1077
        %1613 = vmatpush1.msra.mxu0 %v1076
        %1614 = vmatprep.subr.mxu0 %v1085
        %1615 = vmatpush1.msra.mxu0 %v1084
        %1616 = vmatprep.subr.mxu0 %v1093
        %1617 = vmatpush1.msra.mxu0 %v1092
        %1618 = vmatprep.subr.mxu0 %v1101
        %1619 = vmatpush1.msra.mxu0 %v1100
        %1620 = vmatprep.subr.mxu0 %v1109
        %1621 = vmatpush1.msra.mxu0 %v1108
        %1622 = vmatprep.subr.mxu0 %v1117
        %1623 = vmatpush1.msra.mxu0 %v1116
        %1624 = vmatprep.subr.mxu0 %v1125
        %1625 = vmatpush1.msra.mxu0 %v1124
        %1626 = vmatprep.subr.mxu0 %v1133
        %1627 = vmatpush1.msra.mxu0 %v1132
        %1628 = vmatprep.subr.mxu0 %v1141
        %1629 = vmatpush1.msra.mxu0 %v1140
        %1630 = vmatprep.subr.mxu0 %v1149
        %1631 = vmatpush1.msra.mxu0 %v1148
        %1632 = vmatprep.subr.mxu0 %v1157
        %1633 = vmatpush1.msra.mxu0 %v1156
        %1634 = vmatprep.subr.mxu0 %v1165
        %1635 = vmatpush1.msra.mxu0 %v1164
        %1636 = vmatprep.subr.mxu0 %v1173
        %1637 = vmatpush1.msra.mxu0 %v1172
        %1638 = vmatprep.subr.mxu0 %v1181
        %1639 = vmatpush1.msra.mxu0 %v1180
        %1640 = vmatprep.subr.mxu0 %v1189
        %1641 = vmatpush1.msra.mxu0 %v1188
        %1642 = vmatprep.subr.mxu0 %v1197
        %1643 = vmatpush1.msra.mxu0 %v1196
        %1644 = vmatprep.subr.mxu0 %v1205
        %1645 = vmatpush1.msra.mxu0 %v1204
        %1646 = vmatprep.subr.mxu0 %v1213
        %1647 = vmatpush1.msra.mxu0 %v1212
        %1648 = vmatprep.subr.mxu0 %v1221
        %1649 = vmatpush1.msra.mxu0 %v1220
        %1650 = vmatprep.subr.mxu0 %v1229
        %1651 = vmatpush1.msra.mxu0 %v1228
        %1652 = vmatprep.subr.mxu0 %v1237
        %1653 = vmatpush1.msra.mxu0 %v1236
        %1654 = vmatprep.subr.mxu0 %v1245
        %1655 = vmatpush1.msra.mxu0 %v1244
        %1656 = vmatprep.subr.mxu0 %v1253
        %1657 = vmatpush1.msra.mxu0 %v1252
        %1658 = vmatprep.subr.mxu0 %v1261
        %1659 = vmatpush1.msra.mxu0 %v1260
        %1660 = vmatprep.subr.mxu0 %v1269
        %1661 = vmatpush1.msra.mxu0 %v1268
        %1662 = vmatprep.subr.mxu0 %v1277
        %1663 = vmatpush1.msra.mxu0 %v1276
        %1664 = vmatprep.subr.mxu0 %v1285
        %1665 = vmatpush1.msra.mxu0 %v1284
        %1666 = vmatprep.subr.mxu0 %v1293
        %1667 = vmatpush1.msra.mxu0 %v1292
        %1668 = vmatprep.subr.mxu0 %v1301
        %1669 = vmatpush1.msra.mxu0 %v1300
        %1670 = vmatprep.mubr.f32.mxu0 %v1049
        %1671 = vmatmul.mubr.f32.gmra.mrb[0].mxu0 %v1048
        %v1672 = vpop.f32.mrb[0].mxu0
        %v1673 = vadd.f32 %v1569, %v1672
        %v1674 = vpop.f32.mrb[0].mxu0
        %v1675 = vadd.f32 %v1573, %v1674
        %1676 = vdwg.mxu0
        %1677 = vmatprep.subr.mxu0 %v1309
        %1678 = vmatpush1.msra.mxu0 %v1308
        %1679 = vmatprep.subr.mxu0 %v1317
        %1680 = vmatpush1.msra.mxu0 %v1316
        %1681 = vmatprep.subr.mxu0 %v1325
        %1682 = vmatpush1.msra.mxu0 %v1324
        %1683 = vmatprep.subr.mxu0 %v1333
        %1684 = vmatpush1.msra.mxu0 %v1332
        %1685 = vmatprep.subr.mxu0 %v1341
        %1686 = vmatpush1.msra.mxu0 %v1340
        %1687 = vmatprep.subr.mxu0 %v1349
        %1688 = vmatpush1.msra.mxu0 %v1348
        %1689 = vmatprep.subr.mxu0 %v1357
        %1690 = vmatpush1.msra.mxu0 %v1356
        %1691 = vmatprep.subr.mxu0 %v1365
        %1692 = vmatpush1.msra.mxu0 %v1364
        %1693 = vmatprep.subr.mxu0 %v1373
        %1694 = vmatpush1.msra.mxu0 %v1372
        %1695 = vmatprep.subr.mxu0 %v1381
        %1696 = vmatpush1.msra.mxu0 %v1380
        %1697 = vmatprep.subr.mxu0 %v1389
        %1698 = vmatpush1.msra.mxu0 %v1388
        %1699 = vmatprep.subr.mxu0 %v1397
        %1700 = vmatpush1.msra.mxu0 %v1396
        %1701 = vmatprep.subr.mxu0 %v1405
        %1702 = vmatpush1.msra.mxu0 %v1404
        %1703 = vmatprep.subr.mxu0 %v1413
        %1704 = vmatpush1.msra.mxu0 %v1412
        %1705 = vmatprep.subr.mxu0 %v1421
        %1706 = vmatpush1.msra.mxu0 %v1420
        %1707 = vmatprep.subr.mxu0 %v1429
        %1708 = vmatpush1.msra.mxu0 %v1428
        %1709 = vmatprep.subr.mxu0 %v1437
        %1710 = vmatpush1.msra.mxu0 %v1436
        %1711 = vmatprep.subr.mxu0 %v1445
        %1712 = vmatpush1.msra.mxu0 %v1444
        %1713 = vmatprep.subr.mxu0 %v1453
        %1714 = vmatpush1.msra.mxu0 %v1452
        %1715 = vmatprep.subr.mxu0 %v1461
        %1716 = vmatpush1.msra.mxu0 %v1460
        %1717 = vmatprep.subr.mxu0 %v1469
        %1718 = vmatpush1.msra.mxu0 %v1468
        %1719 = vmatprep.subr.mxu0 %v1477
        %1720 = vmatpush1.msra.mxu0 %v1476
        %1721 = vmatprep.subr.mxu0 %v1485
        %1722 = vmatpush1.msra.mxu0 %v1484
        %1723 = vmatprep.subr.mxu0 %v1493
        %1724 = vmatpush1.msra.mxu0 %v1492
        %1725 = vmatprep.subr.mxu0 %v1501
        %1726 = vmatpush1.msra.mxu0 %v1500
        %1727 = vmatprep.subr.mxu0 %v1509
        %1728 = vmatpush1.msra.mxu0 %v1508
        %1729 = vmatprep.subr.mxu0 %v1517
        %1730 = vmatpush1.msra.mxu0 %v1516
        %1731 = vmatprep.subr.mxu0 %v1525
        %1732 = vmatpush1.msra.mxu0 %v1524
        %1733 = vmatprep.subr.mxu0 %v1533
        %1734 = vmatpush1.msra.mxu0 %v1532
        %1735 = vmatprep.subr.mxu0 %v1541
        %1736 = vmatpush1.msra.mxu0 %v1540
        %1737 = vmatprep.subr.mxu0 %v1549
        %1738 = vmatpush1.msra.mxu0 %v1548
        %1739 = vmatprep.subr.mxu0 %v1557
        %1740 = vmatpush1.msra.mxu0 %v1556
        %1741 = vmatprep.mubr.f32.mxu0 %v1051
        %1742 = vmatmul.mubr.f32.gmra.mrb[0].mxu0 %v1050
        %v1743 = vpop.f32.mrb[0].mxu0
        %v1744 = vadd.f32 %v1673, %v1743
        %v1745 = vpop.f32.mrb[0].mxu0
        %v1746 = vadd.f32 %v1675, %v1745
        %1747 = vdwg.mxu0
        %1748 = vmatprep.subr.mxu0 %v1055
        %1749 = vmatpush1.msra.mxu0 %v1054
        %1750 = vmatprep.subr.mxu0 %v1063
        %1751 = vmatpush1.msra.mxu0 %v1062
        %1752 = vmatprep.subr.mxu0 %v1071
        %1753 = vmatpush1.msra.mxu0 %v1070
        %1754 = vmatprep.subr.mxu0 %v1079
        %1755 = vmatpush1.msra.mxu0 %v1078
        %1756 = vmatprep.subr.mxu0 %v1087
        %1757 = vmatpush1.msra.mxu0 %v1086
        %1758 = vmatprep.subr.mxu0 %v1095
        %1759 = vmatpush1.msra.mxu0 %v1094
        %1760 = vmatprep.subr.mxu0 %v1103
        %1761 = vmatpush1.msra.mxu0 %v1102
        %1762 = vmatprep.subr.mxu0 %v1111
        %1763 = vmatpush1.msra.mxu0 %v1110
        %1764 = vmatprep.subr.mxu0 %v1119
        %1765 = vmatpush1.msra.mxu0 %v1118
        %1766 = vmatprep.subr.mxu0 %v1127
        %1767 = vmatpush1.msra.mxu0 %v1126
        %1768 = vmatprep.subr.mxu0 %v1135
        %1769 = vmatpush1.msra.mxu0 %v1134
        %1770 = vmatprep.subr.mxu0 %v1143
        %1771 = vmatpush1.msra.mxu0 %v1142
        %1772 = vmatprep.subr.mxu0 %v1151
        %1773 = vmatpush1.msra.mxu0 %v1150
        %1774 = vmatprep.subr.mxu0 %v1159
        %1775 = vmatpush1.msra.mxu0 %v1158
        %1776 = vmatprep.subr.mxu0 %v1167
        %1777 = vmatpush1.msra.mxu0 %v1166
        %1778 = vmatprep.subr.mxu0 %v1175
        %1779 = vmatpush1.msra.mxu0 %v1174
        %1780 = vmatprep.subr.mxu0 %v1183
        %1781 = vmatpush1.msra.mxu0 %v1182
        %1782 = vmatprep.subr.mxu0 %v1191
        %1783 = vmatpush1.msra.mxu0 %v1190
        %1784 = vmatprep.subr.mxu0 %v1199
        %1785 = vmatpush1.msra.mxu0 %v1198
        %1786 = vmatprep.subr.mxu0 %v1207
        %1787 = vmatpush1.msra.mxu0 %v1206
        %1788 = vmatprep.subr.mxu0 %v1215
        %1789 = vmatpush1.msra.mxu0 %v1214
        %1790 = vmatprep.subr.mxu0 %v1223
        %1791 = vmatpush1.msra.mxu0 %v1222
        %1792 = vmatprep.subr.mxu0 %v1231
        %1793 = vmatpush1.msra.mxu0 %v1230
        %1794 = vmatprep.subr.mxu0 %v1239
        %1795 = vmatpush1.msra.mxu0 %v1238
        %1796 = vmatprep.subr.mxu0 %v1247
        %1797 = vmatpush1.msra.mxu0 %v1246
        %1798 = vmatprep.subr.mxu0 %v1255
        %1799 = vmatpush1.msra.mxu0 %v1254
        %1800 = vmatprep.subr.mxu0 %v1263
        %1801 = vmatpush1.msra.mxu0 %v1262
        %1802 = vmatprep.subr.mxu0 %v1271
        %1803 = vmatpush1.msra.mxu0 %v1270
        %1804 = vmatprep.subr.mxu0 %v1279
        %1805 = vmatpush1.msra.mxu0 %v1278
        %1806 = vmatprep.subr.mxu0 %v1287
        %1807 = vmatpush1.msra.mxu0 %v1286
        %1808 = vmatprep.subr.mxu0 %v1295
        %1809 = vmatpush1.msra.mxu0 %v1294
        %1810 = vmatprep.subr.mxu0 %v1303
        %1811 = vmatpush1.msra.mxu0 %v1302
        %1812 = vmatprep.mubr.f32.mxu0 %v1049
        %1813 = vmatmul.mubr.f32.gmra.mrb[0].mxu0 %v1048
        %v1814 = vpop.f32.mrb[0].mxu0
        %v1815 = vadd.f32 %v1577, %v1814
        %v1816 = vpop.f32.mrb[0].mxu0
        %v1817 = vadd.f32 %v1581, %v1816
        %1818 = vdwg.mxu0
        %1819 = vmatprep.subr.mxu0 %v1311
        %1820 = vmatpush1.msra.mxu0 %v1310
        %1821 = vmatprep.subr.mxu0 %v1319
        %1822 = vmatpush1.msra.mxu0 %v1318
        %1823 = vmatprep.subr.mxu0 %v1327
        %1824 = vmatpush1.msra.mxu0 %v1326
        %1825 = vmatprep.subr.mxu0 %v1335
        %1826 = vmatpush1.msra.mxu0 %v1334
        %1827 = vmatprep.subr.mxu0 %v1343
        %1828 = vmatpush1.msra.mxu0 %v1342
        %1829 = vmatprep.subr.mxu0 %v1351
        %1830 = vmatpush1.msra.mxu0 %v1350
        %1831 = vmatprep.subr.mxu0 %v1359
        %1832 = vmatpush1.msra.mxu0 %v1358
        %1833 = vmatprep.subr.mxu0 %v1367
        %1834 = vmatpush1.msra.mxu0 %v1366
        %1835 = vmatprep.subr.mxu0 %v1375
        %1836 = vmatpush1.msra.mxu0 %v1374
        %1837 = vmatprep.subr.mxu0 %v1383
        %1838 = vmatpush1.msra.mxu0 %v1382
        %1839 = vmatprep.subr.mxu0 %v1391
        %1840 = vmatpush1.msra.mxu0 %v1390
        %1841 = vmatprep.subr.mxu0 %v1399
        %1842 = vmatpush1.msra.mxu0 %v1398
        %1843 = vmatprep.subr.mxu0 %v1407
        %1844 = vmatpush1.msra.mxu0 %v1406
        %1845 = vmatprep.subr.mxu0 %v1415
        %1846 = vmatpush1.msra.mxu0 %v1414
        %1847 = vmatprep.subr.mxu0 %v1423
        %1848 = vmatpush1.msra.mxu0 %v1422
        %1849 = vmatprep.subr.mxu0 %v1431
        %1850 = vmatpush1.msra.mxu0 %v1430
        %1851 = vmatprep.subr.mxu0 %v1439
        %1852 = vmatpush1.msra.mxu0 %v1438
        %1853 = vmatprep.subr.mxu0 %v1447
        %1854 = vmatpush1.msra.mxu0 %v1446
        %1855 = vmatprep.subr.mxu0 %v1455
        %1856 = vmatpush1.msra.mxu0 %v1454
        %1857 = vmatprep.subr.mxu0 %v1463
        %1858 = vmatpush1.msra.mxu0 %v1462
        %1859 = vmatprep.subr.mxu0 %v1471
        %1860 = vmatpush1.msra.mxu0 %v1470
        %1861 = vmatprep.subr.mxu0 %v1479
        %1862 = vmatpush1.msra.mxu0 %v1478
        %1863 = vmatprep.subr.mxu0 %v1487
        %1864 = vmatpush1.msra.mxu0 %v1486
        %1865 = vmatprep.subr.mxu0 %v1495
        %1866 = vmatpush1.msra.mxu0 %v1494
        %1867 = vmatprep.subr.mxu0 %v1503
        %1868 = vmatpush1.msra.mxu0 %v1502
        %1869 = vmatprep.subr.mxu0 %v1511
        %1870 = vmatpush1.msra.mxu0 %v1510
        %1871 = vmatprep.subr.mxu0 %v1519
        %1872 = vmatpush1.msra.mxu0 %v1518
        %1873 = vmatprep.subr.mxu0 %v1527
        %1874 = vmatpush1.msra.mxu0 %v1526
        %1875 = vmatprep.subr.mxu0 %v1535
        %1876 = vmatpush1.msra.mxu0 %v1534
        %1877 = vmatprep.subr.mxu0 %v1543
        %1878 = vmatpush1.msra.mxu0 %v1542
        %1879 = vmatprep.subr.mxu0 %v1551
        %1880 = vmatpush1.msra.mxu0 %v1550
        %1881 = vmatprep.subr.mxu0 %v1559
        %1882 = vmatpush1.msra.mxu0 %v1558
        %1883 = vmatprep.mubr.f32.mxu0 %v1051
        %1884 = vmatmul.mubr.f32.gmra.mrb[0].mxu0 %v1050
        %v1885 = vpop.f32.mrb[0].mxu0
        %v1886 = vadd.f32 %v1815, %v1885
        %v1887 = vpop.f32.mrb[0].mxu0
        %v1888 = vadd.f32 %v1817, %v1887
        %1889 = vdwg.mxu0
        %1890 = vmatprep.subr.mxu0 %v1057
        %1891 = vmatpush1.msra.mxu0 %v1056
        %1892 = vmatprep.subr.mxu0 %v1065
        %1893 = vmatpush1.msra.mxu0 %v1064
        %1894 = vmatprep.subr.mxu0 %v1073
        %1895 = vmatpush1.msra.mxu0 %v1072
        %1896 = vmatprep.subr.mxu0 %v1081
        %1897 = vmatpush1.msra.mxu0 %v1080
        %1898 = vmatprep.subr.mxu0 %v1089
        %1899 = vmatpush1.msra.mxu0 %v1088
        %1900 = vmatprep.subr.mxu0 %v1097
        %1901 = vmatpush1.msra.mxu0 %v1096
        %1902 = vmatprep.subr.mxu0 %v1105
        %1903 = vmatpush1.msra.mxu0 %v1104
        %1904 = vmatprep.subr.mxu0 %v1113
        %1905 = vmatpush1.msra.mxu0 %v1112
        %1906 = vmatprep.subr.mxu0 %v1121
        %1907 = vmatpush1.msra.mxu0 %v1120
        %1908 = vmatprep.subr.mxu0 %v1129
        %1909 = vmatpush1.msra.mxu0 %v1128
        %1910 = vmatprep.subr.mxu0 %v1137
        %1911 = vmatpush1.msra.mxu0 %v1136
        %1912 = vmatprep.subr.mxu0 %v1145
        %1913 = vmatpush1.msra.mxu0 %v1144
        %1914 = vmatprep.subr.mxu0 %v1153
        %1915 = vmatpush1.msra.mxu0 %v1152
        %1916 = vmatprep.subr.mxu0 %v1161
        %1917 = vmatpush1.msra.mxu0 %v1160
        %1918 = vmatprep.subr.mxu0 %v1169
        %1919 = vmatpush1.msra.mxu0 %v1168
        %1920 = vmatprep.subr.mxu0 %v1177
        %1921 = vmatpush1.msra.mxu0 %v1176
        %1922 = vmatprep.subr.mxu0 %v1185
        %1923 = vmatpush1.msra.mxu0 %v1184
        %1924 = vmatprep.subr.mxu0 %v1193
        %1925 = vmatpush1.msra.mxu0 %v1192
        %1926 = vmatprep.subr.mxu0 %v1201
        %1927 = vmatpush1.msra.mxu0 %v1200
        %1928 = vmatprep.subr.mxu0 %v1209
        %1929 = vmatpush1.msra.mxu0 %v1208
        %1930 = vmatprep.subr.mxu0 %v1217
        %1931 = vmatpush1.msra.mxu0 %v1216
        %1932 = vmatprep.subr.mxu0 %v1225
        %1933 = vmatpush1.msra.mxu0 %v1224
        %1934 = vmatprep.subr.mxu0 %v1233
        %1935 = vmatpush1.msra.mxu0 %v1232
        %1936 = vmatprep.subr.mxu0 %v1241
        %1937 = vmatpush1.msra.mxu0 %v1240
        %1938 = vmatprep.subr.mxu0 %v1249
        %1939 = vmatpush1.msra.mxu0 %v1248
        %1940 = vmatprep.subr.mxu0 %v1257
        %1941 = vmatpush1.msra.mxu0 %v1256
        %1942 = vmatprep.subr.mxu0 %v1265
        %1943 = vmatpush1.msra.mxu0 %v1264
        %1944 = vmatprep.subr.mxu0 %v1273
        %1945 = vmatpush1.msra.mxu0 %v1272
        %1946 = vmatprep.subr.mxu0 %v1281
        %1947 = vmatpush1.msra.mxu0 %v1280
        %1948 = vmatprep.subr.mxu0 %v1289
        %1949 = vmatpush1.msra.mxu0 %v1288
        %1950 = vmatprep.subr.mxu0 %v1297
        %1951 = vmatpush1.msra.mxu0 %v1296
        %1952 = vmatprep.subr.mxu0 %v1305
        %1953 = vmatpush1.msra.mxu0 %v1304
        %1954 = vmatprep.mubr.f32.mxu0 %v1049
        %1955 = vmatmul.mubr.f32.gmra.mrb[0].mxu0 %v1048
        %v1956 = vpop.f32.mrb[0].mxu0
        %v1957 = vadd.f32 %v1585, %v1956
        %v1958 = vpop.f32.mrb[0].mxu0
        %v1959 = vadd.f32 %v1589, %v1958
        %1960 = vdwg.mxu0
        %1961 = vmatprep.subr.mxu0 %v1313
        %1962 = vmatpush1.msra.mxu0 %v1312
        %1963 = vmatprep.subr.mxu0 %v1321
        %1964 = vmatpush1.msra.mxu0 %v1320
        %1965 = vmatprep.subr.mxu0 %v1329
        %1966 = vmatpush1.msra.mxu0 %v1328
        %1967 = vmatprep.subr.mxu0 %v1337
        %1968 = vmatpush1.msra.mxu0 %v1336
        %1969 = vmatprep.subr.mxu0 %v1345
        %1970 = vmatpush1.msra.mxu0 %v1344
        %1971 = vmatprep.subr.mxu0 %v1353
        %1972 = vmatpush1.msra.mxu0 %v1352
        %1973 = vmatprep.subr.mxu0 %v1361
        %1974 = vmatpush1.msra.mxu0 %v1360
        %1975 = vmatprep.subr.mxu0 %v1369
        %1976 = vmatpush1.msra.mxu0 %v1368
        %1977 = vmatprep.subr.mxu0 %v1377
        %1978 = vmatpush1.msra.mxu0 %v1376
        %1979 = vmatprep.subr.mxu0 %v1385
        %1980 = vmatpush1.msra.mxu0 %v1384
        %1981 = vmatprep.subr.mxu0 %v1393
        %1982 = vmatpush1.msra.mxu0 %v1392
        %1983 = vmatprep.subr.mxu0 %v1401
        %1984 = vmatpush1.msra.mxu0 %v1400
        %1985 = vmatprep.subr.mxu0 %v1409
        %1986 = vmatpush1.msra.mxu0 %v1408
        %1987 = vmatprep.subr.mxu0 %v1417
        %1988 = vmatpush1.msra.mxu0 %v1416
        %1989 = vmatprep.subr.mxu0 %v1425
        %1990 = vmatpush1.msra.mxu0 %v1424
        %1991 = vmatprep.subr.mxu0 %v1433
        %1992 = vmatpush1.msra.mxu0 %v1432
        %1993 = vmatprep.subr.mxu0 %v1441
        %1994 = vmatpush1.msra.mxu0 %v1440
        %1995 = vmatprep.subr.mxu0 %v1449
        %1996 = vmatpush1.msra.mxu0 %v1448
        %1997 = vmatprep.subr.mxu0 %v1457
        %1998 = vmatpush1.msra.mxu0 %v1456
        %1999 = vmatprep.subr.mxu0 %v1465
        %2000 = vmatpush1.msra.mxu0 %v1464
        %2001 = vmatprep.subr.mxu0 %v1473
        %2002 = vmatpush1.msra.mxu0 %v1472
        %2003 = vmatprep.subr.mxu0 %v1481
        %2004 = vmatpush1.msra.mxu0 %v1480
        %2005 = vmatprep.subr.mxu0 %v1489
        %2006 = vmatpush1.msra.mxu0 %v1488
        %2007 = vmatprep.subr.mxu0 %v1497
        %2008 = vmatpush1.msra.mxu0 %v1496
        %2009 = vmatprep.subr.mxu0 %v1505
        %2010 = vmatpush1.msra.mxu0 %v1504
        %2011 = vmatprep.subr.mxu0 %v1513
        %2012 = vmatpush1.msra.mxu0 %v1512
        %2013 = vmatprep.subr.mxu0 %v1521
        %2014 = vmatpush1.msra.mxu0 %v1520
        %2015 = vmatprep.subr.mxu0 %v1529
        %2016 = vmatpush1.msra.mxu0 %v1528
        %2017 = vmatprep.subr.mxu0 %v1537
        %2018 = vmatpush1.msra.mxu0 %v1536
        %2019 = vmatprep.subr.mxu0 %v1545
        %2020 = vmatpush1.msra.mxu0 %v1544
        %2021 = vmatprep.subr.mxu0 %v1553
        %2022 = vmatpush1.msra.mxu0 %v1552
        %2023 = vmatprep.subr.mxu0 %v1561
        %2024 = vmatpush1.msra.mxu0 %v1560
        %2025 = vmatprep.mubr.f32.mxu0 %v1051
        %2026 = vmatmul.mubr.f32.gmra.mrb[0].mxu0 %v1050
        %v2027 = vpop.f32.mrb[0].mxu0
        %v2028 = vadd.f32 %v1957, %v2027
        %v2029 = vpop.f32.mrb[0].mxu0
        %v2030 = vadd.f32 %v1959, %v2029
        %2031 = vdwg.mxu0
        %2032 = vmatprep.subr.mxu0 %v1059
        %2033 = vmatpush1.msra.mxu0 %v1058
        %2034 = vmatprep.subr.mxu0 %v1067
        %2035 = vmatpush1.msra.mxu0 %v1066
        %2036 = vmatprep.subr.mxu0 %v1075
        %2037 = vmatpush1.msra.mxu0 %v1074
        %2038 = vmatprep.subr.mxu0 %v1083
        %2039 = vmatpush1.msra.mxu0 %v1082
        %2040 = vmatprep.subr.mxu0 %v1091
        %2041 = vmatpush1.msra.mxu0 %v1090
        %2042 = vmatprep.subr.mxu0 %v1099
        %2043 = vmatpush1.msra.mxu0 %v1098
        %2044 = vmatprep.subr.mxu0 %v1107
        %2045 = vmatpush1.msra.mxu0 %v1106
        %2046 = vmatprep.subr.mxu0 %v1115
        %2047 = vmatpush1.msra.mxu0 %v1114
        %2048 = vmatprep.subr.mxu0 %v1123
        %2049 = vmatpush1.msra.mxu0 %v1122
        %2050 = vmatprep.subr.mxu0 %v1131
        %2051 = vmatpush1.msra.mxu0 %v1130
        %2052 = vmatprep.subr.mxu0 %v1139
        %2053 = vmatpush1.msra.mxu0 %v1138
        %2054 = vmatprep.subr.mxu0 %v1147
        %2055 = vmatpush1.msra.mxu0 %v1146
        %2056 = vmatprep.subr.mxu0 %v1155
        %2057 = vmatpush1.msra.mxu0 %v1154
        %2058 = vmatprep.subr.mxu0 %v1163
        %2059 = vmatpush1.msra.mxu0 %v1162
        %2060 = vmatprep.subr.mxu0 %v1171
        %2061 = vmatpush1.msra.mxu0 %v1170
        %2062 = vmatprep.subr.mxu0 %v1179
        %2063 = vmatpush1.msra.mxu0 %v1178
        %2064 = vmatprep.subr.mxu0 %v1187
        %2065 = vmatpush1.msra.mxu0 %v1186
        %2066 = vmatprep.subr.mxu0 %v1195
        %2067 = vmatpush1.msra.mxu0 %v1194
        %2068 = vmatprep.subr.mxu0 %v1203
        %2069 = vmatpush1.msra.mxu0 %v1202
        %2070 = vmatprep.subr.mxu0 %v1211
        %2071 = vmatpush1.msra.mxu0 %v1210
        %2072 = vmatprep.subr.mxu0 %v1219
        %2073 = vmatpush1.msra.mxu0 %v1218
        %2074 = vmatprep.subr.mxu0 %v1227
        %2075 = vmatpush1.msra.mxu0 %v1226
        %2076 = vmatprep.subr.mxu0 %v1235
        %2077 = vmatpush1.msra.mxu0 %v1234
        %2078 = vmatprep.subr.mxu0 %v1243
        %2079 = vmatpush1.msra.mxu0 %v1242
        %2080 = vmatprep.subr.mxu0 %v1251
        %2081 = vmatpush1.msra.mxu0 %v1250
        %2082 = vmatprep.subr.mxu0 %v1259
        %2083 = vmatpush1.msra.mxu0 %v1258
        %2084 = vmatprep.subr.mxu0 %v1267
        %2085 = vmatpush1.msra.mxu0 %v1266
        %2086 = vmatprep.subr.mxu0 %v1275
        %2087 = vmatpush1.msra.mxu0 %v1274
        %2088 = vmatprep.subr.mxu0 %v1283
        %2089 = vmatpush1.msra.mxu0 %v1282
        %2090 = vmatprep.subr.mxu0 %v1291
        %2091 = vmatpush1.msra.mxu0 %v1290
        %2092 = vmatprep.subr.mxu0 %v1299
        %2093 = vmatpush1.msra.mxu0 %v1298
        %2094 = vmatprep.subr.mxu0 %v1307
        %2095 = vmatpush1.msra.mxu0 %v1306
        %2096 = vmatprep.mubr.f32.mxu0 %v1049
        %2097 = vmatmul.mubr.f32.gmra.mrb[0].mxu0 %v1048
        %v2098 = vpop.f32.mrb[0].mxu0
        %v2099 = vadd.f32 %v1593, %v2098
        %v2100 = vpop.f32.mrb[0].mxu0
        %v2101 = vadd.f32 %v1597, %v2100
        %2102 = vdwg.mxu0
        %2103 = vmatprep.subr.mxu0 %v1315
        %2104 = vmatpush1.msra.mxu0 %v1314
        %2105 = vmatprep.subr.mxu0 %v1323
        %2106 = vmatpush1.msra.mxu0 %v1322
        %2107 = vmatprep.subr.mxu0 %v1331
        %2108 = vmatpush1.msra.mxu0 %v1330
        %2109 = vmatprep.subr.mxu0 %v1339
        %2110 = vmatpush1.msra.mxu0 %v1338
        %2111 = vmatprep.subr.mxu0 %v1347
        %2112 = vmatpush1.msra.mxu0 %v1346
        %2113 = vmatprep.subr.mxu0 %v1355
        %2114 = vmatpush1.msra.mxu0 %v1354
        %2115 = vmatprep.subr.mxu0 %v1363
        %2116 = vmatpush1.msra.mxu0 %v1362
        %2117 = vmatprep.subr.mxu0 %v1371
        %2118 = vmatpush1.msra.mxu0 %v1370
        %2119 = vmatprep.subr.mxu0 %v1379
        %2120 = vmatpush1.msra.mxu0 %v1378
        %2121 = vmatprep.subr.mxu0 %v1387
        %2122 = vmatpush1.msra.mxu0 %v1386
        %2123 = vmatprep.subr.mxu0 %v1395
        %2124 = vmatpush1.msra.mxu0 %v1394
        %2125 = vmatprep.subr.mxu0 %v1403
        %2126 = vmatpush1.msra.mxu0 %v1402
        %2127 = vmatprep.subr.mxu0 %v1411
        %2128 = vmatpush1.msra.mxu0 %v1410
        %2129 = vmatprep.subr.mxu0 %v1419
        %2130 = vmatpush1.msra.mxu0 %v1418
        %2131 = vmatprep.subr.mxu0 %v1427
        %2132 = vmatpush1.msra.mxu0 %v1426
        %2133 = vmatprep.subr.mxu0 %v1435
        %2134 = vmatpush1.msra.mxu0 %v1434
        %2135 = vmatprep.subr.mxu0 %v1443
        %2136 = vmatpush1.msra.mxu0 %v1442
        %2137 = vmatprep.subr.mxu0 %v1451
        %2138 = vmatpush1.msra.mxu0 %v1450
        %2139 = vmatprep.subr.mxu0 %v1459
        %2140 = vmatpush1.msra.mxu0 %v1458
        %2141 = vmatprep.subr.mxu0 %v1467
        %2142 = vmatpush1.msra.mxu0 %v1466
        %2143 = vmatprep.subr.mxu0 %v1475
        %2144 = vmatpush1.msra.mxu0 %v1474
        %2145 = vmatprep.subr.mxu0 %v1483
        %2146 = vmatpush1.msra.mxu0 %v1482
        %2147 = vmatprep.subr.mxu0 %v1491
        %2148 = vmatpush1.msra.mxu0 %v1490
        %2149 = vmatprep.subr.mxu0 %v1499
        %2150 = vmatpush1.msra.mxu0 %v1498
        %2151 = vmatprep.subr.mxu0 %v1507
        %2152 = vmatpush1.msra.mxu0 %v1506
        %2153 = vmatprep.subr.mxu0 %v1515
        %2154 = vmatpush1.msra.mxu0 %v1514
        %2155 = vmatprep.subr.mxu0 %v1523
        %2156 = vmatpush1.msra.mxu0 %v1522
        %2157 = vmatprep.subr.mxu0 %v1531
        %2158 = vmatpush1.msra.mxu0 %v1530
        %2159 = vmatprep.subr.mxu0 %v1539
        %2160 = vmatpush1.msra.mxu0 %v1538
        %2161 = vmatprep.subr.mxu0 %v1547
        %2162 = vmatpush1.msra.mxu0 %v1546
        %2163 = vmatprep.subr.mxu0 %v1555
        %2164 = vmatpush1.msra.mxu0 %v1554
        %2165 = vmatprep.subr.mxu0 %v1563
        %2166 = vmatpush1.msra.mxu0 %v1562
        %2167 = vmatprep.mubr.f32.mxu0 %v1051
        %2168 = vmatmul.mubr.f32.gmra.mrb[0].mxu0 %v1050
        %v2169 = vpop.f32.mrb[0].mxu0
        %v2170 = vadd.f32 %v2099, %v2169
        %v2171 = vpop.f32.mrb[0].mxu0
        %v2172 = vadd.f32 %v2101, %v2171
        %2173 = vdwg.mxu0
        %v2174 = vmul.f32 %v1744, 0.2
        %v2175 = vmul.f32 %v1746, 0.2
        %v2176 = vmul.f32 %v1886, 0.2
        %v2177 = vmul.f32 %v1888, 0.2
        %v2178 = vmul.f32 %v2028, 0.2
        %v2179 = vmul.f32 %v2030, 0.2
        %v2180 = vmul.f32 %v2170, 0.2
        %v2181 = vmul.f32 %v2172, 0.2
        %v2182 = vmax.f32 %v1744, %v2174
        %v2183 = vmax.f32 %v1746, %v2175
        %v2184 = vmax.f32 %v1886, %v2176
        %v2185 = vmax.f32 %v1888, %v2177
        %v2186 = vmax.f32 %v2028, %v2178
        %v2187 = vmax.f32 %v2030, %v2179
        %v2188 = vmax.f32 %v2170, %v2180
        %v2189 = vmax.f32 %v2172, %v2181
        %v2190 = vld [vmem:[#allocation17] sm:$0xff]
        %v2191 = vld [vmem:[#allocation17 + $0x8] sm:$0xff]
        %v2192 = vld [vmem:[#allocation17 + $0x10] sm:$0xff]
        %v2193 = vld [vmem:[#allocation17 + $0x18] sm:$0xff]
        %v2194 = vld [vmem:[#allocation17 + $0x20] sm:$0xff]
        %v2195 = vld [vmem:[#allocation17 + $0x28] sm:$0xff]
        %v2196 = vld [vmem:[#allocation17 + $0x30] sm:$0xff]
        %v2197 = vld [vmem:[#allocation17 + $0x38] sm:$0xff]
        %v2198 = vld [vmem:[#allocation17 + $0x40] sm:$0xff]
        %v2199 = vld [vmem:[#allocation17 + $0x48] sm:$0xff]
        %v2200 = vld [vmem:[#allocation17 + $0x50] sm:$0xff]
        %v2201 = vld [vmem:[#allocation17 + $0x58] sm:$0xff]
        %v2202 = vld [vmem:[#allocation17 + $0x60] sm:$0xff]
        %v2203 = vld [vmem:[#allocation17 + $0x68] sm:$0xff]
        %v2204 = vld [vmem:[#allocation17 + $0x70] sm:$0xff]
        %v2205 = vld [vmem:[#allocation17 + $0x78] sm:$0xff]
        %v2206 = vld [vmem:[#allocation17 + $0x80] sm:$0xff]
        %v2207 = vld [vmem:[#allocation17 + $0x88] sm:$0xff]
        %v2208 = vld [vmem:[#allocation17 + $0x90] sm:$0xff]
        %v2209 = vld [vmem:[#allocation17 + $0x98] sm:$0xff]
        %v2210 = vld [vmem:[#allocation17 + $0xa0] sm:$0xff]
        %v2211 = vld [vmem:[#allocation17 + $0xa8] sm:$0xff]
        %v2212 = vld [vmem:[#allocation17 + $0xb0] sm:$0xff]
        %v2213 = vld [vmem:[#allocation17 + $0xb8] sm:$0xff]
        %v2214 = vld [vmem:[#allocation17 + $0xc0] sm:$0xff]
        %v2215 = vld [vmem:[#allocation17 + $0xc8] sm:$0xff]
        %v2216 = vld [vmem:[#allocation17 + $0xd0] sm:$0xff]
        %v2217 = vld [vmem:[#allocation17 + $0xd8] sm:$0xff]
        %v2218 = vld [vmem:[#allocation17 + $0xe0] sm:$0xff]
        %v2219 = vld [vmem:[#allocation17 + $0xe8] sm:$0xff]
        %v2220 = vld [vmem:[#allocation17 + $0xf0] sm:$0xff]
        %v2221 = vld [vmem:[#allocation17 + $0xf8] sm:$0xff]
        %v2222 = vld [vmem:[#allocation17 + $0x100] sm:$0xff]
        %v2223 = vld [vmem:[#allocation17 + $0x108] sm:$0xff]
        %v2224 = vld [vmem:[#allocation17 + $0x110] sm:$0xff]
        %v2225 = vld [vmem:[#allocation17 + $0x118] sm:$0xff]
        %v2226 = vld [vmem:[#allocation17 + $0x120] sm:$0xff]
        %v2227 = vld [vmem:[#allocation17 + $0x128] sm:$0xff]
        %v2228 = vld [vmem:[#allocation17 + $0x130] sm:$0xff]
        %v2229 = vld [vmem:[#allocation17 + $0x138] sm:$0xff]
        %v2230 = vld [vmem:[#allocation17 + $0x140] sm:$0xff]
        %v2231 = vld [vmem:[#allocation17 + $0x148] sm:$0xff]
        %v2232 = vld [vmem:[#allocation17 + $0x150] sm:$0xff]
        %v2233 = vld [vmem:[#allocation17 + $0x158] sm:$0xff]
        %v2234 = vld [vmem:[#allocation17 + $0x160] sm:$0xff]
        %v2235 = vld [vmem:[#allocation17 + $0x168] sm:$0xff]
        %v2236 = vld [vmem:[#allocation17 + $0x170] sm:$0xff]
        %v2237 = vld [vmem:[#allocation17 + $0x178] sm:$0xff]
        %v2238 = vld [vmem:[#allocation17 + $0x180] sm:$0xff]
        %v2239 = vld [vmem:[#allocation17 + $0x188] sm:$0xff]
        %v2240 = vld [vmem:[#allocation17 + $0x190] sm:$0xff]
        %v2241 = vld [vmem:[#allocation17 + $0x198] sm:$0xff]
        %v2242 = vld [vmem:[#allocation17 + $0x1a0] sm:$0xff]
        %v2243 = vld [vmem:[#allocation17 + $0x1a8] sm:$0xff]
        %v2244 = vld [vmem:[#allocation17 + $0x1b0] sm:$0xff]
        %v2245 = vld [vmem:[#allocation17 + $0x1b8] sm:$0xff]
        %v2246 = vld [vmem:[#allocation17 + $0x1c0] sm:$0xff]
        %v2247 = vld [vmem:[#allocation17 + $0x1c8] sm:$0xff]
        %v2248 = vld [vmem:[#allocation17 + $0x1d0] sm:$0xff]
        %v2249 = vld [vmem:[#allocation17 + $0x1d8] sm:$0xff]
        %v2250 = vld [vmem:[#allocation17 + $0x1e0] sm:$0xff]
        %v2251 = vld [vmem:[#allocation17 + $0x1e8] sm:$0xff]
        %v2252 = vld [vmem:[#allocation17 + $0x1f0] sm:$0xff]
        %v2253 = vld [vmem:[#allocation17 + $0x1f8] sm:$0xff]
        %v2254 = vld [vmem:[#allocation17 + $0x200] sm:$0xff]
        %v2255 = vld [vmem:[#allocation17 + $0x208] sm:$0xff]
        %v2256 = vld [vmem:[#allocation17 + $0x210] sm:$0xff]
        %v2257 = vld [vmem:[#allocation17 + $0x218] sm:$0xff]
        %v2258 = vld [vmem:[#allocation17 + $0x220] sm:$0xff]
        %v2259 = vld [vmem:[#allocation17 + $0x228] sm:$0xff]
        %v2260 = vld [vmem:[#allocation17 + $0x230] sm:$0xff]
        %v2261 = vld [vmem:[#allocation17 + $0x238] sm:$0xff]
        %v2262 = vld [vmem:[#allocation17 + $0x240] sm:$0xff]
        %v2263 = vld [vmem:[#allocation17 + $0x248] sm:$0xff]
        %v2264 = vld [vmem:[#allocation17 + $0x250] sm:$0xff]
        %v2265 = vld [vmem:[#allocation17 + $0x258] sm:$0xff]
        %v2266 = vld [vmem:[#allocation17 + $0x260] sm:$0xff]
        %v2267 = vld [vmem:[#allocation17 + $0x268] sm:$0xff]
        %v2268 = vld [vmem:[#allocation17 + $0x270] sm:$0xff]
        %v2269 = vld [vmem:[#allocation17 + $0x278] sm:$0xff]
        %v2270 = vld [vmem:[#allocation17 + $0x280] sm:$0xff]
        %v2271 = vld [vmem:[#allocation17 + $0x288] sm:$0xff]
        %v2272 = vld [vmem:[#allocation17 + $0x290] sm:$0xff]
        %v2273 = vld [vmem:[#allocation17 + $0x298] sm:$0xff]
        %v2274 = vld [vmem:[#allocation17 + $0x2a0] sm:$0xff]
        %v2275 = vld [vmem:[#allocation17 + $0x2a8] sm:$0xff]
        %v2276 = vld [vmem:[#allocation17 + $0x2b0] sm:$0xff]
        %v2277 = vld [vmem:[#allocation17 + $0x2b8] sm:$0xff]
        %v2278 = vld [vmem:[#allocation17 + $0x2c0] sm:$0xff]
        %v2279 = vld [vmem:[#allocation17 + $0x2c8] sm:$0xff]
        %v2280 = vld [vmem:[#allocation17 + $0x2d0] sm:$0xff]
        %v2281 = vld [vmem:[#allocation17 + $0x2d8] sm:$0xff]
        %v2282 = vld [vmem:[#allocation17 + $0x2e0] sm:$0xff]
        %v2283 = vld [vmem:[#allocation17 + $0x2e8] sm:$0xff]
        %v2284 = vld [vmem:[#allocation17 + $0x2f0] sm:$0xff]
        %v2285 = vld [vmem:[#allocation17 + $0x2f8] sm:$0xff]
        %v2286 = vld [vmem:[#allocation17 + $0x300] sm:$0xff]
        %v2287 = vld [vmem:[#allocation17 + $0x308] sm:$0xff]
        %v2288 = vld [vmem:[#allocation17 + $0x310] sm:$0xff]
        %v2289 = vld [vmem:[#allocation17 + $0x318] sm:$0xff]
        %v2290 = vld [vmem:[#allocation17 + $0x320] sm:$0xff]
        %v2291 = vld [vmem:[#allocation17 + $0x328] sm:$0xff]
        %v2292 = vld [vmem:[#allocation17 + $0x330] sm:$0xff]
        %v2293 = vld [vmem:[#allocation17 + $0x338] sm:$0xff]
        %v2294 = vld [vmem:[#allocation17 + $0x340] sm:$0xff]
        %v2295 = vld [vmem:[#allocation17 + $0x348] sm:$0xff]
        %v2296 = vld [vmem:[#allocation17 + $0x350] sm:$0xff]
        %v2297 = vld [vmem:[#allocation17 + $0x358] sm:$0xff]
        %v2298 = vld [vmem:[#allocation17 + $0x360] sm:$0xff]
        %v2299 = vld [vmem:[#allocation17 + $0x368] sm:$0xff]
        %v2300 = vld [vmem:[#allocation17 + $0x370] sm:$0xff]
        %v2301 = vld [vmem:[#allocation17 + $0x378] sm:$0xff]
        %v2302 = vld [vmem:[#allocation17 + $0x380] sm:$0xff]
        %v2303 = vld [vmem:[#allocation17 + $0x388] sm:$0xff]
        %v2304 = vld [vmem:[#allocation17 + $0x390] sm:$0xff]
        %v2305 = vld [vmem:[#allocation17 + $0x398] sm:$0xff]
        %v2306 = vld [vmem:[#allocation17 + $0x3a0] sm:$0xff]
        %v2307 = vld [vmem:[#allocation17 + $0x3a8] sm:$0xff]
        %v2308 = vld [vmem:[#allocation17 + $0x3b0] sm:$0xff]
        %v2309 = vld [vmem:[#allocation17 + $0x3b8] sm:$0xff]
        %v2310 = vld [vmem:[#allocation17 + $0x3c0] sm:$0xff]
        %v2311 = vld [vmem:[#allocation17 + $0x3c8] sm:$0xff]
        %v2312 = vld [vmem:[#allocation17 + $0x3d0] sm:$0xff]
        %v2313 = vld [vmem:[#allocation17 + $0x3d8] sm:$0xff]
        %v2314 = vld [vmem:[#allocation17 + $0x3e0] sm:$0xff]
        %v2315 = vld [vmem:[#allocation17 + $0x3e8] sm:$0xff]
        %v2316 = vld [vmem:[#allocation17 + $0x3f0] sm:$0xff]
        %v2317 = vld [vmem:[#allocation17 + $0x3f8] sm:$0xff]
        %v2318 = vld [vmem:[#allocation17 + $0x400] sm:$0xff]
        %v2319 = vld [vmem:[#allocation17 + $0x408] sm:$0xff]
        %v2320 = vld [vmem:[#allocation17 + $0x410] sm:$0xff]
        %v2321 = vld [vmem:[#allocation17 + $0x418] sm:$0xff]
        %v2322 = vld [vmem:[#allocation17 + $0x420] sm:$0xff]
        %v2323 = vld [vmem:[#allocation17 + $0x428] sm:$0xff]
        %v2324 = vld [vmem:[#allocation17 + $0x430] sm:$0xff]
        %v2325 = vld [vmem:[#allocation17 + $0x438] sm:$0xff]
        %v2326 = vld [vmem:[#allocation17 + $0x440] sm:$0xff]
        %v2327 = vld [vmem:[#allocation17 + $0x448] sm:$0xff]
        %v2328 = vld [vmem:[#allocation17 + $0x450] sm:$0xff]
        %v2329 = vld [vmem:[#allocation17 + $0x458] sm:$0xff]
        %v2330 = vld [vmem:[#allocation17 + $0x460] sm:$0xff]
        %v2331 = vld [vmem:[#allocation17 + $0x468] sm:$0xff]
        %v2332 = vld [vmem:[#allocation17 + $0x470] sm:$0xff]
        %v2333 = vld [vmem:[#allocation17 + $0x478] sm:$0xff]
        %v2334 = vld [vmem:[#allocation17 + $0x480] sm:$0xff]
        %v2335 = vld [vmem:[#allocation17 + $0x488] sm:$0xff]
        %v2336 = vld [vmem:[#allocation17 + $0x490] sm:$0xff]
        %v2337 = vld [vmem:[#allocation17 + $0x498] sm:$0xff]
        %v2338 = vld [vmem:[#allocation17 + $0x4a0] sm:$0xff]
        %v2339 = vld [vmem:[#allocation17 + $0x4a8] sm:$0xff]
        %v2340 = vld [vmem:[#allocation17 + $0x4b0] sm:$0xff]
        %v2341 = vld [vmem:[#allocation17 + $0x4b8] sm:$0xff]
        %v2342 = vld [vmem:[#allocation17 + $0x4c0] sm:$0xff]
        %v2343 = vld [vmem:[#allocation17 + $0x4c8] sm:$0xff]
        %v2344 = vld [vmem:[#allocation17 + $0x4d0] sm:$0xff]
        %v2345 = vld [vmem:[#allocation17 + $0x4d8] sm:$0xff]
        %v2346 = vld [vmem:[#allocation17 + $0x4e0] sm:$0xff]
        %v2347 = vld [vmem:[#allocation17 + $0x4e8] sm:$0xff]
        %v2348 = vld [vmem:[#allocation17 + $0x4f0] sm:$0xff]
        %v2349 = vld [vmem:[#allocation17 + $0x4f8] sm:$0xff]
        %v2350 = vld [vmem:[#allocation17 + $0x500] sm:$0xff]
        %v2351 = vld [vmem:[#allocation17 + $0x508] sm:$0xff]
        %v2352 = vld [vmem:[#allocation17 + $0x510] sm:$0xff]
        %v2353 = vld [vmem:[#allocation17 + $0x518] sm:$0xff]
        %v2354 = vld [vmem:[#allocation17 + $0x520] sm:$0xff]
        %v2355 = vld [vmem:[#allocation17 + $0x528] sm:$0xff]
        %v2356 = vld [vmem:[#allocation17 + $0x530] sm:$0xff]
        %v2357 = vld [vmem:[#allocation17 + $0x538] sm:$0xff]
        %v2358 = vld [vmem:[#allocation17 + $0x540] sm:$0xff]
        %v2359 = vld [vmem:[#allocation17 + $0x548] sm:$0xff]
        %v2360 = vld [vmem:[#allocation17 + $0x550] sm:$0xff]
        %v2361 = vld [vmem:[#allocation17 + $0x558] sm:$0xff]
        %v2362 = vld [vmem:[#allocation17 + $0x560] sm:$0xff]
        %v2363 = vld [vmem:[#allocation17 + $0x568] sm:$0xff]
        %v2364 = vld [vmem:[#allocation17 + $0x570] sm:$0xff]
        %v2365 = vld [vmem:[#allocation17 + $0x578] sm:$0xff]
        %v2366 = vld [vmem:[#allocation17 + $0x580] sm:$0xff]
        %v2367 = vld [vmem:[#allocation17 + $0x588] sm:$0xff]
        %v2368 = vld [vmem:[#allocation17 + $0x590] sm:$0xff]
        %v2369 = vld [vmem:[#allocation17 + $0x598] sm:$0xff]
        %v2370 = vld [vmem:[#allocation17 + $0x5a0] sm:$0xff]
        %v2371 = vld [vmem:[#allocation17 + $0x5a8] sm:$0xff]
        %v2372 = vld [vmem:[#allocation17 + $0x5b0] sm:$0xff]
        %v2373 = vld [vmem:[#allocation17 + $0x5b8] sm:$0xff]
        %v2374 = vld [vmem:[#allocation17 + $0x5c0] sm:$0xff]
        %v2375 = vld [vmem:[#allocation17 + $0x5c8] sm:$0xff]
        %v2376 = vld [vmem:[#allocation17 + $0x5d0] sm:$0xff]
        %v2377 = vld [vmem:[#allocation17 + $0x5d8] sm:$0xff]
        %v2378 = vld [vmem:[#allocation17 + $0x5e0] sm:$0xff]
        %v2379 = vld [vmem:[#allocation17 + $0x5e8] sm:$0xff]
        %v2380 = vld [vmem:[#allocation17 + $0x5f0] sm:$0xff]
        %v2381 = vld [vmem:[#allocation17 + $0x5f8] sm:$0xff]
        %v2382 = vld [vmem:[#allocation17 + $0x600] sm:$0xff]
        %v2383 = vld [vmem:[#allocation17 + $0x608] sm:$0xff]
        %v2384 = vld [vmem:[#allocation17 + $0x610] sm:$0xff]
        %v2385 = vld [vmem:[#allocation17 + $0x618] sm:$0xff]
        %v2386 = vld [vmem:[#allocation17 + $0x620] sm:$0xff]
        %v2387 = vld [vmem:[#allocation17 + $0x628] sm:$0xff]
        %v2388 = vld [vmem:[#allocation17 + $0x630] sm:$0xff]
        %v2389 = vld [vmem:[#allocation17 + $0x638] sm:$0xff]
        %v2390 = vld [vmem:[#allocation17 + $0x640] sm:$0xff]
        %v2391 = vld [vmem:[#allocation17 + $0x648] sm:$0xff]
        %v2392 = vld [vmem:[#allocation17 + $0x650] sm:$0xff]
        %v2393 = vld [vmem:[#allocation17 + $0x658] sm:$0xff]
        %v2394 = vld [vmem:[#allocation17 + $0x660] sm:$0xff]
        %v2395 = vld [vmem:[#allocation17 + $0x668] sm:$0xff]
        %v2396 = vld [vmem:[#allocation17 + $0x670] sm:$0xff]
        %v2397 = vld [vmem:[#allocation17 + $0x678] sm:$0xff]
        %v2398 = vld [vmem:[#allocation17 + $0x680] sm:$0xff]
        %v2399 = vld [vmem:[#allocation17 + $0x688] sm:$0xff]
        %v2400 = vld [vmem:[#allocation17 + $0x690] sm:$0xff]
        %v2401 = vld [vmem:[#allocation17 + $0x698] sm:$0xff]
        %v2402 = vld [vmem:[#allocation17 + $0x6a0] sm:$0xff]
        %v2403 = vld [vmem:[#allocation17 + $0x6a8] sm:$0xff]
        %v2404 = vld [vmem:[#allocation17 + $0x6b0] sm:$0xff]
        %v2405 = vld [vmem:[#allocation17 + $0x6b8] sm:$0xff]
        %v2406 = vld [vmem:[#allocation17 + $0x6c0] sm:$0xff]
        %v2407 = vld [vmem:[#allocation17 + $0x6c8] sm:$0xff]
        %v2408 = vld [vmem:[#allocation17 + $0x6d0] sm:$0xff]
        %v2409 = vld [vmem:[#allocation17 + $0x6d8] sm:$0xff]
        %v2410 = vld [vmem:[#allocation17 + $0x6e0] sm:$0xff]
        %v2411 = vld [vmem:[#allocation17 + $0x6e8] sm:$0xff]
        %v2412 = vld [vmem:[#allocation17 + $0x6f0] sm:$0xff]
        %v2413 = vld [vmem:[#allocation17 + $0x6f8] sm:$0xff]
        %v2414 = vld [vmem:[#allocation17 + $0x700] sm:$0xff]
        %v2415 = vld [vmem:[#allocation17 + $0x708] sm:$0xff]
        %v2416 = vld [vmem:[#allocation17 + $0x710] sm:$0xff]
        %v2417 = vld [vmem:[#allocation17 + $0x718] sm:$0xff]
        %v2418 = vld [vmem:[#allocation17 + $0x720] sm:$0xff]
        %v2419 = vld [vmem:[#allocation17 + $0x728] sm:$0xff]
        %v2420 = vld [vmem:[#allocation17 + $0x730] sm:$0xff]
        %v2421 = vld [vmem:[#allocation17 + $0x738] sm:$0xff]
        %v2422 = vld [vmem:[#allocation17 + $0x740] sm:$0xff]
        %v2423 = vld [vmem:[#allocation17 + $0x748] sm:$0xff]
        %v2424 = vld [vmem:[#allocation17 + $0x750] sm:$0xff]
        %v2425 = vld [vmem:[#allocation17 + $0x758] sm:$0xff]
        %v2426 = vld [vmem:[#allocation17 + $0x760] sm:$0xff]
        %v2427 = vld [vmem:[#allocation17 + $0x768] sm:$0xff]
        %v2428 = vld [vmem:[#allocation17 + $0x770] sm:$0xff]
        %v2429 = vld [vmem:[#allocation17 + $0x778] sm:$0xff]
        %v2430 = vld [vmem:[#allocation17 + $0x780] sm:$0xff]
        %v2431 = vld [vmem:[#allocation17 + $0x788] sm:$0xff]
        %v2432 = vld [vmem:[#allocation17 + $0x790] sm:$0xff]
        %v2433 = vld [vmem:[#allocation17 + $0x798] sm:$0xff]
        %v2434 = vld [vmem:[#allocation17 + $0x7a0] sm:$0xff]
        %v2435 = vld [vmem:[#allocation17 + $0x7a8] sm:$0xff]
        %v2436 = vld [vmem:[#allocation17 + $0x7b0] sm:$0xff]
        %v2437 = vld [vmem:[#allocation17 + $0x7b8] sm:$0xff]
        %v2438 = vld [vmem:[#allocation17 + $0x7c0] sm:$0xff]
        %v2439 = vld [vmem:[#allocation17 + $0x7c8] sm:$0xff]
        %v2440 = vld [vmem:[#allocation17 + $0x7d0] sm:$0xff]
        %v2441 = vld [vmem:[#allocation17 + $0x7d8] sm:$0xff]
        %v2442 = vld [vmem:[#allocation17 + $0x7e0] sm:$0xff]
        %v2443 = vld [vmem:[#allocation17 + $0x7e8] sm:$0xff]
        %v2444 = vld [vmem:[#allocation17 + $0x7f0] sm:$0xff]
        %v2445 = vld [vmem:[#allocation17 + $0x7f8] sm:$0xff]
        %v2446 = vld [vmem:[#allocation17 + $0x800] sm:$0xff]
        %v2447 = vld [vmem:[#allocation17 + $0x808] sm:$0xff]
        %v2448 = vld [vmem:[#allocation17 + $0x810] sm:$0xff]
        %v2449 = vld [vmem:[#allocation17 + $0x818] sm:$0xff]
        %v2450 = vld [vmem:[#allocation17 + $0x820] sm:$0xff]
        %v2451 = vld [vmem:[#allocation17 + $0x828] sm:$0xff]
        %v2452 = vld [vmem:[#allocation17 + $0x830] sm:$0xff]
        %v2453 = vld [vmem:[#allocation17 + $0x838] sm:$0xff]
        %v2454 = vld [vmem:[#allocation17 + $0x840] sm:$0xff]
        %v2455 = vld [vmem:[#allocation17 + $0x848] sm:$0xff]
        %v2456 = vld [vmem:[#allocation17 + $0x850] sm:$0xff]
        %v2457 = vld [vmem:[#allocation17 + $0x858] sm:$0xff]
        %v2458 = vld [vmem:[#allocation17 + $0x860] sm:$0xff]
        %v2459 = vld [vmem:[#allocation17 + $0x868] sm:$0xff]
        %v2460 = vld [vmem:[#allocation17 + $0x870] sm:$0xff]
        %v2461 = vld [vmem:[#allocation17 + $0x878] sm:$0xff]
        %v2462 = vld [vmem:[#allocation17 + $0x880] sm:$0xff]
        %v2463 = vld [vmem:[#allocation17 + $0x888] sm:$0xff]
        %v2464 = vld [vmem:[#allocation17 + $0x890] sm:$0xff]
        %v2465 = vld [vmem:[#allocation17 + $0x898] sm:$0xff]
        %v2466 = vld [vmem:[#allocation17 + $0x8a0] sm:$0xff]
        %v2467 = vld [vmem:[#allocation17 + $0x8a8] sm:$0xff]
        %v2468 = vld [vmem:[#allocation17 + $0x8b0] sm:$0xff]
        %v2469 = vld [vmem:[#allocation17 + $0x8b8] sm:$0xff]
        %v2470 = vld [vmem:[#allocation17 + $0x8c0] sm:$0xff]
        %v2471 = vld [vmem:[#allocation17 + $0x8c8] sm:$0xff]
        %v2472 = vld [vmem:[#allocation17 + $0x8d0] sm:$0xff]
        %v2473 = vld [vmem:[#allocation17 + $0x8d8] sm:$0xff]
        %v2474 = vld [vmem:[#allocation17 + $0x8e0] sm:$0xff]
        %v2475 = vld [vmem:[#allocation17 + $0x8e8] sm:$0xff]
        %v2476 = vld [vmem:[#allocation17 + $0x8f0] sm:$0xff]
        %v2477 = vld [vmem:[#allocation17 + $0x8f8] sm:$0xff]
        %v2478 = vld [vmem:[#allocation17 + $0x900] sm:$0xff]
        %v2479 = vld [vmem:[#allocation17 + $0x908] sm:$0xff]
        %v2480 = vld [vmem:[#allocation17 + $0x910] sm:$0xff]
        %v2481 = vld [vmem:[#allocation17 + $0x918] sm:$0xff]
        %v2482 = vld [vmem:[#allocation17 + $0x920] sm:$0xff]
        %v2483 = vld [vmem:[#allocation17 + $0x928] sm:$0xff]
        %v2484 = vld [vmem:[#allocation17 + $0x930] sm:$0xff]
        %v2485 = vld [vmem:[#allocation17 + $0x938] sm:$0xff]
        %v2486 = vld [vmem:[#allocation17 + $0x940] sm:$0xff]
        %v2487 = vld [vmem:[#allocation17 + $0x948] sm:$0xff]
        %v2488 = vld [vmem:[#allocation17 + $0x950] sm:$0xff]
        %v2489 = vld [vmem:[#allocation17 + $0x958] sm:$0xff]
        %v2490 = vld [vmem:[#allocation17 + $0x960] sm:$0xff]
        %v2491 = vld [vmem:[#allocation17 + $0x968] sm:$0xff]
        %v2492 = vld [vmem:[#allocation17 + $0x970] sm:$0xff]
        %v2493 = vld [vmem:[#allocation17 + $0x978] sm:$0xff]
        %v2494 = vld [vmem:[#allocation17 + $0x980] sm:$0xff]
        %v2495 = vld [vmem:[#allocation17 + $0x988] sm:$0xff]
        %v2496 = vld [vmem:[#allocation17 + $0x990] sm:$0xff]
        %v2497 = vld [vmem:[#allocation17 + $0x998] sm:$0xff]
        %v2498 = vld [vmem:[#allocation17 + $0x9a0] sm:$0xff]
        %v2499 = vld [vmem:[#allocation17 + $0x9a8] sm:$0xff]
        %v2500 = vld [vmem:[#allocation17 + $0x9b0] sm:$0xff]
        %v2501 = vld [vmem:[#allocation17 + $0x9b8] sm:$0xff]
        %v2502 = vld [vmem:[#allocation17 + $0x9c0] sm:$0xff]
        %v2503 = vld [vmem:[#allocation17 + $0x9c8] sm:$0xff]
        %v2504 = vld [vmem:[#allocation17 + $0x9d0] sm:$0xff]
        %v2505 = vld [vmem:[#allocation17 + $0x9d8] sm:$0xff]
        %v2506 = vld [vmem:[#allocation17 + $0x9e0] sm:$0xff]
        %v2507 = vld [vmem:[#allocation17 + $0x9e8] sm:$0xff]
        %v2508 = vld [vmem:[#allocation17 + $0x9f0] sm:$0xff]
        %v2509 = vld [vmem:[#allocation17 + $0x9f8] sm:$0xff]
        %v2510 = vld [vmem:[#allocation17 + $0xa00] sm:$0xff]
        %v2511 = vld [vmem:[#allocation17 + $0xa08] sm:$0xff]
        %v2512 = vld [vmem:[#allocation17 + $0xa10] sm:$0xff]
        %v2513 = vld [vmem:[#allocation17 + $0xa18] sm:$0xff]
        %v2514 = vld [vmem:[#allocation17 + $0xa20] sm:$0xff]
        %v2515 = vld [vmem:[#allocation17 + $0xa28] sm:$0xff]
        %v2516 = vld [vmem:[#allocation17 + $0xa30] sm:$0xff]
        %v2517 = vld [vmem:[#allocation17 + $0xa38] sm:$0xff]
        %v2518 = vld [vmem:[#allocation17 + $0xa40] sm:$0xff]
        %v2519 = vld [vmem:[#allocation17 + $0xa48] sm:$0xff]
        %v2520 = vld [vmem:[#allocation17 + $0xa50] sm:$0xff]
        %v2521 = vld [vmem:[#allocation17 + $0xa58] sm:$0xff]
        %v2522 = vld [vmem:[#allocation17 + $0xa60] sm:$0xff]
        %v2523 = vld [vmem:[#allocation17 + $0xa68] sm:$0xff]
        %v2524 = vld [vmem:[#allocation17 + $0xa70] sm:$0xff]
        %v2525 = vld [vmem:[#allocation17 + $0xa78] sm:$0xff]
        %v2526 = vld [vmem:[#allocation17 + $0xa80] sm:$0xff]
        %v2527 = vld [vmem:[#allocation17 + $0xa88] sm:$0xff]
        %v2528 = vld [vmem:[#allocation17 + $0xa90] sm:$0xff]
        %v2529 = vld [vmem:[#allocation17 + $0xa98] sm:$0xff]
        %v2530 = vld [vmem:[#allocation17 + $0xaa0] sm:$0xff]
        %v2531 = vld [vmem:[#allocation17 + $0xaa8] sm:$0xff]
        %v2532 = vld [vmem:[#allocation17 + $0xab0] sm:$0xff]
        %v2533 = vld [vmem:[#allocation17 + $0xab8] sm:$0xff]
        %v2534 = vld [vmem:[#allocation17 + $0xac0] sm:$0xff]
        %v2535 = vld [vmem:[#allocation17 + $0xac8] sm:$0xff]
        %v2536 = vld [vmem:[#allocation17 + $0xad0] sm:$0xff]
        %v2537 = vld [vmem:[#allocation17 + $0xad8] sm:$0xff]
        %v2538 = vld [vmem:[#allocation17 + $0xae0] sm:$0xff]
        %v2539 = vld [vmem:[#allocation17 + $0xae8] sm:$0xff]
        %v2540 = vld [vmem:[#allocation17 + $0xaf0] sm:$0xff]
        %v2541 = vld [vmem:[#allocation17 + $0xaf8] sm:$0xff]
        %v2542 = vld [vmem:[#allocation17 + $0xb00] sm:$0xff]
        %v2543 = vld [vmem:[#allocation17 + $0xb08] sm:$0xff]
        %v2544 = vld [vmem:[#allocation17 + $0xb10] sm:$0xff]
        %v2545 = vld [vmem:[#allocation17 + $0xb18] sm:$0xff]
        %v2546 = vld [vmem:[#allocation17 + $0xb20] sm:$0xff]
        %v2547 = vld [vmem:[#allocation17 + $0xb28] sm:$0xff]
        %v2548 = vld [vmem:[#allocation17 + $0xb30] sm:$0xff]
        %v2549 = vld [vmem:[#allocation17 + $0xb38] sm:$0xff]
        %v2550 = vld [vmem:[#allocation17 + $0xb40] sm:$0xff]
        %v2551 = vld [vmem:[#allocation17 + $0xb48] sm:$0xff]
        %v2552 = vld [vmem:[#allocation17 + $0xb50] sm:$0xff]
        %v2553 = vld [vmem:[#allocation17 + $0xb58] sm:$0xff]
        %v2554 = vld [vmem:[#allocation17 + $0xb60] sm:$0xff]
        %v2555 = vld [vmem:[#allocation17 + $0xb68] sm:$0xff]
        %v2556 = vld [vmem:[#allocation17 + $0xb70] sm:$0xff]
        %v2557 = vld [vmem:[#allocation17 + $0xb78] sm:$0xff]
        %v2558 = vld [vmem:[#allocation17 + $0xb80] sm:$0xff]
        %v2559 = vld [vmem:[#allocation17 + $0xb88] sm:$0xff]
        %v2560 = vld [vmem:[#allocation17 + $0xb90] sm:$0xff]
        %v2561 = vld [vmem:[#allocation17 + $0xb98] sm:$0xff]
        %v2562 = vld [vmem:[#allocation17 + $0xba0] sm:$0xff]
        %v2563 = vld [vmem:[#allocation17 + $0xba8] sm:$0xff]
        %v2564 = vld [vmem:[#allocation17 + $0xbb0] sm:$0xff]
        %v2565 = vld [vmem:[#allocation17 + $0xbb8] sm:$0xff]
        %v2566 = vld [vmem:[#allocation17 + $0xbc0] sm:$0xff]
        %v2567 = vld [vmem:[#allocation17 + $0xbc8] sm:$0xff]
        %v2568 = vld [vmem:[#allocation17 + $0xbd0] sm:$0xff]
        %v2569 = vld [vmem:[#allocation17 + $0xbd8] sm:$0xff]
        %v2570 = vld [vmem:[#allocation17 + $0xbe0] sm:$0xff]
        %v2571 = vld [vmem:[#allocation17 + $0xbe8] sm:$0xff]
        %v2572 = vld [vmem:[#allocation17 + $0xbf0] sm:$0xff]
        %v2573 = vld [vmem:[#allocation17 + $0xbf8] sm:$0xff]
        %v2574 = vld [vmem:[#allocation17 + $0xc00] sm:$0xff]
        %v2575 = vld [vmem:[#allocation17 + $0xc08] sm:$0xff]
        %v2576 = vld [vmem:[#allocation17 + $0xc10] sm:$0xff]
        %v2577 = vld [vmem:[#allocation17 + $0xc18] sm:$0xff]
        %v2578 = vld [vmem:[#allocation17 + $0xc20] sm:$0xff]
        %v2579 = vld [vmem:[#allocation17 + $0xc28] sm:$0xff]
        %v2580 = vld [vmem:[#allocation17 + $0xc30] sm:$0xff]
        %v2581 = vld [vmem:[#allocation17 + $0xc38] sm:$0xff]
        %v2582 = vld [vmem:[#allocation17 + $0xc40] sm:$0xff]
        %v2583 = vld [vmem:[#allocation17 + $0xc48] sm:$0xff]
        %v2584 = vld [vmem:[#allocation17 + $0xc50] sm:$0xff]
        %v2585 = vld [vmem:[#allocation17 + $0xc58] sm:$0xff]
        %v2586 = vld [vmem:[#allocation17 + $0xc60] sm:$0xff]
        %v2587 = vld [vmem:[#allocation17 + $0xc68] sm:$0xff]
        %v2588 = vld [vmem:[#allocation17 + $0xc70] sm:$0xff]
        %v2589 = vld [vmem:[#allocation17 + $0xc78] sm:$0xff]
        %v2590 = vld [vmem:[#allocation17 + $0xc80] sm:$0xff]
        %v2591 = vld [vmem:[#allocation17 + $0xc88] sm:$0xff]
        %v2592 = vld [vmem:[#allocation17 + $0xc90] sm:$0xff]
        %v2593 = vld [vmem:[#allocation17 + $0xc98] sm:$0xff]
        %v2594 = vld [vmem:[#allocation17 + $0xca0] sm:$0xff]
        %v2595 = vld [vmem:[#allocation17 + $0xca8] sm:$0xff]
        %v2596 = vld [vmem:[#allocation17 + $0xcb0] sm:$0xff]
        %v2597 = vld [vmem:[#allocation17 + $0xcb8] sm:$0xff]
        %v2598 = vld [vmem:[#allocation17 + $0xcc0] sm:$0xff]
        %v2599 = vld [vmem:[#allocation17 + $0xcc8] sm:$0xff]
        %v2600 = vld [vmem:[#allocation17 + $0xcd0] sm:$0xff]
        %v2601 = vld [vmem:[#allocation17 + $0xcd8] sm:$0xff]
        %v2602 = vld [vmem:[#allocation17 + $0xce0] sm:$0xff]
        %v2603 = vld [vmem:[#allocation17 + $0xce8] sm:$0xff]
        %v2604 = vld [vmem:[#allocation17 + $0xcf0] sm:$0xff]
        %v2605 = vld [vmem:[#allocation17 + $0xcf8] sm:$0xff]
        %v2606 = vld [vmem:[#allocation17 + $0xd00] sm:$0xff]
        %v2607 = vld [vmem:[#allocation17 + $0xd08] sm:$0xff]
        %v2608 = vld [vmem:[#allocation17 + $0xd10] sm:$0xff]
        %v2609 = vld [vmem:[#allocation17 + $0xd18] sm:$0xff]
        %v2610 = vld [vmem:[#allocation17 + $0xd20] sm:$0xff]
        %v2611 = vld [vmem:[#allocation17 + $0xd28] sm:$0xff]
        %v2612 = vld [vmem:[#allocation17 + $0xd30] sm:$0xff]
        %v2613 = vld [vmem:[#allocation17 + $0xd38] sm:$0xff]
        %v2614 = vld [vmem:[#allocation17 + $0xd40] sm:$0xff]
        %v2615 = vld [vmem:[#allocation17 + $0xd48] sm:$0xff]
        %v2616 = vld [vmem:[#allocation17 + $0xd50] sm:$0xff]
        %v2617 = vld [vmem:[#allocation17 + $0xd58] sm:$0xff]
        %v2618 = vld [vmem:[#allocation17 + $0xd60] sm:$0xff]
        %v2619 = vld [vmem:[#allocation17 + $0xd68] sm:$0xff]
        %v2620 = vld [vmem:[#allocation17 + $0xd70] sm:$0xff]
        %v2621 = vld [vmem:[#allocation17 + $0xd78] sm:$0xff]
        %v2622 = vld [vmem:[#allocation17 + $0xd80] sm:$0xff]
        %v2623 = vld [vmem:[#allocation17 + $0xd88] sm:$0xff]
        %v2624 = vld [vmem:[#allocation17 + $0xd90] sm:$0xff]
        %v2625 = vld [vmem:[#allocation17 + $0xd98] sm:$0xff]
        %v2626 = vld [vmem:[#allocation17 + $0xda0] sm:$0xff]
        %v2627 = vld [vmem:[#allocation17 + $0xda8] sm:$0xff]
        %v2628 = vld [vmem:[#allocation17 + $0xdb0] sm:$0xff]
        %v2629 = vld [vmem:[#allocation17 + $0xdb8] sm:$0xff]
        %v2630 = vld [vmem:[#allocation17 + $0xdc0] sm:$0xff]
        %v2631 = vld [vmem:[#allocation17 + $0xdc8] sm:$0xff]
        %v2632 = vld [vmem:[#allocation17 + $0xdd0] sm:$0xff]
        %v2633 = vld [vmem:[#allocation17 + $0xdd8] sm:$0xff]
        %v2634 = vld [vmem:[#allocation17 + $0xde0] sm:$0xff]
        %v2635 = vld [vmem:[#allocation17 + $0xde8] sm:$0xff]
        %v2636 = vld [vmem:[#allocation17 + $0xdf0] sm:$0xff]
        %v2637 = vld [vmem:[#allocation17 + $0xdf8] sm:$0xff]
        %v2638 = vld [vmem:[#allocation17 + $0xe00] sm:$0xff]
        %v2639 = vld [vmem:[#allocation17 + $0xe08] sm:$0xff]
        %v2640 = vld [vmem:[#allocation17 + $0xe10] sm:$0xff]
        %v2641 = vld [vmem:[#allocation17 + $0xe18] sm:$0xff]
        %v2642 = vld [vmem:[#allocation17 + $0xe20] sm:$0xff]
        %v2643 = vld [vmem:[#allocation17 + $0xe28] sm:$0xff]
        %v2644 = vld [vmem:[#allocation17 + $0xe30] sm:$0xff]
        %v2645 = vld [vmem:[#allocation17 + $0xe38] sm:$0xff]
        %v2646 = vld [vmem:[#allocation17 + $0xe40] sm:$0xff]
        %v2647 = vld [vmem:[#allocation17 + $0xe48] sm:$0xff]
        %v2648 = vld [vmem:[#allocation17 + $0xe50] sm:$0xff]
        %v2649 = vld [vmem:[#allocation17 + $0xe58] sm:$0xff]
        %v2650 = vld [vmem:[#allocation17 + $0xe60] sm:$0xff]
        %v2651 = vld [vmem:[#allocation17 + $0xe68] sm:$0xff]
        %v2652 = vld [vmem:[#allocation17 + $0xe70] sm:$0xff]
        %v2653 = vld [vmem:[#allocation17 + $0xe78] sm:$0xff]
        %v2654 = vld [vmem:[#allocation17 + $0xe80] sm:$0xff]
        %v2655 = vld [vmem:[#allocation17 + $0xe88] sm:$0xff]
        %v2656 = vld [vmem:[#allocation17 + $0xe90] sm:$0xff]
        %v2657 = vld [vmem:[#allocation17 + $0xe98] sm:$0xff]
        %v2658 = vld [vmem:[#allocation17 + $0xea0] sm:$0xff]
        %v2659 = vld [vmem:[#allocation17 + $0xea8] sm:$0xff]
        %v2660 = vld [vmem:[#allocation17 + $0xeb0] sm:$0xff]
        %v2661 = vld [vmem:[#allocation17 + $0xeb8] sm:$0xff]
        %v2662 = vld [vmem:[#allocation17 + $0xec0] sm:$0xff]
        %v2663 = vld [vmem:[#allocation17 + $0xec8] sm:$0xff]
        %v2664 = vld [vmem:[#allocation17 + $0xed0] sm:$0xff]
        %v2665 = vld [vmem:[#allocation17 + $0xed8] sm:$0xff]
        %v2666 = vld [vmem:[#allocation17 + $0xee0] sm:$0xff]
        %v2667 = vld [vmem:[#allocation17 + $0xee8] sm:$0xff]
        %v2668 = vld [vmem:[#allocation17 + $0xef0] sm:$0xff]
        %v2669 = vld [vmem:[#allocation17 + $0xef8] sm:$0xff]
        %v2670 = vld [vmem:[#allocation17 + $0xf00] sm:$0xff]
        %v2671 = vld [vmem:[#allocation17 + $0xf08] sm:$0xff]
        %v2672 = vld [vmem:[#allocation17 + $0xf10] sm:$0xff]
        %v2673 = vld [vmem:[#allocation17 + $0xf18] sm:$0xff]
        %v2674 = vld [vmem:[#allocation17 + $0xf20] sm:$0xff]
        %v2675 = vld [vmem:[#allocation17 + $0xf28] sm:$0xff]
        %v2676 = vld [vmem:[#allocation17 + $0xf30] sm:$0xff]
        %v2677 = vld [vmem:[#allocation17 + $0xf38] sm:$0xff]
        %v2678 = vld [vmem:[#allocation17 + $0xf40] sm:$0xff]
        %v2679 = vld [vmem:[#allocation17 + $0xf48] sm:$0xff]
        %v2680 = vld [vmem:[#allocation17 + $0xf50] sm:$0xff]
        %v2681 = vld [vmem:[#allocation17 + $0xf58] sm:$0xff]
        %v2682 = vld [vmem:[#allocation17 + $0xf60] sm:$0xff]
        %v2683 = vld [vmem:[#allocation17 + $0xf68] sm:$0xff]
        %v2684 = vld [vmem:[#allocation17 + $0xf70] sm:$0xff]
        %v2685 = vld [vmem:[#allocation17 + $0xf78] sm:$0xff]
        %v2686 = vld [vmem:[#allocation17 + $0xf80] sm:$0xff]
        %v2687 = vld [vmem:[#allocation17 + $0xf88] sm:$0xff]
        %v2688 = vld [vmem:[#allocation17 + $0xf90] sm:$0xff]
        %v2689 = vld [vmem:[#allocation17 + $0xf98] sm:$0xff]
        %v2690 = vld [vmem:[#allocation17 + $0xfa0] sm:$0xff]
        %v2691 = vld [vmem:[#allocation17 + $0xfa8] sm:$0xff]
        %v2692 = vld [vmem:[#allocation17 + $0xfb0] sm:$0xff]
        %v2693 = vld [vmem:[#allocation17 + $0xfb8] sm:$0xff]
        %v2694 = vld [vmem:[#allocation17 + $0xfc0] sm:$0xff]
        %v2695 = vld [vmem:[#allocation17 + $0xfc8] sm:$0xff]
        %v2696 = vld [vmem:[#allocation17 + $0xfd0] sm:$0xff]
        %v2697 = vld [vmem:[#allocation17 + $0xfd8] sm:$0xff]
        %v2698 = vld [vmem:[#allocation17 + $0xfe0] sm:$0xff]
        %v2699 = vld [vmem:[#allocation17 + $0xfe8] sm:$0xff]
        %v2700 = vld [vmem:[#allocation17 + $0xff0] sm:$0xff]
        %v2701 = vld [vmem:[#allocation17 + $0xff8] sm:$0xff]
        %v2702 = vld [vmem:[#allocation17 + $0x1000] sm:$0xff]
        %v2703 = vld [vmem:[#allocation17 + $0x1008] sm:$0xff]
        %v2704 = vld [vmem:[#allocation17 + $0x1010] sm:$0xff]
        %v2705 = vld [vmem:[#allocation17 + $0x1018] sm:$0xff]
        %v2706 = vld [vmem:[#allocation17 + $0x1020] sm:$0xff]
        %v2707 = vld [vmem:[#allocation17 + $0x1028] sm:$0xff]
        %v2708 = vld [vmem:[#allocation17 + $0x1030] sm:$0xff]
        %v2709 = vld [vmem:[#allocation17 + $0x1038] sm:$0xff]
        %v2710 = vld [vmem:[#allocation17 + $0x1040] sm:$0xff]
        %v2711 = vld [vmem:[#allocation17 + $0x1048] sm:$0xff]
        %v2712 = vld [vmem:[#allocation17 + $0x1050] sm:$0xff]
        %v2713 = vld [vmem:[#allocation17 + $0x1058] sm:$0xff]
        %v2714 = vld [vmem:[#allocation17 + $0x1060] sm:$0xff]
        %v2715 = vld [vmem:[#allocation17 + $0x1068] sm:$0xff]
        %v2716 = vld [vmem:[#allocation17 + $0x1070] sm:$0xff]
        %v2717 = vld [vmem:[#allocation17 + $0x1078] sm:$0xff]
        %v2718 = vld [vmem:[#allocation17 + $0x1080] sm:$0xff]
        %v2719 = vld [vmem:[#allocation17 + $0x1088] sm:$0xff]
        %v2720 = vld [vmem:[#allocation17 + $0x1090] sm:$0xff]
        %v2721 = vld [vmem:[#allocation17 + $0x1098] sm:$0xff]
        %v2722 = vld [vmem:[#allocation17 + $0x10a0] sm:$0xff]
        %v2723 = vld [vmem:[#allocation17 + $0x10a8] sm:$0xff]
        %v2724 = vld [vmem:[#allocation17 + $0x10b0] sm:$0xff]
        %v2725 = vld [vmem:[#allocation17 + $0x10b8] sm:$0xff]
        %v2726 = vld [vmem:[#allocation17 + $0x10c0] sm:$0xff]
        %v2727 = vld [vmem:[#allocation17 + $0x10c8] sm:$0xff]
        %v2728 = vld [vmem:[#allocation17 + $0x10d0] sm:$0xff]
        %v2729 = vld [vmem:[#allocation17 + $0x10d8] sm:$0xff]
        %v2730 = vld [vmem:[#allocation17 + $0x10e0] sm:$0xff]
        %v2731 = vld [vmem:[#allocation17 + $0x10e8] sm:$0xff]
        %v2732 = vld [vmem:[#allocation17 + $0x10f0] sm:$0xff]
        %v2733 = vld [vmem:[#allocation17 + $0x10f8] sm:$0xff]
        %v2734 = vld [vmem:[#allocation17 + $0x1100] sm:$0xff]
        %v2735 = vld [vmem:[#allocation17 + $0x1108] sm:$0xff]
        %v2736 = vld [vmem:[#allocation17 + $0x1110] sm:$0xff]
        %v2737 = vld [vmem:[#allocation17 + $0x1118] sm:$0xff]
        %v2738 = vld [vmem:[#allocation17 + $0x1120] sm:$0xff]
        %v2739 = vld [vmem:[#allocation17 + $0x1128] sm:$0xff]
        %v2740 = vld [vmem:[#allocation17 + $0x1130] sm:$0xff]
        %v2741 = vld [vmem:[#allocation17 + $0x1138] sm:$0xff]
        %v2742 = vld [vmem:[#allocation17 + $0x1140] sm:$0xff]
        %v2743 = vld [vmem:[#allocation17 + $0x1148] sm:$0xff]
        %v2744 = vld [vmem:[#allocation17 + $0x1150] sm:$0xff]
        %v2745 = vld [vmem:[#allocation17 + $0x1158] sm:$0xff]
        %v2746 = vld [vmem:[#allocation17 + $0x1160] sm:$0xff]
        %v2747 = vld [vmem:[#allocation17 + $0x1168] sm:$0xff]
        %v2748 = vld [vmem:[#allocation17 + $0x1170] sm:$0xff]
        %v2749 = vld [vmem:[#allocation17 + $0x1178] sm:$0xff]
        %v2750 = vld [vmem:[#allocation17 + $0x1180] sm:$0xff]
        %v2751 = vld [vmem:[#allocation17 + $0x1188] sm:$0xff]
        %v2752 = vld [vmem:[#allocation17 + $0x1190] sm:$0xff]
        %v2753 = vld [vmem:[#allocation17 + $0x1198] sm:$0xff]
        %v2754 = vld [vmem:[#allocation17 + $0x11a0] sm:$0xff]
        %v2755 = vld [vmem:[#allocation17 + $0x11a8] sm:$0xff]
        %v2756 = vld [vmem:[#allocation17 + $0x11b0] sm:$0xff]
        %v2757 = vld [vmem:[#allocation17 + $0x11b8] sm:$0xff]
        %v2758 = vld [vmem:[#allocation17 + $0x11c0] sm:$0xff]
        %v2759 = vld [vmem:[#allocation17 + $0x11c8] sm:$0xff]
        %v2760 = vld [vmem:[#allocation17 + $0x11d0] sm:$0xff]
        %v2761 = vld [vmem:[#allocation17 + $0x11d8] sm:$0xff]
        %v2762 = vld [vmem:[#allocation17 + $0x11e0] sm:$0xff]
        %v2763 = vld [vmem:[#allocation17 + $0x11e8] sm:$0xff]
        %v2764 = vld [vmem:[#allocation17 + $0x11f0] sm:$0xff]
        %v2765 = vld [vmem:[#allocation17 + $0x11f8] sm:$0xff]
        %v2766 = vld [vmem:[#allocation17 + $0x1200] sm:$0xff]
        %v2767 = vld [vmem:[#allocation17 + $0x1208] sm:$0xff]
        %v2768 = vld [vmem:[#allocation17 + $0x1210] sm:$0xff]
        %v2769 = vld [vmem:[#allocation17 + $0x1218] sm:$0xff]
        %v2770 = vld [vmem:[#allocation17 + $0x1220] sm:$0xff]
        %v2771 = vld [vmem:[#allocation17 + $0x1228] sm:$0xff]
        %v2772 = vld [vmem:[#allocation17 + $0x1230] sm:$0xff]
        %v2773 = vld [vmem:[#allocation17 + $0x1238] sm:$0xff]
        %v2774 = vld [vmem:[#allocation17 + $0x1240] sm:$0xff]
        %v2775 = vld [vmem:[#allocation17 + $0x1248] sm:$0xff]
        %v2776 = vld [vmem:[#allocation17 + $0x1250] sm:$0xff]
        %v2777 = vld [vmem:[#allocation17 + $0x1258] sm:$0xff]
        %v2778 = vld [vmem:[#allocation17 + $0x1260] sm:$0xff]
        %v2779 = vld [vmem:[#allocation17 + $0x1268] sm:$0xff]
        %v2780 = vld [vmem:[#allocation17 + $0x1270] sm:$0xff]
        %v2781 = vld [vmem:[#allocation17 + $0x1278] sm:$0xff]
        %v2782 = vld [vmem:[#allocation17 + $0x1280] sm:$0xff]
        %v2783 = vld [vmem:[#allocation17 + $0x1288] sm:$0xff]
        %v2784 = vld [vmem:[#allocation17 + $0x1290] sm:$0xff]
        %v2785 = vld [vmem:[#allocation17 + $0x1298] sm:$0xff]
        %v2786 = vld [vmem:[#allocation17 + $0x12a0] sm:$0xff]
        %v2787 = vld [vmem:[#allocation17 + $0x12a8] sm:$0xff]
        %v2788 = vld [vmem:[#allocation17 + $0x12b0] sm:$0xff]
        %v2789 = vld [vmem:[#allocation17 + $0x12b8] sm:$0xff]
        %v2790 = vld [vmem:[#allocation17 + $0x12c0] sm:$0xff]
        %v2791 = vld [vmem:[#allocation17 + $0x12c8] sm:$0xff]
        %v2792 = vld [vmem:[#allocation17 + $0x12d0] sm:$0xff]
        %v2793 = vld [vmem:[#allocation17 + $0x12d8] sm:$0xff]
        %v2794 = vld [vmem:[#allocation17 + $0x12e0] sm:$0xff]
        %v2795 = vld [vmem:[#allocation17 + $0x12e8] sm:$0xff]
        %v2796 = vld [vmem:[#allocation17 + $0x12f0] sm:$0xff]
        %v2797 = vld [vmem:[#allocation17 + $0x12f8] sm:$0xff]
        %v2798 = vld [vmem:[#allocation17 + $0x1300] sm:$0xff]
        %v2799 = vld [vmem:[#allocation17 + $0x1308] sm:$0xff]
        %v2800 = vld [vmem:[#allocation17 + $0x1310] sm:$0xff]
        %v2801 = vld [vmem:[#allocation17 + $0x1318] sm:$0xff]
        %v2802 = vld [vmem:[#allocation17 + $0x1320] sm:$0xff]
        %v2803 = vld [vmem:[#allocation17 + $0x1328] sm:$0xff]
        %v2804 = vld [vmem:[#allocation17 + $0x1330] sm:$0xff]
        %v2805 = vld [vmem:[#allocation17 + $0x1338] sm:$0xff]
        %v2806 = vld [vmem:[#allocation17 + $0x1340] sm:$0xff]
        %v2807 = vld [vmem:[#allocation17 + $0x1348] sm:$0xff]
        %v2808 = vld [vmem:[#allocation17 + $0x1350] sm:$0xff]
        %v2809 = vld [vmem:[#allocation17 + $0x1358] sm:$0xff]
        %v2810 = vld [vmem:[#allocation17 + $0x1360] sm:$0xff]
        %v2811 = vld [vmem:[#allocation17 + $0x1368] sm:$0xff]
        %v2812 = vld [vmem:[#allocation17 + $0x1370] sm:$0xff]
        %v2813 = vld [vmem:[#allocation17 + $0x1378] sm:$0xff]
        %v2814 = vld [vmem:[#allocation17 + $0x1380] sm:$0xff]
        %v2815 = vld [vmem:[#allocation17 + $0x1388] sm:$0xff]
        %v2816 = vld [vmem:[#allocation17 + $0x1390] sm:$0xff]
        %v2817 = vld [vmem:[#allocation17 + $0x1398] sm:$0xff]
        %v2818 = vld [vmem:[#allocation17 + $0x13a0] sm:$0xff]
        %v2819 = vld [vmem:[#allocation17 + $0x13a8] sm:$0xff]
        %v2820 = vld [vmem:[#allocation17 + $0x13b0] sm:$0xff]
        %v2821 = vld [vmem:[#allocation17 + $0x13b8] sm:$0xff]
        %v2822 = vld [vmem:[#allocation17 + $0x13c0] sm:$0xff]
        %v2823 = vld [vmem:[#allocation17 + $0x13c8] sm:$0xff]
        %v2824 = vld [vmem:[#allocation17 + $0x13d0] sm:$0xff]
        %v2825 = vld [vmem:[#allocation17 + $0x13d8] sm:$0xff]
        %v2826 = vld [vmem:[#allocation17 + $0x13e0] sm:$0xff]
        %v2827 = vld [vmem:[#allocation17 + $0x13e8] sm:$0xff]
        %v2828 = vld [vmem:[#allocation17 + $0x13f0] sm:$0xff]
        %v2829 = vld [vmem:[#allocation17 + $0x13f8] sm:$0xff]
        %v2830 = vld [vmem:[#allocation17 + $0x1400] sm:$0xff]
        %v2831 = vld [vmem:[#allocation17 + $0x1408] sm:$0xff]
        %v2832 = vld [vmem:[#allocation17 + $0x1410] sm:$0xff]
        %v2833 = vld [vmem:[#allocation17 + $0x1418] sm:$0xff]
        %v2834 = vld [vmem:[#allocation17 + $0x1420] sm:$0xff]
        %v2835 = vld [vmem:[#allocation17 + $0x1428] sm:$0xff]
        %v2836 = vld [vmem:[#allocation17 + $0x1430] sm:$0xff]
        %v2837 = vld [vmem:[#allocation17 + $0x1438] sm:$0xff]
        %v2838 = vld [vmem:[#allocation17 + $0x1440] sm:$0xff]
        %v2839 = vld [vmem:[#allocation17 + $0x1448] sm:$0xff]
        %v2840 = vld [vmem:[#allocation17 + $0x1450] sm:$0xff]
        %v2841 = vld [vmem:[#allocation17 + $0x1458] sm:$0xff]
        %v2842 = vld [vmem:[#allocation17 + $0x1460] sm:$0xff]
        %v2843 = vld [vmem:[#allocation17 + $0x1468] sm:$0xff]
        %v2844 = vld [vmem:[#allocation17 + $0x1470] sm:$0xff]
        %v2845 = vld [vmem:[#allocation17 + $0x1478] sm:$0xff]
        %v2846 = vld [vmem:[#allocation17 + $0x1480] sm:$0xff]
        %v2847 = vld [vmem:[#allocation17 + $0x1488] sm:$0xff]
        %v2848 = vld [vmem:[#allocation17 + $0x1490] sm:$0xff]
        %v2849 = vld [vmem:[#allocation17 + $0x1498] sm:$0xff]
        %v2850 = vld [vmem:[#allocation17 + $0x14a0] sm:$0xff]
        %v2851 = vld [vmem:[#allocation17 + $0x14a8] sm:$0xff]
        %v2852 = vld [vmem:[#allocation17 + $0x14b0] sm:$0xff]
        %v2853 = vld [vmem:[#allocation17 + $0x14b8] sm:$0xff]
        %v2854 = vld [vmem:[#allocation17 + $0x14c0] sm:$0xff]
        %v2855 = vld [vmem:[#allocation17 + $0x14c8] sm:$0xff]
        %v2856 = vld [vmem:[#allocation17 + $0x14d0] sm:$0xff]
        %v2857 = vld [vmem:[#allocation17 + $0x14d8] sm:$0xff]
        %v2858 = vld [vmem:[#allocation17 + $0x14e0] sm:$0xff]
        %v2859 = vld [vmem:[#allocation17 + $0x14e8] sm:$0xff]
        %v2860 = vld [vmem:[#allocation17 + $0x14f0] sm:$0xff]
        %v2861 = vld [vmem:[#allocation17 + $0x14f8] sm:$0xff]
        %v2862 = vld [vmem:[#allocation17 + $0x1500] sm:$0xff]
        %v2863 = vld [vmem:[#allocation17 + $0x1508] sm:$0xff]
        %v2864 = vld [vmem:[#allocation17 + $0x1510] sm:$0xff]
        %v2865 = vld [vmem:[#allocation17 + $0x1518] sm:$0xff]
        %v2866 = vld [vmem:[#allocation17 + $0x1520] sm:$0xff]
        %v2867 = vld [vmem:[#allocation17 + $0x1528] sm:$0xff]
        %v2868 = vld [vmem:[#allocation17 + $0x1530] sm:$0xff]
        %v2869 = vld [vmem:[#allocation17 + $0x1538] sm:$0xff]
        %v2870 = vld [vmem:[#allocation17 + $0x1540] sm:$0xff]
        %v2871 = vld [vmem:[#allocation17 + $0x1548] sm:$0xff]
        %v2872 = vld [vmem:[#allocation17 + $0x1550] sm:$0xff]
        %v2873 = vld [vmem:[#allocation17 + $0x1558] sm:$0xff]
        %v2874 = vld [vmem:[#allocation17 + $0x1560] sm:$0xff]
        %v2875 = vld [vmem:[#allocation17 + $0x1568] sm:$0xff]
        %v2876 = vld [vmem:[#allocation17 + $0x1570] sm:$0xff]
        %v2877 = vld [vmem:[#allocation17 + $0x1578] sm:$0xff]
        %v2878 = vld [vmem:[#allocation17 + $0x1580] sm:$0xff]
        %v2879 = vld [vmem:[#allocation17 + $0x1588] sm:$0xff]
        %v2880 = vld [vmem:[#allocation17 + $0x1590] sm:$0xff]
        %v2881 = vld [vmem:[#allocation17 + $0x1598] sm:$0xff]
        %v2882 = vld [vmem:[#allocation17 + $0x15a0] sm:$0xff]
        %v2883 = vld [vmem:[#allocation17 + $0x15a8] sm:$0xff]
        %v2884 = vld [vmem:[#allocation17 + $0x15b0] sm:$0xff]
        %v2885 = vld [vmem:[#allocation17 + $0x15b8] sm:$0xff]
        %v2886 = vld [vmem:[#allocation17 + $0x15c0] sm:$0xff]
        %v2887 = vld [vmem:[#allocation17 + $0x15c8] sm:$0xff]
        %v2888 = vld [vmem:[#allocation17 + $0x15d0] sm:$0xff]
        %v2889 = vld [vmem:[#allocation17 + $0x15d8] sm:$0xff]
        %v2890 = vld [vmem:[#allocation17 + $0x15e0] sm:$0xff]
        %v2891 = vld [vmem:[#allocation17 + $0x15e8] sm:$0xff]
        %v2892 = vld [vmem:[#allocation17 + $0x15f0] sm:$0xff]
        %v2893 = vld [vmem:[#allocation17 + $0x15f8] sm:$0xff]
        %v2894 = vld [vmem:[#allocation17 + $0x1600] sm:$0xff]
        %v2895 = vld [vmem:[#allocation17 + $0x1608] sm:$0xff]
        %v2896 = vld [vmem:[#allocation17 + $0x1610] sm:$0xff]
        %v2897 = vld [vmem:[#allocation17 + $0x1618] sm:$0xff]
        %v2898 = vld [vmem:[#allocation17 + $0x1620] sm:$0xff]
        %v2899 = vld [vmem:[#allocation17 + $0x1628] sm:$0xff]
        %v2900 = vld [vmem:[#allocation17 + $0x1630] sm:$0xff]
        %v2901 = vld [vmem:[#allocation17 + $0x1638] sm:$0xff]
        %v2902 = vld [vmem:[#allocation17 + $0x1640] sm:$0xff]
        %v2903 = vld [vmem:[#allocation17 + $0x1648] sm:$0xff]
        %v2904 = vld [vmem:[#allocation17 + $0x1650] sm:$0xff]
        %v2905 = vld [vmem:[#allocation17 + $0x1658] sm:$0xff]
        %v2906 = vld [vmem:[#allocation17 + $0x1660] sm:$0xff]
        %v2907 = vld [vmem:[#allocation17 + $0x1668] sm:$0xff]
        %v2908 = vld [vmem:[#allocation17 + $0x1670] sm:$0xff]
        %v2909 = vld [vmem:[#allocation17 + $0x1678] sm:$0xff]
        %v2910 = vld [vmem:[#allocation17 + $0x1680] sm:$0xff]
        %v2911 = vld [vmem:[#allocation17 + $0x1688] sm:$0xff]
        %v2912 = vld [vmem:[#allocation17 + $0x1690] sm:$0xff]
        %v2913 = vld [vmem:[#allocation17 + $0x1698] sm:$0xff]
        %v2914 = vld [vmem:[#allocation17 + $0x16a0] sm:$0xff]
        %v2915 = vld [vmem:[#allocation17 + $0x16a8] sm:$0xff]
        %v2916 = vld [vmem:[#allocation17 + $0x16b0] sm:$0xff]
        %v2917 = vld [vmem:[#allocation17 + $0x16b8] sm:$0xff]
        %v2918 = vld [vmem:[#allocation17 + $0x16c0] sm:$0xff]
        %v2919 = vld [vmem:[#allocation17 + $0x16c8] sm:$0xff]
        %v2920 = vld [vmem:[#allocation17 + $0x16d0] sm:$0xff]
        %v2921 = vld [vmem:[#allocation17 + $0x16d8] sm:$0xff]
        %v2922 = vld [vmem:[#allocation17 + $0x16e0] sm:$0xff]
        %v2923 = vld [vmem:[#allocation17 + $0x16e8] sm:$0xff]
        %v2924 = vld [vmem:[#allocation17 + $0x16f0] sm:$0xff]
        %v2925 = vld [vmem:[#allocation17 + $0x16f8] sm:$0xff]
        %v2926 = vld [vmem:[#allocation17 + $0x1700] sm:$0xff]
        %v2927 = vld [vmem:[#allocation17 + $0x1708] sm:$0xff]
        %v2928 = vld [vmem:[#allocation17 + $0x1710] sm:$0xff]
        %v2929 = vld [vmem:[#allocation17 + $0x1718] sm:$0xff]
        %v2930 = vld [vmem:[#allocation17 + $0x1720] sm:$0xff]
        %v2931 = vld [vmem:[#allocation17 + $0x1728] sm:$0xff]
        %v2932 = vld [vmem:[#allocation17 + $0x1730] sm:$0xff]
        %v2933 = vld [vmem:[#allocation17 + $0x1738] sm:$0xff]
        %v2934 = vld [vmem:[#allocation17 + $0x1740] sm:$0xff]
        %v2935 = vld [vmem:[#allocation17 + $0x1748] sm:$0xff]
        %v2936 = vld [vmem:[#allocation17 + $0x1750] sm:$0xff]
        %v2937 = vld [vmem:[#allocation17 + $0x1758] sm:$0xff]
        %v2938 = vld [vmem:[#allocation17 + $0x1760] sm:$0xff]
        %v2939 = vld [vmem:[#allocation17 + $0x1768] sm:$0xff]
        %v2940 = vld [vmem:[#allocation17 + $0x1770] sm:$0xff]
        %v2941 = vld [vmem:[#allocation17 + $0x1778] sm:$0xff]
        %v2942 = vld [vmem:[#allocation17 + $0x1780] sm:$0xff]
        %v2943 = vld [vmem:[#allocation17 + $0x1788] sm:$0xff]
        %v2944 = vld [vmem:[#allocation17 + $0x1790] sm:$0xff]
        %v2945 = vld [vmem:[#allocation17 + $0x1798] sm:$0xff]
        %v2946 = vld [vmem:[#allocation17 + $0x17a0] sm:$0xff]
        %v2947 = vld [vmem:[#allocation17 + $0x17a8] sm:$0xff]
        %v2948 = vld [vmem:[#allocation17 + $0x17b0] sm:$0xff]
        %v2949 = vld [vmem:[#allocation17 + $0x17b8] sm:$0xff]
        %v2950 = vld [vmem:[#allocation17 + $0x17c0] sm:$0xff]
        %v2951 = vld [vmem:[#allocation17 + $0x17c8] sm:$0xff]
        %v2952 = vld [vmem:[#allocation17 + $0x17d0] sm:$0xff]
        %v2953 = vld [vmem:[#allocation17 + $0x17d8] sm:$0xff]
        %v2954 = vld [vmem:[#allocation17 + $0x17e0] sm:$0xff]
        %v2955 = vld [vmem:[#allocation17 + $0x17e8] sm:$0xff]
        %v2956 = vld [vmem:[#allocation17 + $0x17f0] sm:$0xff]
        %v2957 = vld [vmem:[#allocation17 + $0x17f8] sm:$0xff]
        %v2958 = vld [vmem:[#allocation17 + $0x1800] sm:$0xff]
        %v2959 = vld [vmem:[#allocation17 + $0x1808] sm:$0xff]
        %v2960 = vld [vmem:[#allocation17 + $0x1810] sm:$0xff]
        %v2961 = vld [vmem:[#allocation17 + $0x1818] sm:$0xff]
        %v2962 = vld [vmem:[#allocation17 + $0x1820] sm:$0xff]
        %v2963 = vld [vmem:[#allocation17 + $0x1828] sm:$0xff]
        %v2964 = vld [vmem:[#allocation17 + $0x1830] sm:$0xff]
        %v2965 = vld [vmem:[#allocation17 + $0x1838] sm:$0xff]
        %v2966 = vld [vmem:[#allocation17 + $0x1840] sm:$0xff]
        %v2967 = vld [vmem:[#allocation17 + $0x1848] sm:$0xff]
        %v2968 = vld [vmem:[#allocation17 + $0x1850] sm:$0xff]
        %v2969 = vld [vmem:[#allocation17 + $0x1858] sm:$0xff]
        %v2970 = vld [vmem:[#allocation17 + $0x1860] sm:$0xff]
        %v2971 = vld [vmem:[#allocation17 + $0x1868] sm:$0xff]
        %v2972 = vld [vmem:[#allocation17 + $0x1870] sm:$0xff]
        %v2973 = vld [vmem:[#allocation17 + $0x1878] sm:$0xff]
        %v2974 = vld [vmem:[#allocation17 + $0x1880] sm:$0xff]
        %v2975 = vld [vmem:[#allocation17 + $0x1888] sm:$0xff]
        %v2976 = vld [vmem:[#allocation17 + $0x1890] sm:$0xff]
        %v2977 = vld [vmem:[#allocation17 + $0x1898] sm:$0xff]
        %v2978 = vld [vmem:[#allocation17 + $0x18a0] sm:$0xff]
        %v2979 = vld [vmem:[#allocation17 + $0x18a8] sm:$0xff]
        %v2980 = vld [vmem:[#allocation17 + $0x18b0] sm:$0xff]
        %v2981 = vld [vmem:[#allocation17 + $0x18b8] sm:$0xff]
        %v2982 = vld [vmem:[#allocation17 + $0x18c0] sm:$0xff]
        %v2983 = vld [vmem:[#allocation17 + $0x18c8] sm:$0xff]
        %v2984 = vld [vmem:[#allocation17 + $0x18d0] sm:$0xff]
        %v2985 = vld [vmem:[#allocation17 + $0x18d8] sm:$0xff]
        %v2986 = vld [vmem:[#allocation17 + $0x18e0] sm:$0xff]
        %v2987 = vld [vmem:[#allocation17 + $0x18e8] sm:$0xff]
        %v2988 = vld [vmem:[#allocation17 + $0x18f0] sm:$0xff]
        %v2989 = vld [vmem:[#allocation17 + $0x18f8] sm:$0xff]
        %v2990 = vld [vmem:[#allocation17 + $0x1900] sm:$0xff]
        %v2991 = vld [vmem:[#allocation17 + $0x1908] sm:$0xff]
        %v2992 = vld [vmem:[#allocation17 + $0x1910] sm:$0xff]
        %v2993 = vld [vmem:[#allocation17 + $0x1918] sm:$0xff]
        %v2994 = vld [vmem:[#allocation17 + $0x1920] sm:$0xff]
        %v2995 = vld [vmem:[#allocation17 + $0x1928] sm:$0xff]
        %v2996 = vld [vmem:[#allocation17 + $0x1930] sm:$0xff]
        %v2997 = vld [vmem:[#allocation17 + $0x1938] sm:$0xff]
        %v2998 = vld [vmem:[#allocation17 + $0x1940] sm:$0xff]
        %v2999 = vld [vmem:[#allocation17 + $0x1948] sm:$0xff]
        %v3000 = vld [vmem:[#allocation17 + $0x1950] sm:$0xff]
        %v3001 = vld [vmem:[#allocation17 + $0x1958] sm:$0xff]
        %v3002 = vld [vmem:[#allocation17 + $0x1960] sm:$0xff]
        %v3003 = vld [vmem:[#allocation17 + $0x1968] sm:$0xff]
        %v3004 = vld [vmem:[#allocation17 + $0x1970] sm:$0xff]
        %v3005 = vld [vmem:[#allocation17 + $0x1978] sm:$0xff]
        %v3006 = vld [vmem:[#allocation17 + $0x1980] sm:$0xff]
        %v3007 = vld [vmem:[#allocation17 + $0x1988] sm:$0xff]
        %v3008 = vld [vmem:[#allocation17 + $0x1990] sm:$0xff]
        %v3009 = vld [vmem:[#allocation17 + $0x1998] sm:$0xff]
        %v3010 = vld [vmem:[#allocation17 + $0x19a0] sm:$0xff]
        %v3011 = vld [vmem:[#allocation17 + $0x19a8] sm:$0xff]
        %v3012 = vld [vmem:[#allocation17 + $0x19b0] sm:$0xff]
        %v3013 = vld [vmem:[#allocation17 + $0x19b8] sm:$0xff]
        %v3014 = vld [vmem:[#allocation17 + $0x19c0] sm:$0xff]
        %v3015 = vld [vmem:[#allocation17 + $0x19c8] sm:$0xff]
        %v3016 = vld [vmem:[#allocation17 + $0x19d0] sm:$0xff]
        %v3017 = vld [vmem:[#allocation17 + $0x19d8] sm:$0xff]
        %v3018 = vld [vmem:[#allocation17 + $0x19e0] sm:$0xff]
        %v3019 = vld [vmem:[#allocation17 + $0x19e8] sm:$0xff]
        %v3020 = vld [vmem:[#allocation17 + $0x19f0] sm:$0xff]
        %v3021 = vld [vmem:[#allocation17 + $0x19f8] sm:$0xff]
        %v3022 = vld [vmem:[#allocation17 + $0x1a00] sm:$0xff]
        %v3023 = vld [vmem:[#allocation17 + $0x1a08] sm:$0xff]
        %v3024 = vld [vmem:[#allocation17 + $0x1a10] sm:$0xff]
        %v3025 = vld [vmem:[#allocation17 + $0x1a18] sm:$0xff]
        %v3026 = vld [vmem:[#allocation17 + $0x1a20] sm:$0xff]
        %v3027 = vld [vmem:[#allocation17 + $0x1a28] sm:$0xff]
        %v3028 = vld [vmem:[#allocation17 + $0x1a30] sm:$0xff]
        %v3029 = vld [vmem:[#allocation17 + $0x1a38] sm:$0xff]
        %v3030 = vld [vmem:[#allocation17 + $0x1a40] sm:$0xff]
        %v3031 = vld [vmem:[#allocation17 + $0x1a48] sm:$0xff]
        %v3032 = vld [vmem:[#allocation17 + $0x1a50] sm:$0xff]
        %v3033 = vld [vmem:[#allocation17 + $0x1a58] sm:$0xff]
        %v3034 = vld [vmem:[#allocation17 + $0x1a60] sm:$0xff]
        %v3035 = vld [vmem:[#allocation17 + $0x1a68] sm:$0xff]
        %v3036 = vld [vmem:[#allocation17 + $0x1a70] sm:$0xff]
        %v3037 = vld [vmem:[#allocation17 + $0x1a78] sm:$0xff]
        %v3038 = vld [vmem:[#allocation17 + $0x1a80] sm:$0xff]
        %v3039 = vld [vmem:[#allocation17 + $0x1a88] sm:$0xff]
        %v3040 = vld [vmem:[#allocation17 + $0x1a90] sm:$0xff]
        %v3041 = vld [vmem:[#allocation17 + $0x1a98] sm:$0xff]
        %v3042 = vld [vmem:[#allocation17 + $0x1aa0] sm:$0xff]
        %v3043 = vld [vmem:[#allocation17 + $0x1aa8] sm:$0xff]
        %v3044 = vld [vmem:[#allocation17 + $0x1ab0] sm:$0xff]
        %v3045 = vld [vmem:[#allocation17 + $0x1ab8] sm:$0xff]
        %v3046 = vld [vmem:[#allocation17 + $0x1ac0] sm:$0xff]
        %v3047 = vld [vmem:[#allocation17 + $0x1ac8] sm:$0xff]
        %v3048 = vld [vmem:[#allocation17 + $0x1ad0] sm:$0xff]
        %v3049 = vld [vmem:[#allocation17 + $0x1ad8] sm:$0xff]
        %v3050 = vld [vmem:[#allocation17 + $0x1ae0] sm:$0xff]
        %v3051 = vld [vmem:[#allocation17 + $0x1ae8] sm:$0xff]
        %v3052 = vld [vmem:[#allocation17 + $0x1af0] sm:$0xff]
        %v3053 = vld [vmem:[#allocation17 + $0x1af8] sm:$0xff]
        %v3054 = vld [vmem:[#allocation17 + $0x1b00] sm:$0xff]
        %v3055 = vld [vmem:[#allocation17 + $0x1b08] sm:$0xff]
        %v3056 = vld [vmem:[#allocation17 + $0x1b10] sm:$0xff]
        %v3057 = vld [vmem:[#allocation17 + $0x1b18] sm:$0xff]
        %v3058 = vld [vmem:[#allocation17 + $0x1b20] sm:$0xff]
        %v3059 = vld [vmem:[#allocation17 + $0x1b28] sm:$0xff]
        %v3060 = vld [vmem:[#allocation17 + $0x1b30] sm:$0xff]
        %v3061 = vld [vmem:[#allocation17 + $0x1b38] sm:$0xff]
        %v3062 = vld [vmem:[#allocation17 + $0x1b40] sm:$0xff]
        %v3063 = vld [vmem:[#allocation17 + $0x1b48] sm:$0xff]
        %v3064 = vld [vmem:[#allocation17 + $0x1b50] sm:$0xff]
        %v3065 = vld [vmem:[#allocation17 + $0x1b58] sm:$0xff]
        %v3066 = vld [vmem:[#allocation17 + $0x1b60] sm:$0xff]
        %v3067 = vld [vmem:[#allocation17 + $0x1b68] sm:$0xff]
        %v3068 = vld [vmem:[#allocation17 + $0x1b70] sm:$0xff]
        %v3069 = vld [vmem:[#allocation17 + $0x1b78] sm:$0xff]
        %v3070 = vld [vmem:[#allocation17 + $0x1b80] sm:$0xff]
        %v3071 = vld [vmem:[#allocation17 + $0x1b88] sm:$0xff]
        %v3072 = vld [vmem:[#allocation17 + $0x1b90] sm:$0xff]
        %v3073 = vld [vmem:[#allocation17 + $0x1b98] sm:$0xff]
        %v3074 = vld [vmem:[#allocation17 + $0x1ba0] sm:$0xff]
        %v3075 = vld [vmem:[#allocation17 + $0x1ba8] sm:$0xff]
        %v3076 = vld [vmem:[#allocation17 + $0x1bb0] sm:$0xff]
        %v3077 = vld [vmem:[#allocation17 + $0x1bb8] sm:$0xff]
        %v3078 = vld [vmem:[#allocation17 + $0x1bc0] sm:$0xff]
        %v3079 = vld [vmem:[#allocation17 + $0x1bc8] sm:$0xff]
        %v3080 = vld [vmem:[#allocation17 + $0x1bd0] sm:$0xff]
        %v3081 = vld [vmem:[#allocation17 + $0x1bd8] sm:$0xff]
        %v3082 = vld [vmem:[#allocation17 + $0x1be0] sm:$0xff]
        %v3083 = vld [vmem:[#allocation17 + $0x1be8] sm:$0xff]
        %v3084 = vld [vmem:[#allocation17 + $0x1bf0] sm:$0xff]
        %v3085 = vld [vmem:[#allocation17 + $0x1bf8] sm:$0xff]
        %v3086 = vld [vmem:[#allocation19] sm:$0xff]
        %v3088 = vlaneseq
        %v3089 = vshrl.u32 %v3088, 7
        %v3090 = vsub.s32 0, %v3089
        %v3091 = vrot.slane %v3086, %v3090
        %v3092 = vlaneseq
        %v3093 = vshrl.u32 %v3092, 7
        %v3094 = vsub.s32 1, %v3093
        %v3095 = vrot.slane %v3086, %v3094
        %v3096 = vlaneseq
        %v3097 = vshrl.u32 %v3096, 7
        %v3098 = vsub.s32 2, %v3097
        %v3099 = vrot.slane %v3086, %v3098
        %v3100 = vlaneseq
        %v3101 = vshrl.u32 %v3100, 7
        %v3102 = vsub.s32 3, %v3101
        %v3103 = vrot.slane %v3086, %v3102
        %v3104 = vlaneseq
        %v3105 = vshrl.u32 %v3104, 7
        %v3106 = vsub.s32 4, %v3105
        %v3107 = vrot.slane %v3086, %v3106
        %v3108 = vlaneseq
        %v3109 = vshrl.u32 %v3108, 7
        %v3110 = vsub.s32 5, %v3109
        %v3111 = vrot.slane %v3086, %v3110
        %v3112 = vlaneseq
        %v3113 = vshrl.u32 %v3112, 7
        %v3114 = vsub.s32 6, %v3113
        %v3115 = vrot.slane %v3086, %v3114
        %3123 = vmatprep.subr.mxu0 %v2191
        %3124 = vmatpush1.msra.mxu0 %v2190
        %3125 = vmatprep.subr.mxu0 %v2198
        %3126 = vmatpush1.msra.mxu0 %v2197
        %3127 = vmatprep.subr.mxu0 %v2205
        %3128 = vmatpush1.msra.mxu0 %v2204
        %3129 = vmatprep.subr.mxu0 %v2212
        %3130 = vmatpush1.msra.mxu0 %v2211
        %3131 = vmatprep.subr.mxu0 %v2219
        %3132 = vmatpush1.msra.mxu0 %v2218
        %3133 = vmatprep.subr.mxu0 %v2226
        %3134 = vmatpush1.msra.mxu0 %v2225
        %3135 = vmatprep.subr.mxu0 %v2233
        %3136 = vmatpush1.msra.mxu0 %v2232
        %3137 = vmatprep.subr.mxu0 %v2240
        %3138 = vmatpush1.msra.mxu0 %v2239
        %3139 = vmatprep.subr.mxu0 %v2247
        %3140 = vmatpush1.msra.mxu0 %v2246
        %3141 = vmatprep.subr.mxu0 %v2254
        %3142 = vmatpush1.msra.mxu0 %v2253
        %3143 = vmatprep.subr.mxu0 %v2261
        %3144 = vmatpush1.msra.mxu0 %v2260
        %3145 = vmatprep.subr.mxu0 %v2268
        %3146 = vmatpush1.msra.mxu0 %v2267
        %3147 = vmatprep.subr.mxu0 %v2275
        %3148 = vmatpush1.msra.mxu0 %v2274
        %3149 = vmatprep.subr.mxu0 %v2282
        %3150 = vmatpush1.msra.mxu0 %v2281
        %3151 = vmatprep.subr.mxu0 %v2289
        %3152 = vmatpush1.msra.mxu0 %v2288
        %3153 = vmatprep.subr.mxu0 %v2296
        %3154 = vmatpush1.msra.mxu0 %v2295
        %3155 = vmatprep.subr.mxu0 %v2303
        %3156 = vmatpush1.msra.mxu0 %v2302
        %3157 = vmatprep.subr.mxu0 %v2310
        %3158 = vmatpush1.msra.mxu0 %v2309
        %3159 = vmatprep.subr.mxu0 %v2317
        %3160 = vmatpush1.msra.mxu0 %v2316
        %3161 = vmatprep.subr.mxu0 %v2324
        %3162 = vmatpush1.msra.mxu0 %v2323
        %3163 = vmatprep.subr.mxu0 %v2331
        %3164 = vmatpush1.msra.mxu0 %v2330
        %3165 = vmatprep.subr.mxu0 %v2338
        %3166 = vmatpush1.msra.mxu0 %v2337
        %3167 = vmatprep.subr.mxu0 %v2345
        %3168 = vmatpush1.msra.mxu0 %v2344
        %3169 = vmatprep.subr.mxu0 %v2352
        %3170 = vmatpush1.msra.mxu0 %v2351
        %3171 = vmatprep.subr.mxu0 %v2359
        %3172 = vmatpush1.msra.mxu0 %v2358
        %3173 = vmatprep.subr.mxu0 %v2366
        %3174 = vmatpush1.msra.mxu0 %v2365
        %3175 = vmatprep.subr.mxu0 %v2373
        %3176 = vmatpush1.msra.mxu0 %v2372
        %3177 = vmatprep.subr.mxu0 %v2380
        %3178 = vmatpush1.msra.mxu0 %v2379
        %3179 = vmatprep.subr.mxu0 %v2387
        %3180 = vmatpush1.msra.mxu0 %v2386
        %3181 = vmatprep.subr.mxu0 %v2394
        %3182 = vmatpush1.msra.mxu0 %v2393
        %3183 = vmatprep.subr.mxu0 %v2401
        %3184 = vmatpush1.msra.mxu0 %v2400
        %3185 = vmatprep.subr.mxu0 %v2408
        %3186 = vmatpush1.msra.mxu0 %v2407
        %3187 = vmatprep.mubr.f32.mxu0 %v2183
        %3188 = vmatmul.mubr.f32.gmra.mrb[0].mxu0 %v2182
        %v3189 = vpop.f32.mrb[0].mxu0
        %v3190 = vadd.f32 %v3091, %v3189
        %v3191 = vpop.f32.mrb[0].mxu0
        %v3192 = vadd.f32 %v3095, %v3191
        %3193 = vdwg.mxu0
        %3194 = vmatprep.subr.mxu0 %v2415
        %3195 = vmatpush1.msra.mxu0 %v2414
        %3196 = vmatprep.subr.mxu0 %v2422
        %3197 = vmatpush1.msra.mxu0 %v2421
        %3198 = vmatprep.subr.mxu0 %v2429
        %3199 = vmatpush1.msra.mxu0 %v2428
        %3200 = vmatprep.subr.mxu0 %v2436
        %3201 = vmatpush1.msra.mxu0 %v2435
        %3202 = vmatprep.subr.mxu0 %v2443
        %3203 = vmatpush1.msra.mxu0 %v2442
        %3204 = vmatprep.subr.mxu0 %v2450
        %3205 = vmatpush1.msra.mxu0 %v2449
        %3206 = vmatprep.subr.mxu0 %v2457
        %3207 = vmatpush1.msra.mxu0 %v2456
        %3208 = vmatprep.subr.mxu0 %v2464
        %3209 = vmatpush1.msra.mxu0 %v2463
        %3210 = vmatprep.subr.mxu0 %v2471
        %3211 = vmatpush1.msra.mxu0 %v2470
        %3212 = vmatprep.subr.mxu0 %v2478
        %3213 = vmatpush1.msra.mxu0 %v2477
        %3214 = vmatprep.subr.mxu0 %v2485
        %3215 = vmatpush1.msra.mxu0 %v2484
        %3216 = vmatprep.subr.mxu0 %v2492
        %3217 = vmatpush1.msra.mxu0 %v2491
        %3218 = vmatprep.subr.mxu0 %v2499
        %3219 = vmatpush1.msra.mxu0 %v2498
        %3220 = vmatprep.subr.mxu0 %v2506
        %3221 = vmatpush1.msra.mxu0 %v2505
        %3222 = vmatprep.subr.mxu0 %v2513
        %3223 = vmatpush1.msra.mxu0 %v2512
        %3224 = vmatprep.subr.mxu0 %v2520
        %3225 = vmatpush1.msra.mxu0 %v2519
        %3226 = vmatprep.subr.mxu0 %v2527
        %3227 = vmatpush1.msra.mxu0 %v2526
        %3228 = vmatprep.subr.mxu0 %v2534
        %3229 = vmatpush1.msra.mxu0 %v2533
        %3230 = vmatprep.subr.mxu0 %v2541
        %3231 = vmatpush1.msra.mxu0 %v2540
        %3232 = vmatprep.subr.mxu0 %v2548
        %3233 = vmatpush1.msra.mxu0 %v2547
        %3234 = vmatprep.subr.mxu0 %v2555
        %3235 = vmatpush1.msra.mxu0 %v2554
        %3236 = vmatprep.subr.mxu0 %v2562
        %3237 = vmatpush1.msra.mxu0 %v2561
        %3238 = vmatprep.subr.mxu0 %v2569
        %3239 = vmatpush1.msra.mxu0 %v2568
        %3240 = vmatprep.subr.mxu0 %v2576
        %3241 = vmatpush1.msra.mxu0 %v2575
        %3242 = vmatprep.subr.mxu0 %v2583
        %3243 = vmatpush1.msra.mxu0 %v2582
        %3244 = vmatprep.subr.mxu0 %v2590
        %3245 = vmatpush1.msra.mxu0 %v2589
        %3246 = vmatprep.subr.mxu0 %v2597
        %3247 = vmatpush1.msra.mxu0 %v2596
        %3248 = vmatprep.subr.mxu0 %v2604
        %3249 = vmatpush1.msra.mxu0 %v2603
        %3250 = vmatprep.subr.mxu0 %v2611
        %3251 = vmatpush1.msra.mxu0 %v2610
        %3252 = vmatprep.subr.mxu0 %v2618
        %3253 = vmatpush1.msra.mxu0 %v2617
        %3254 = vmatprep.subr.mxu0 %v2625
        %3255 = vmatpush1.msra.mxu0 %v2624
        %3256 = vmatprep.subr.mxu0 %v2632
        %3257 = vmatpush1.msra.mxu0 %v2631
        %3258 = vmatprep.mubr.f32.mxu0 %v2185
        %3259 = vmatmul.mubr.f32.gmra.mrb[0].mxu0 %v2184
        %v3260 = vpop.f32.mrb[0].mxu0
        %v3261 = vadd.f32 %v3190, %v3260
        %v3262 = vpop.f32.mrb[0].mxu0
        %v3263 = vadd.f32 %v3192, %v3262
        %3264 = vdwg.mxu0
        %3265 = vmatprep.subr.mxu0 %v2639
        %3266 = vmatpush1.msra.mxu0 %v2638
        %3267 = vmatprep.subr.mxu0 %v2646
        %3268 = vmatpush1.msra.mxu0 %v2645
        %3269 = vmatprep.subr.mxu0 %v2653
        %3270 = vmatpush1.msra.mxu0 %v2652
        %3271 = vmatprep.subr.mxu0 %v2660
        %3272 = vmatpush1.msra.mxu0 %v2659
        %3273 = vmatprep.subr.mxu0 %v2667
        %3274 = vmatpush1.msra.mxu0 %v2666
        %3275 = vmatprep.subr.mxu0 %v2674
        %3276 = vmatpush1.msra.mxu0 %v2673
        %3277 = vmatprep.subr.mxu0 %v2681
        %3278 = vmatpush1.msra.mxu0 %v2680
        %3279 = vmatprep.subr.mxu0 %v2688
        %3280 = vmatpush1.msra.mxu0 %v2687
        %3281 = vmatprep.subr.mxu0 %v2695
        %3282 = vmatpush1.msra.mxu0 %v2694
        %3283 = vmatprep.subr.mxu0 %v2702
        %3284 = vmatpush1.msra.mxu0 %v2701
        %3285 = vmatprep.subr.mxu0 %v2709
        %3286 = vmatpush1.msra.mxu0 %v2708
        %3287 = vmatprep.subr.mxu0 %v2716
        %3288 = vmatpush1.msra.mxu0 %v2715
        %3289 = vmatprep.subr.mxu0 %v2723
        %3290 = vmatpush1.msra.mxu0 %v2722
        %3291 = vmatprep.subr.mxu0 %v2730
        %3292 = vmatpush1.msra.mxu0 %v2729
        %3293 = vmatprep.subr.mxu0 %v2737
        %3294 = vmatpush1.msra.mxu0 %v2736
        %3295 = vmatprep.subr.mxu0 %v2744
        %3296 = vmatpush1.msra.mxu0 %v2743
        %3297 = vmatprep.subr.mxu0 %v2751
        %3298 = vmatpush1.msra.mxu0 %v2750
        %3299 = vmatprep.subr.mxu0 %v2758
        %3300 = vmatpush1.msra.mxu0 %v2757
        %3301 = vmatprep.subr.mxu0 %v2765
        %3302 = vmatpush1.msra.mxu0 %v2764
        %3303 = vmatprep.subr.mxu0 %v2772
        %3304 = vmatpush1.msra.mxu0 %v2771
        %3305 = vmatprep.subr.mxu0 %v2779
        %3306 = vmatpush1.msra.mxu0 %v2778
        %3307 = vmatprep.subr.mxu0 %v2786
        %3308 = vmatpush1.msra.mxu0 %v2785
        %3309 = vmatprep.subr.mxu0 %v2793
        %3310 = vmatpush1.msra.mxu0 %v2792
        %3311 = vmatprep.subr.mxu0 %v2800
        %3312 = vmatpush1.msra.mxu0 %v2799
        %3313 = vmatprep.subr.mxu0 %v2807
        %3314 = vmatpush1.msra.mxu0 %v2806
        %3315 = vmatprep.subr.mxu0 %v2814
        %3316 = vmatpush1.msra.mxu0 %v2813
        %3317 = vmatprep.subr.mxu0 %v2821
        %3318 = vmatpush1.msra.mxu0 %v2820
        %3319 = vmatprep.subr.mxu0 %v2828
        %3320 = vmatpush1.msra.mxu0 %v2827
        %3321 = vmatprep.subr.mxu0 %v2835
        %3322 = vmatpush1.msra.mxu0 %v2834
        %3323 = vmatprep.subr.mxu0 %v2842
        %3324 = vmatpush1.msra.mxu0 %v2841
        %3325 = vmatprep.subr.mxu0 %v2849
        %3326 = vmatpush1.msra.mxu0 %v2848
        %3327 = vmatprep.subr.mxu0 %v2856
        %3328 = vmatpush1.msra.mxu0 %v2855
        %3329 = vmatprep.mubr.f32.mxu0 %v2187
        %3330 = vmatmul.mubr.f32.gmra.mrb[0].mxu0 %v2186
        %v3331 = vpop.f32.mrb[0].mxu0
        %v3332 = vadd.f32 %v3261, %v3331
        %v3333 = vpop.f32.mrb[0].mxu0
        %v3334 = vadd.f32 %v3263, %v3333
        %3335 = vdwg.mxu0
        %3336 = vmatprep.subr.mxu0 %v2863
        %3337 = vmatpush1.msra.mxu0 %v2862
        %3338 = vmatprep.subr.mxu0 %v2870
        %3339 = vmatpush1.msra.mxu0 %v2869
        %3340 = vmatprep.subr.mxu0 %v2877
        %3341 = vmatpush1.msra.mxu0 %v2876
        %3342 = vmatprep.subr.mxu0 %v2884
        %3343 = vmatpush1.msra.mxu0 %v2883
        %3344 = vmatprep.subr.mxu0 %v2891
        %3345 = vmatpush1.msra.mxu0 %v2890
        %3346 = vmatprep.subr.mxu0 %v2898
        %3347 = vmatpush1.msra.mxu0 %v2897
        %3348 = vmatprep.subr.mxu0 %v2905
        %3349 = vmatpush1.msra.mxu0 %v2904
        %3350 = vmatprep.subr.mxu0 %v2912
        %3351 = vmatpush1.msra.mxu0 %v2911
        %3352 = vmatprep.subr.mxu0 %v2919
        %3353 = vmatpush1.msra.mxu0 %v2918
        %3354 = vmatprep.subr.mxu0 %v2926
        %3355 = vmatpush1.msra.mxu0 %v2925
        %3356 = vmatprep.subr.mxu0 %v2933
        %3357 = vmatpush1.msra.mxu0 %v2932
        %3358 = vmatprep.subr.mxu0 %v2940
        %3359 = vmatpush1.msra.mxu0 %v2939
        %3360 = vmatprep.subr.mxu0 %v2947
        %3361 = vmatpush1.msra.mxu0 %v2946
        %3362 = vmatprep.subr.mxu0 %v2954
        %3363 = vmatpush1.msra.mxu0 %v2953
        %3364 = vmatprep.subr.mxu0 %v2961
        %3365 = vmatpush1.msra.mxu0 %v2960
        %3366 = vmatprep.subr.mxu0 %v2968
        %3367 = vmatpush1.msra.mxu0 %v2967
        %3368 = vmatprep.subr.mxu0 %v2975
        %3369 = vmatpush1.msra.mxu0 %v2974
        %3370 = vmatprep.subr.mxu0 %v2982
        %3371 = vmatpush1.msra.mxu0 %v2981
        %3372 = vmatprep.subr.mxu0 %v2989
        %3373 = vmatpush1.msra.mxu0 %v2988
        %3374 = vmatprep.subr.mxu0 %v2996
        %3375 = vmatpush1.msra.mxu0 %v2995
        %3376 = vmatprep.subr.mxu0 %v3003
        %3377 = vmatpush1.msra.mxu0 %v3002
        %3378 = vmatprep.subr.mxu0 %v3010
        %3379 = vmatpush1.msra.mxu0 %v3009
        %3380 = vmatprep.subr.mxu0 %v3017
        %3381 = vmatpush1.msra.mxu0 %v3016
        %3382 = vmatprep.subr.mxu0 %v3024
        %3383 = vmatpush1.msra.mxu0 %v3023
        %3384 = vmatprep.subr.mxu0 %v3031
        %3385 = vmatpush1.msra.mxu0 %v3030
        %3386 = vmatprep.subr.mxu0 %v3038
        %3387 = vmatpush1.msra.mxu0 %v3037
        %3388 = vmatprep.subr.mxu0 %v3045
        %3389 = vmatpush1.msra.mxu0 %v3044
        %3390 = vmatprep.subr.mxu0 %v3052
        %3391 = vmatpush1.msra.mxu0 %v3051
        %3392 = vmatprep.subr.mxu0 %v3059
        %3393 = vmatpush1.msra.mxu0 %v3058
        %3394 = vmatprep.subr.mxu0 %v3066
        %3395 = vmatpush1.msra.mxu0 %v3065
        %3396 = vmatprep.subr.mxu0 %v3073
        %3397 = vmatpush1.msra.mxu0 %v3072
        %3398 = vmatprep.subr.mxu0 %v3080
        %3399 = vmatpush1.msra.mxu0 %v3079
        %3400 = vmatprep.mubr.f32.mxu0 %v2189
        %3401 = vmatmul.mubr.f32.gmra.mrb[0].mxu0 %v2188
        %v3402 = vpop.f32.mrb[0].mxu0
        %v3403 = vadd.f32 %v3332, %v3402
        %v3404 = vpop.f32.mrb[0].mxu0
        %v3405 = vadd.f32 %v3334, %v3404
        %3406 = vdwg.mxu0
        %3407 = vmatprep.subr.mxu0 %v2193
        %3408 = vmatpush1.msra.mxu0 %v2192
        %3409 = vmatprep.subr.mxu0 %v2200
        %3410 = vmatpush1.msra.mxu0 %v2199
        %3411 = vmatprep.subr.mxu0 %v2207
        %3412 = vmatpush1.msra.mxu0 %v2206
        %3413 = vmatprep.subr.mxu0 %v2214
        %3414 = vmatpush1.msra.mxu0 %v2213
        %3415 = vmatprep.subr.mxu0 %v2221
        %3416 = vmatpush1.msra.mxu0 %v2220
        %3417 = vmatprep.subr.mxu0 %v2228
        %3418 = vmatpush1.msra.mxu0 %v2227
        %3419 = vmatprep.subr.mxu0 %v2235
        %3420 = vmatpush1.msra.mxu0 %v2234
        %3421 = vmatprep.subr.mxu0 %v2242
        %3422 = vmatpush1.msra.mxu0 %v2241
        %3423 = vmatprep.subr.mxu0 %v2249
        %3424 = vmatpush1.msra.mxu0 %v2248
        %3425 = vmatprep.subr.mxu0 %v2256
        %3426 = vmatpush1.msra.mxu0 %v2255
        %3427 = vmatprep.subr.mxu0 %v2263
        %3428 = vmatpush1.msra.mxu0 %v2262
        %3429 = vmatprep.subr.mxu0 %v2270
        %3430 = vmatpush1.msra.mxu0 %v2269
        %3431 = vmatprep.subr.mxu0 %v2277
        %3432 = vmatpush1.msra.mxu0 %v2276
        %3433 = vmatprep.subr.mxu0 %v2284
        %3434 = vmatpush1.msra.mxu0 %v2283
        %3435 = vmatprep.subr.mxu0 %v2291
        %3436 = vmatpush1.msra.mxu0 %v2290
        %3437 = vmatprep.subr.mxu0 %v2298
        %3438 = vmatpush1.msra.mxu0 %v2297
        %3439 = vmatprep.subr.mxu0 %v2305
        %3440 = vmatpush1.msra.mxu0 %v2304
        %3441 = vmatprep.subr.mxu0 %v2312
        %3442 = vmatpush1.msra.mxu0 %v2311
        %3443 = vmatprep.subr.mxu0 %v2319
        %3444 = vmatpush1.msra.mxu0 %v2318
        %3445 = vmatprep.subr.mxu0 %v2326
        %3446 = vmatpush1.msra.mxu0 %v2325
        %3447 = vmatprep.subr.mxu0 %v2333
        %3448 = vmatpush1.msra.mxu0 %v2332
        %3449 = vmatprep.subr.mxu0 %v2340
        %3450 = vmatpush1.msra.mxu0 %v2339
        %3451 = vmatprep.subr.mxu0 %v2347
        %3452 = vmatpush1.msra.mxu0 %v2346
        %3453 = vmatprep.subr.mxu0 %v2354
        %3454 = vmatpush1.msra.mxu0 %v2353
        %3455 = vmatprep.subr.mxu0 %v2361
        %3456 = vmatpush1.msra.mxu0 %v2360
        %3457 = vmatprep.subr.mxu0 %v2368
        %3458 = vmatpush1.msra.mxu0 %v2367
        %3459 = vmatprep.subr.mxu0 %v2375
        %3460 = vmatpush1.msra.mxu0 %v2374
        %3461 = vmatprep.subr.mxu0 %v2382
        %3462 = vmatpush1.msra.mxu0 %v2381
        %3463 = vmatprep.subr.mxu0 %v2389
        %3464 = vmatpush1.msra.mxu0 %v2388
        %3465 = vmatprep.subr.mxu0 %v2396
        %3466 = vmatpush1.msra.mxu0 %v2395
        %3467 = vmatprep.subr.mxu0 %v2403
        %3468 = vmatpush1.msra.mxu0 %v2402
        %3469 = vmatprep.subr.mxu0 %v2410
        %3470 = vmatpush1.msra.mxu0 %v2409
        %3471 = vmatprep.mubr.f32.mxu0 %v2183
        %3472 = vmatmul.mubr.f32.gmra.mrb[0].mxu0 %v2182
        %v3473 = vpop.f32.mrb[0].mxu0
        %v3474 = vadd.f32 %v3099, %v3473
        %v3475 = vpop.f32.mrb[0].mxu0
        %v3476 = vadd.f32 %v3103, %v3475
        %3477 = vdwg.mxu0
        %3478 = vmatprep.subr.mxu0 %v2417
        %3479 = vmatpush1.msra.mxu0 %v2416
        %3480 = vmatprep.subr.mxu0 %v2424
        %3481 = vmatpush1.msra.mxu0 %v2423
        %3482 = vmatprep.subr.mxu0 %v2431
        %3483 = vmatpush1.msra.mxu0 %v2430
        %3484 = vmatprep.subr.mxu0 %v2438
        %3485 = vmatpush1.msra.mxu0 %v2437
        %3486 = vmatprep.subr.mxu0 %v2445
        %3487 = vmatpush1.msra.mxu0 %v2444
        %3488 = vmatprep.subr.mxu0 %v2452
        %3489 = vmatpush1.msra.mxu0 %v2451
        %3490 = vmatprep.subr.mxu0 %v2459
        %3491 = vmatpush1.msra.mxu0 %v2458
        %3492 = vmatprep.subr.mxu0 %v2466
        %3493 = vmatpush1.msra.mxu0 %v2465
        %3494 = vmatprep.subr.mxu0 %v2473
        %3495 = vmatpush1.msra.mxu0 %v2472
        %3496 = vmatprep.subr.mxu0 %v2480
        %3497 = vmatpush1.msra.mxu0 %v2479
        %3498 = vmatprep.subr.mxu0 %v2487
        %3499 = vmatpush1.msra.mxu0 %v2486
        %3500 = vmatprep.subr.mxu0 %v2494
        %3501 = vmatpush1.msra.mxu0 %v2493
        %3502 = vmatprep.subr.mxu0 %v2501
        %3503 = vmatpush1.msra.mxu0 %v2500
        %3504 = vmatprep.subr.mxu0 %v2508
        %3505 = vmatpush1.msra.mxu0 %v2507
        %3506 = vmatprep.subr.mxu0 %v2515
        %3507 = vmatpush1.msra.mxu0 %v2514
        %3508 = vmatprep.subr.mxu0 %v2522
        %3509 = vmatpush1.msra.mxu0 %v2521
        %3510 = vmatprep.subr.mxu0 %v2529
        %3511 = vmatpush1.msra.mxu0 %v2528
        %3512 = vmatprep.subr.mxu0 %v2536
        %3513 = vmatpush1.msra.mxu0 %v2535
        %3514 = vmatprep.subr.mxu0 %v2543
        %3515 = vmatpush1.msra.mxu0 %v2542
        %3516 = vmatprep.subr.mxu0 %v2550
        %3517 = vmatpush1.msra.mxu0 %v2549
        %3518 = vmatprep.subr.mxu0 %v2557
        %3519 = vmatpush1.msra.mxu0 %v2556
        %3520 = vmatprep.subr.mxu0 %v2564
        %3521 = vmatpush1.msra.mxu0 %v2563
        %3522 = vmatprep.subr.mxu0 %v2571
        %3523 = vmatpush1.msra.mxu0 %v2570
        %3524 = vmatprep.subr.mxu0 %v2578
        %3525 = vmatpush1.msra.mxu0 %v2577
        %3526 = vmatprep.subr.mxu0 %v2585
        %3527 = vmatpush1.msra.mxu0 %v2584
        %3528 = vmatprep.subr.mxu0 %v2592
        %3529 = vmatpush1.msra.mxu0 %v2591
        %3530 = vmatprep.subr.mxu0 %v2599
        %3531 = vmatpush1.msra.mxu0 %v2598
        %3532 = vmatprep.subr.mxu0 %v2606
        %3533 = vmatpush1.msra.mxu0 %v2605
        %3534 = vmatprep.subr.mxu0 %v2613
        %3535 = vmatpush1.msra.mxu0 %v2612
        %3536 = vmatprep.subr.mxu0 %v2620
        %3537 = vmatpush1.msra.mxu0 %v2619
        %3538 = vmatprep.subr.mxu0 %v2627
        %3539 = vmatpush1.msra.mxu0 %v2626
        %3540 = vmatprep.subr.mxu0 %v2634
        %3541 = vmatpush1.msra.mxu0 %v2633
        %3542 = vmatprep.mubr.f32.mxu0 %v2185
        %3543 = vmatmul.mubr.f32.gmra.mrb[0].mxu0 %v2184
        %v3544 = vpop.f32.mrb[0].mxu0
        %v3545 = vadd.f32 %v3474, %v3544
        %v3546 = vpop.f32.mrb[0].mxu0
        %v3547 = vadd.f32 %v3476, %v3546
        %3548 = vdwg.mxu0
        %3549 = vmatprep.subr.mxu0 %v2641
        %3550 = vmatpush1.msra.mxu0 %v2640
        %3551 = vmatprep.subr.mxu0 %v2648
        %3552 = vmatpush1.msra.mxu0 %v2647
        %3553 = vmatprep.subr.mxu0 %v2655
        %3554 = vmatpush1.msra.mxu0 %v2654
        %3555 = vmatprep.subr.mxu0 %v2662
        %3556 = vmatpush1.msra.mxu0 %v2661
        %3557 = vmatprep.subr.mxu0 %v2669
        %3558 = vmatpush1.msra.mxu0 %v2668
        %3559 = vmatprep.subr.mxu0 %v2676
        %3560 = vmatpush1.msra.mxu0 %v2675
        %3561 = vmatprep.subr.mxu0 %v2683
        %3562 = vmatpush1.msra.mxu0 %v2682
        %3563 = vmatprep.subr.mxu0 %v2690
        %3564 = vmatpush1.msra.mxu0 %v2689
        %3565 = vmatprep.subr.mxu0 %v2697
        %3566 = vmatpush1.msra.mxu0 %v2696
        %3567 = vmatprep.subr.mxu0 %v2704
        %3568 = vmatpush1.msra.mxu0 %v2703
        %3569 = vmatprep.subr.mxu0 %v2711
        %3570 = vmatpush1.msra.mxu0 %v2710
        %3571 = vmatprep.subr.mxu0 %v2718
        %3572 = vmatpush1.msra.mxu0 %v2717
        %3573 = vmatprep.subr.mxu0 %v2725
        %3574 = vmatpush1.msra.mxu0 %v2724
        %3575 = vmatprep.subr.mxu0 %v2732
        %3576 = vmatpush1.msra.mxu0 %v2731
        %3577 = vmatprep.subr.mxu0 %v2739
        %3578 = vmatpush1.msra.mxu0 %v2738
        %3579 = vmatprep.subr.mxu0 %v2746
        %3580 = vmatpush1.msra.mxu0 %v2745
        %3581 = vmatprep.subr.mxu0 %v2753
        %3582 = vmatpush1.msra.mxu0 %v2752
        %3583 = vmatprep.subr.mxu0 %v2760
        %3584 = vmatpush1.msra.mxu0 %v2759
        %3585 = vmatprep.subr.mxu0 %v2767
        %3586 = vmatpush1.msra.mxu0 %v2766
        %3587 = vmatprep.subr.mxu0 %v2774
        %3588 = vmatpush1.msra.mxu0 %v2773
        %3589 = vmatprep.subr.mxu0 %v2781
        %3590 = vmatpush1.msra.mxu0 %v2780
        %3591 = vmatprep.subr.mxu0 %v2788
        %3592 = vmatpush1.msra.mxu0 %v2787
        %3593 = vmatprep.subr.mxu0 %v2795
        %3594 = vmatpush1.msra.mxu0 %v2794
        %3595 = vmatprep.subr.mxu0 %v2802
        %3596 = vmatpush1.msra.mxu0 %v2801
        %3597 = vmatprep.subr.mxu0 %v2809
        %3598 = vmatpush1.msra.mxu0 %v2808
        %3599 = vmatprep.subr.mxu0 %v2816
        %3600 = vmatpush1.msra.mxu0 %v2815
        %3601 = vmatprep.subr.mxu0 %v2823
        %3602 = vmatpush1.msra.mxu0 %v2822
        %3603 = vmatprep.subr.mxu0 %v2830
        %3604 = vmatpush1.msra.mxu0 %v2829
        %3605 = vmatprep.subr.mxu0 %v2837
        %3606 = vmatpush1.msra.mxu0 %v2836
        %3607 = vmatprep.subr.mxu0 %v2844
        %3608 = vmatpush1.msra.mxu0 %v2843
        %3609 = vmatprep.subr.mxu0 %v2851
        %3610 = vmatpush1.msra.mxu0 %v2850
        %3611 = vmatprep.subr.mxu0 %v2858
        %3612 = vmatpush1.msra.mxu0 %v2857
        %3613 = vmatprep.mubr.f32.mxu0 %v2187
        %3614 = vmatmul.mubr.f32.gmra.mrb[0].mxu0 %v2186
        %v3615 = vpop.f32.mrb[0].mxu0
        %v3616 = vadd.f32 %v3545, %v3615
        %v3617 = vpop.f32.mrb[0].mxu0
        %v3618 = vadd.f32 %v3547, %v3617
        %3619 = vdwg.mxu0
        %3620 = vmatprep.subr.mxu0 %v2865
        %3621 = vmatpush1.msra.mxu0 %v2864
        %3622 = vmatprep.subr.mxu0 %v2872
        %3623 = vmatpush1.msra.mxu0 %v2871
        %3624 = vmatprep.subr.mxu0 %v2879
        %3625 = vmatpush1.msra.mxu0 %v2878
        %3626 = vmatprep.subr.mxu0 %v2886
        %3627 = vmatpush1.msra.mxu0 %v2885
        %3628 = vmatprep.subr.mxu0 %v2893
        %3629 = vmatpush1.msra.mxu0 %v2892
        %3630 = vmatprep.subr.mxu0 %v2900
        %3631 = vmatpush1.msra.mxu0 %v2899
        %3632 = vmatprep.subr.mxu0 %v2907
        %3633 = vmatpush1.msra.mxu0 %v2906
        %3634 = vmatprep.subr.mxu0 %v2914
        %3635 = vmatpush1.msra.mxu0 %v2913
        %3636 = vmatprep.subr.mxu0 %v2921
        %3637 = vmatpush1.msra.mxu0 %v2920
        %3638 = vmatprep.subr.mxu0 %v2928
        %3639 = vmatpush1.msra.mxu0 %v2927
        %3640 = vmatprep.subr.mxu0 %v2935
        %3641 = vmatpush1.msra.mxu0 %v2934
        %3642 = vmatprep.subr.mxu0 %v2942
        %3643 = vmatpush1.msra.mxu0 %v2941
        %3644 = vmatprep.subr.mxu0 %v2949
        %3645 = vmatpush1.msra.mxu0 %v2948
        %3646 = vmatprep.subr.mxu0 %v2956
        %3647 = vmatpush1.msra.mxu0 %v2955
        %3648 = vmatprep.subr.mxu0 %v2963
        %3649 = vmatpush1.msra.mxu0 %v2962
        %3650 = vmatprep.subr.mxu0 %v2970
        %3651 = vmatpush1.msra.mxu0 %v2969
        %3652 = vmatprep.subr.mxu0 %v2977
        %3653 = vmatpush1.msra.mxu0 %v2976
        %3654 = vmatprep.subr.mxu0 %v2984
        %3655 = vmatpush1.msra.mxu0 %v2983
        %3656 = vmatprep.subr.mxu0 %v2991
        %3657 = vmatpush1.msra.mxu0 %v2990
        %3658 = vmatprep.subr.mxu0 %v2998
        %3659 = vmatpush1.msra.mxu0 %v2997
        %3660 = vmatprep.subr.mxu0 %v3005
        %3661 = vmatpush1.msra.mxu0 %v3004
        %3662 = vmatprep.subr.mxu0 %v3012
        %3663 = vmatpush1.msra.mxu0 %v3011
        %3664 = vmatprep.subr.mxu0 %v3019
        %3665 = vmatpush1.msra.mxu0 %v3018
        %3666 = vmatprep.subr.mxu0 %v3026
        %3667 = vmatpush1.msra.mxu0 %v3025
        %3668 = vmatprep.subr.mxu0 %v3033
        %3669 = vmatpush1.msra.mxu0 %v3032
        %3670 = vmatprep.subr.mxu0 %v3040
        %3671 = vmatpush1.msra.mxu0 %v3039
        %3672 = vmatprep.subr.mxu0 %v3047
        %3673 = vmatpush1.msra.mxu0 %v3046
        %3674 = vmatprep.subr.mxu0 %v3054
        %3675 = vmatpush1.msra.mxu0 %v3053
        %3676 = vmatprep.subr.mxu0 %v3061
        %3677 = vmatpush1.msra.mxu0 %v3060
        %3678 = vmatprep.subr.mxu0 %v3068
        %3679 = vmatpush1.msra.mxu0 %v3067
        %3680 = vmatprep.subr.mxu0 %v3075
        %3681 = vmatpush1.msra.mxu0 %v3074
        %3682 = vmatprep.subr.mxu0 %v3082
        %3683 = vmatpush1.msra.mxu0 %v3081
        %3684 = vmatprep.mubr.f32.mxu0 %v2189
        %3685 = vmatmul.mubr.f32.gmra.mrb[0].mxu0 %v2188
        %v3686 = vpop.f32.mrb[0].mxu0
        %v3687 = vadd.f32 %v3616, %v3686
        %v3688 = vpop.f32.mrb[0].mxu0
        %v3689 = vadd.f32 %v3618, %v3688
        %3690 = vdwg.mxu0
        %3691 = vmatprep.subr.mxu0 %v2195
        %3692 = vmatpush1.msra.mxu0 %v2194
        %3693 = vmatprep.subr.mxu0 %v2202
        %3694 = vmatpush1.msra.mxu0 %v2201
        %3695 = vmatprep.subr.mxu0 %v2209
        %3696 = vmatpush1.msra.mxu0 %v2208
        %3697 = vmatprep.subr.mxu0 %v2216
        %3698 = vmatpush1.msra.mxu0 %v2215
        %3699 = vmatprep.subr.mxu0 %v2223
        %3700 = vmatpush1.msra.mxu0 %v2222
        %3701 = vmatprep.subr.mxu0 %v2230
        %3702 = vmatpush1.msra.mxu0 %v2229
        %3703 = vmatprep.subr.mxu0 %v2237
        %3704 = vmatpush1.msra.mxu0 %v2236
        %3705 = vmatprep.subr.mxu0 %v2244
        %3706 = vmatpush1.msra.mxu0 %v2243
        %3707 = vmatprep.subr.mxu0 %v2251
        %3708 = vmatpush1.msra.mxu0 %v2250
        %3709 = vmatprep.subr.mxu0 %v2258
        %3710 = vmatpush1.msra.mxu0 %v2257
        %3711 = vmatprep.subr.mxu0 %v2265
        %3712 = vmatpush1.msra.mxu0 %v2264
        %3713 = vmatprep.subr.mxu0 %v2272
        %3714 = vmatpush1.msra.mxu0 %v2271
        %3715 = vmatprep.subr.mxu0 %v2279
        %3716 = vmatpush1.msra.mxu0 %v2278
        %3717 = vmatprep.subr.mxu0 %v2286
        %3718 = vmatpush1.msra.mxu0 %v2285
        %3719 = vmatprep.subr.mxu0 %v2293
        %3720 = vmatpush1.msra.mxu0 %v2292
        %3721 = vmatprep.subr.mxu0 %v2300
        %3722 = vmatpush1.msra.mxu0 %v2299
        %3723 = vmatprep.subr.mxu0 %v2307
        %3724 = vmatpush1.msra.mxu0 %v2306
        %3725 = vmatprep.subr.mxu0 %v2314
        %3726 = vmatpush1.msra.mxu0 %v2313
        %3727 = vmatprep.subr.mxu0 %v2321
        %3728 = vmatpush1.msra.mxu0 %v2320
        %3729 = vmatprep.subr.mxu0 %v2328
        %3730 = vmatpush1.msra.mxu0 %v2327
        %3731 = vmatprep.subr.mxu0 %v2335
        %3732 = vmatpush1.msra.mxu0 %v2334
        %3733 = vmatprep.subr.mxu0 %v2342
        %3734 = vmatpush1.msra.mxu0 %v2341
        %3735 = vmatprep.subr.mxu0 %v2349
        %3736 = vmatpush1.msra.mxu0 %v2348
        %3737 = vmatprep.subr.mxu0 %v2356
        %3738 = vmatpush1.msra.mxu0 %v2355
        %3739 = vmatprep.subr.mxu0 %v2363
        %3740 = vmatpush1.msra.mxu0 %v2362
        %3741 = vmatprep.subr.mxu0 %v2370
        %3742 = vmatpush1.msra.mxu0 %v2369
        %3743 = vmatprep.subr.mxu0 %v2377
        %3744 = vmatpush1.msra.mxu0 %v2376
        %3745 = vmatprep.subr.mxu0 %v2384
        %3746 = vmatpush1.msra.mxu0 %v2383
        %3747 = vmatprep.subr.mxu0 %v2391
        %3748 = vmatpush1.msra.mxu0 %v2390
        %3749 = vmatprep.subr.mxu0 %v2398
        %3750 = vmatpush1.msra.mxu0 %v2397
        %3751 = vmatprep.subr.mxu0 %v2405
        %3752 = vmatpush1.msra.mxu0 %v2404
        %3753 = vmatprep.subr.mxu0 %v2412
        %3754 = vmatpush1.msra.mxu0 %v2411
        %3755 = vmatprep.mubr.f32.mxu0 %v2183
        %3756 = vmatmul.mubr.f32.gmra.mrb[0].mxu0 %v2182
        %v3757 = vpop.f32.mrb[0].mxu0
        %v3758 = vadd.f32 %v3107, %v3757
        %v3759 = vpop.f32.mrb[0].mxu0
        %v3760 = vadd.f32 %v3111, %v3759
        %3761 = vdwg.mxu0
        %3762 = vmatprep.subr.mxu0 %v2419
        %3763 = vmatpush1.msra.mxu0 %v2418
        %3764 = vmatprep.subr.mxu0 %v2426
        %3765 = vmatpush1.msra.mxu0 %v2425
        %3766 = vmatprep.subr.mxu0 %v2433
        %3767 = vmatpush1.msra.mxu0 %v2432
        %3768 = vmatprep.subr.mxu0 %v2440
        %3769 = vmatpush1.msra.mxu0 %v2439
        %3770 = vmatprep.subr.mxu0 %v2447
        %3771 = vmatpush1.msra.mxu0 %v2446
        %3772 = vmatprep.subr.mxu0 %v2454
        %3773 = vmatpush1.msra.mxu0 %v2453
        %3774 = vmatprep.subr.mxu0 %v2461
        %3775 = vmatpush1.msra.mxu0 %v2460
        %3776 = vmatprep.subr.mxu0 %v2468
        %3777 = vmatpush1.msra.mxu0 %v2467
        %3778 = vmatprep.subr.mxu0 %v2475
        %3779 = vmatpush1.msra.mxu0 %v2474
        %3780 = vmatprep.subr.mxu0 %v2482
        %3781 = vmatpush1.msra.mxu0 %v2481
        %3782 = vmatprep.subr.mxu0 %v2489
        %3783 = vmatpush1.msra.mxu0 %v2488
        %3784 = vmatprep.subr.mxu0 %v2496
        %3785 = vmatpush1.msra.mxu0 %v2495
        %3786 = vmatprep.subr.mxu0 %v2503
        %3787 = vmatpush1.msra.mxu0 %v2502
        %3788 = vmatprep.subr.mxu0 %v2510
        %3789 = vmatpush1.msra.mxu0 %v2509
        %3790 = vmatprep.subr.mxu0 %v2517
        %3791 = vmatpush1.msra.mxu0 %v2516
        %3792 = vmatprep.subr.mxu0 %v2524
        %3793 = vmatpush1.msra.mxu0 %v2523
        %3794 = vmatprep.subr.mxu0 %v2531
        %3795 = vmatpush1.msra.mxu0 %v2530
        %3796 = vmatprep.subr.mxu0 %v2538
        %3797 = vmatpush1.msra.mxu0 %v2537
        %3798 = vmatprep.subr.mxu0 %v2545
        %3799 = vmatpush1.msra.mxu0 %v2544
        %3800 = vmatprep.subr.mxu0 %v2552
        %3801 = vmatpush1.msra.mxu0 %v2551
        %3802 = vmatprep.subr.mxu0 %v2559
        %3803 = vmatpush1.msra.mxu0 %v2558
        %3804 = vmatprep.subr.mxu0 %v2566
        %3805 = vmatpush1.msra.mxu0 %v2565
        %3806 = vmatprep.subr.mxu0 %v2573
        %3807 = vmatpush1.msra.mxu0 %v2572
        %3808 = vmatprep.subr.mxu0 %v2580
        %3809 = vmatpush1.msra.mxu0 %v2579
        %3810 = vmatprep.subr.mxu0 %v2587
        %3811 = vmatpush1.msra.mxu0 %v2586
        %3812 = vmatprep.subr.mxu0 %v2594
        %3813 = vmatpush1.msra.mxu0 %v2593
        %3814 = vmatprep.subr.mxu0 %v2601
        %3815 = vmatpush1.msra.mxu0 %v2600
        %3816 = vmatprep.subr.mxu0 %v2608
        %3817 = vmatpush1.msra.mxu0 %v2607
        %3818 = vmatprep.subr.mxu0 %v2615
        %3819 = vmatpush1.msra.mxu0 %v2614
        %3820 = vmatprep.subr.mxu0 %v2622
        %3821 = vmatpush1.msra.mxu0 %v2621
        %3822 = vmatprep.subr.mxu0 %v2629
        %3823 = vmatpush1.msra.mxu0 %v2628
        %3824 = vmatprep.subr.mxu0 %v2636
        %3825 = vmatpush1.msra.mxu0 %v2635
        %3826 = vmatprep.mubr.f32.mxu0 %v2185
        %3827 = vmatmul.mubr.f32.gmra.mrb[0].mxu0 %v2184
        %v3828 = vpop.f32.mrb[0].mxu0
        %v3829 = vadd.f32 %v3758, %v3828
        %v3830 = vpop.f32.mrb[0].mxu0
        %v3831 = vadd.f32 %v3760, %v3830
        %3832 = vdwg.mxu0
        %3833 = vmatprep.subr.mxu0 %v2643
        %3834 = vmatpush1.msra.mxu0 %v2642
        %3835 = vmatprep.subr.mxu0 %v2650
        %3836 = vmatpush1.msra.mxu0 %v2649
        %3837 = vmatprep.subr.mxu0 %v2657
        %3838 = vmatpush1.msra.mxu0 %v2656
        %3839 = vmatprep.subr.mxu0 %v2664
        %3840 = vmatpush1.msra.mxu0 %v2663
        %3841 = vmatprep.subr.mxu0 %v2671
        %3842 = vmatpush1.msra.mxu0 %v2670
        %3843 = vmatprep.subr.mxu0 %v2678
        %3844 = vmatpush1.msra.mxu0 %v2677
        %3845 = vmatprep.subr.mxu0 %v2685
        %3846 = vmatpush1.msra.mxu0 %v2684
        %3847 = vmatprep.subr.mxu0 %v2692
        %3848 = vmatpush1.msra.mxu0 %v2691
        %3849 = vmatprep.subr.mxu0 %v2699
        %3850 = vmatpush1.msra.mxu0 %v2698
        %3851 = vmatprep.subr.mxu0 %v2706
        %3852 = vmatpush1.msra.mxu0 %v2705
        %3853 = vmatprep.subr.mxu0 %v2713
        %3854 = vmatpush1.msra.mxu0 %v2712
        %3855 = vmatprep.subr.mxu0 %v2720
        %3856 = vmatpush1.msra.mxu0 %v2719
        %3857 = vmatprep.subr.mxu0 %v2727
        %3858 = vmatpush1.msra.mxu0 %v2726
        %3859 = vmatprep.subr.mxu0 %v2734
        %3860 = vmatpush1.msra.mxu0 %v2733
        %3861 = vmatprep.subr.mxu0 %v2741
        %3862 = vmatpush1.msra.mxu0 %v2740
        %3863 = vmatprep.subr.mxu0 %v2748
        %3864 = vmatpush1.msra.mxu0 %v2747
        %3865 = vmatprep.subr.mxu0 %v2755
        %3866 = vmatpush1.msra.mxu0 %v2754
        %3867 = vmatprep.subr.mxu0 %v2762
        %3868 = vmatpush1.msra.mxu0 %v2761
        %3869 = vmatprep.subr.mxu0 %v2769
        %3870 = vmatpush1.msra.mxu0 %v2768
        %3871 = vmatprep.subr.mxu0 %v2776
        %3872 = vmatpush1.msra.mxu0 %v2775
        %3873 = vmatprep.subr.mxu0 %v2783
        %3874 = vmatpush1.msra.mxu0 %v2782
        %3875 = vmatprep.subr.mxu0 %v2790
        %3876 = vmatpush1.msra.mxu0 %v2789
        %3877 = vmatprep.subr.mxu0 %v2797
        %3878 = vmatpush1.msra.mxu0 %v2796
        %3879 = vmatprep.subr.mxu0 %v2804
        %3880 = vmatpush1.msra.mxu0 %v2803
        %3881 = vmatprep.subr.mxu0 %v2811
        %3882 = vmatpush1.msra.mxu0 %v2810
        %3883 = vmatprep.subr.mxu0 %v2818
        %3884 = vmatpush1.msra.mxu0 %v2817
        %3885 = vmatprep.subr.mxu0 %v2825
        %3886 = vmatpush1.msra.mxu0 %v2824
        %3887 = vmatprep.subr.mxu0 %v2832
        %3888 = vmatpush1.msra.mxu0 %v2831
        %3889 = vmatprep.subr.mxu0 %v2839
        %3890 = vmatpush1.msra.mxu0 %v2838
        %3891 = vmatprep.subr.mxu0 %v2846
        %3892 = vmatpush1.msra.mxu0 %v2845
        %3893 = vmatprep.subr.mxu0 %v2853
        %3894 = vmatpush1.msra.mxu0 %v2852
        %3895 = vmatprep.subr.mxu0 %v2860
        %3896 = vmatpush1.msra.mxu0 %v2859
        %3897 = vmatprep.mubr.f32.mxu0 %v2187
        %3898 = vmatmul.mubr.f32.gmra.mrb[0].mxu0 %v2186
        %v3899 = vpop.f32.mrb[0].mxu0
        %v3900 = vadd.f32 %v3829, %v3899
        %v3901 = vpop.f32.mrb[0].mxu0
        %v3902 = vadd.f32 %v3831, %v3901
        %3903 = vdwg.mxu0
        %3904 = vmatprep.subr.mxu0 %v2867
        %3905 = vmatpush1.msra.mxu0 %v2866
        %3906 = vmatprep.subr.mxu0 %v2874
        %3907 = vmatpush1.msra.mxu0 %v2873
        %3908 = vmatprep.subr.mxu0 %v2881
        %3909 = vmatpush1.msra.mxu0 %v2880
        %3910 = vmatprep.subr.mxu0 %v2888
        %3911 = vmatpush1.msra.mxu0 %v2887
        %3912 = vmatprep.subr.mxu0 %v2895
        %3913 = vmatpush1.msra.mxu0 %v2894
        %3914 = vmatprep.subr.mxu0 %v2902
        %3915 = vmatpush1.msra.mxu0 %v2901
        %3916 = vmatprep.subr.mxu0 %v2909
        %3917 = vmatpush1.msra.mxu0 %v2908
        %3918 = vmatprep.subr.mxu0 %v2916
        %3919 = vmatpush1.msra.mxu0 %v2915
        %3920 = vmatprep.subr.mxu0 %v2923
        %3921 = vmatpush1.msra.mxu0 %v2922
        %3922 = vmatprep.subr.mxu0 %v2930
        %3923 = vmatpush1.msra.mxu0 %v2929
        %3924 = vmatprep.subr.mxu0 %v2937
        %3925 = vmatpush1.msra.mxu0 %v2936
        %3926 = vmatprep.subr.mxu0 %v2944
        %3927 = vmatpush1.msra.mxu0 %v2943
        %3928 = vmatprep.subr.mxu0 %v2951
        %3929 = vmatpush1.msra.mxu0 %v2950
        %3930 = vmatprep.subr.mxu0 %v2958
        %3931 = vmatpush1.msra.mxu0 %v2957
        %3932 = vmatprep.subr.mxu0 %v2965
        %3933 = vmatpush1.msra.mxu0 %v2964
        %3934 = vmatprep.subr.mxu0 %v2972
        %3935 = vmatpush1.msra.mxu0 %v2971
        %3936 = vmatprep.subr.mxu0 %v2979
        %3937 = vmatpush1.msra.mxu0 %v2978
        %3938 = vmatprep.subr.mxu0 %v2986
        %3939 = vmatpush1.msra.mxu0 %v2985
        %3940 = vmatprep.subr.mxu0 %v2993
        %3941 = vmatpush1.msra.mxu0 %v2992
        %3942 = vmatprep.subr.mxu0 %v3000
        %3943 = vmatpush1.msra.mxu0 %v2999
        %3944 = vmatprep.subr.mxu0 %v3007
        %3945 = vmatpush1.msra.mxu0 %v3006
        %3946 = vmatprep.subr.mxu0 %v3014
        %3947 = vmatpush1.msra.mxu0 %v3013
        %3948 = vmatprep.subr.mxu0 %v3021
        %3949 = vmatpush1.msra.mxu0 %v3020
        %3950 = vmatprep.subr.mxu0 %v3028
        %3951 = vmatpush1.msra.mxu0 %v3027
        %3952 = vmatprep.subr.mxu0 %v3035
        %3953 = vmatpush1.msra.mxu0 %v3034
        %3954 = vmatprep.subr.mxu0 %v3042
        %3955 = vmatpush1.msra.mxu0 %v3041
        %3956 = vmatprep.subr.mxu0 %v3049
        %3957 = vmatpush1.msra.mxu0 %v3048
        %3958 = vmatprep.subr.mxu0 %v3056
        %3959 = vmatpush1.msra.mxu0 %v3055
        %3960 = vmatprep.subr.mxu0 %v3063
        %3961 = vmatpush1.msra.mxu0 %v3062
        %3962 = vmatprep.subr.mxu0 %v3070
        %3963 = vmatpush1.msra.mxu0 %v3069
        %3964 = vmatprep.subr.mxu0 %v3077
        %3965 = vmatpush1.msra.mxu0 %v3076
        %3966 = vmatprep.subr.mxu0 %v3084
        %3967 = vmatpush1.msra.mxu0 %v3083
        %3968 = vmatprep.mubr.f32.mxu0 %v2189
        %3969 = vmatmul.mubr.f32.gmra.mrb[0].mxu0 %v2188
        %v3970 = vpop.f32.mrb[0].mxu0
        %v3971 = vadd.f32 %v3900, %v3970
        %v3972 = vpop.f32.mrb[0].mxu0
        %v3973 = vadd.f32 %v3902, %v3972
        %3974 = vdwg.mxu0
        %3975 = vmatprep.subr.mxu0 0.0
        %3976 = vmatpush1.msra.mxu0 %v2196
        %3977 = vmatprep.subr.mxu0 0.0
        %3978 = vmatpush1.msra.mxu0 %v2203
        %3979 = vmatprep.subr.mxu0 0.0
        %3980 = vmatpush1.msra.mxu0 %v2210
        %3981 = vmatprep.subr.mxu0 0.0
        %3982 = vmatpush1.msra.mxu0 %v2217
        %3983 = vmatprep.subr.mxu0 0.0
        %3984 = vmatpush1.msra.mxu0 %v2224
        %3985 = vmatprep.subr.mxu0 0.0
        %3986 = vmatpush1.msra.mxu0 %v2231
        %3987 = vmatprep.subr.mxu0 0.0
        %3988 = vmatpush1.msra.mxu0 %v2238
        %3989 = vmatprep.subr.mxu0 0.0
        %3990 = vmatpush1.msra.mxu0 %v2245
        %3991 = vmatprep.subr.mxu0 0.0
        %3992 = vmatpush1.msra.mxu0 %v2252
        %3993 = vmatprep.subr.mxu0 0.0
        %3994 = vmatpush1.msra.mxu0 %v2259
        %3995 = vmatprep.subr.mxu0 0.0
        %3996 = vmatpush1.msra.mxu0 %v2266
        %3997 = vmatprep.subr.mxu0 0.0
        %3998 = vmatpush1.msra.mxu0 %v2273
        %3999 = vmatprep.subr.mxu0 0.0
        %4000 = vmatpush1.msra.mxu0 %v2280
        %4001 = vmatprep.subr.mxu0 0.0
        %4002 = vmatpush1.msra.mxu0 %v2287
        %4003 = vmatprep.subr.mxu0 0.0
        %4004 = vmatpush1.msra.mxu0 %v2294
        %4005 = vmatprep.subr.mxu0 0.0
        %4006 = vmatpush1.msra.mxu0 %v2301
        %4007 = vmatprep.subr.mxu0 0.0
        %4008 = vmatpush1.msra.mxu0 %v2308
        %4009 = vmatprep.subr.mxu0 0.0
        %4010 = vmatpush1.msra.mxu0 %v2315
        %4011 = vmatprep.subr.mxu0 0.0
        %4012 = vmatpush1.msra.mxu0 %v2322
        %4013 = vmatprep.subr.mxu0 0.0
        %4014 = vmatpush1.msra.mxu0 %v2329
        %4015 = vmatprep.subr.mxu0 0.0
        %4016 = vmatpush1.msra.mxu0 %v2336
        %4017 = vmatprep.subr.mxu0 0.0
        %4018 = vmatpush1.msra.mxu0 %v2343
        %4019 = vmatprep.subr.mxu0 0.0
        %4020 = vmatpush1.msra.mxu0 %v2350
        %4021 = vmatprep.subr.mxu0 0.0
        %4022 = vmatpush1.msra.mxu0 %v2357
        %4023 = vmatprep.subr.mxu0 0.0
        %4024 = vmatpush1.msra.mxu0 %v2364
        %4025 = vmatprep.subr.mxu0 0.0
        %4026 = vmatpush1.msra.mxu0 %v2371
        %4027 = vmatprep.subr.mxu0 0.0
        %4028 = vmatpush1.msra.mxu0 %v2378
        %4029 = vmatprep.subr.mxu0 0.0
        %4030 = vmatpush1.msra.mxu0 %v2385
        %4031 = vmatprep.subr.mxu0 0.0
        %4032 = vmatpush1.msra.mxu0 %v2392
        %4033 = vmatprep.subr.mxu0 0.0
        %4034 = vmatpush1.msra.mxu0 %v2399
        %4035 = vmatprep.subr.mxu0 0.0
        %4036 = vmatpush1.msra.mxu0 %v2406
        %4037 = vmatprep.subr.mxu0 0.0
        %4038 = vmatpush1.msra.mxu0 %v2413
        %4039 = vmatprep.mubr.f32.mxu0 %v2183
        %4040 = vmatmul.mubr.f32.gmra.mrb[0].mxu0 %v2182
        %v4041 = vpop.f32.mrb[0].mxu0
        %v4042 = vadd.f32 %v3115, %v4041
        %v4043 = vpop.f32.mrb[0].mxu0
        %4044 = vdwg.mxu0
        %4045 = vmatprep.subr.mxu0 0.0
        %4046 = vmatpush1.msra.mxu0 %v2420
        %4047 = vmatprep.subr.mxu0 0.0
        %4048 = vmatpush1.msra.mxu0 %v2427
        %4049 = vmatprep.subr.mxu0 0.0
        %4050 = vmatpush1.msra.mxu0 %v2434
        %4051 = vmatprep.subr.mxu0 0.0
        %4052 = vmatpush1.msra.mxu0 %v2441
        %4053 = vmatprep.subr.mxu0 0.0
        %4054 = vmatpush1.msra.mxu0 %v2448
        %4055 = vmatprep.subr.mxu0 0.0
        %4056 = vmatpush1.msra.mxu0 %v2455
        %4057 = vmatprep.subr.mxu0 0.0
        %4058 = vmatpush1.msra.mxu0 %v2462
        %4059 = vmatprep.subr.mxu0 0.0
        %4060 = vmatpush1.msra.mxu0 %v2469
        %4061 = vmatprep.subr.mxu0 0.0
        %4062 = vmatpush1.msra.mxu0 %v2476
        %4063 = vmatprep.subr.mxu0 0.0
        %4064 = vmatpush1.msra.mxu0 %v2483
        %4065 = vmatprep.subr.mxu0 0.0
        %4066 = vmatpush1.msra.mxu0 %v2490
        %4067 = vmatprep.subr.mxu0 0.0
        %4068 = vmatpush1.msra.mxu0 %v2497
        %4069 = vmatprep.subr.mxu0 0.0
        %4070 = vmatpush1.msra.mxu0 %v2504
        %4071 = vmatprep.subr.mxu0 0.0
        %4072 = vmatpush1.msra.mxu0 %v2511
        %4073 = vmatprep.subr.mxu0 0.0
        %4074 = vmatpush1.msra.mxu0 %v2518
        %4075 = vmatprep.subr.mxu0 0.0
        %4076 = vmatpush1.msra.mxu0 %v2525
        %4077 = vmatprep.subr.mxu0 0.0
        %4078 = vmatpush1.msra.mxu0 %v2532
        %4079 = vmatprep.subr.mxu0 0.0
        %4080 = vmatpush1.msra.mxu0 %v2539
        %4081 = vmatprep.subr.mxu0 0.0
        %4082 = vmatpush1.msra.mxu0 %v2546
        %4083 = vmatprep.subr.mxu0 0.0
        %4084 = vmatpush1.msra.mxu0 %v2553
        %4085 = vmatprep.subr.mxu0 0.0
        %4086 = vmatpush1.msra.mxu0 %v2560
        %4087 = vmatprep.subr.mxu0 0.0
        %4088 = vmatpush1.msra.mxu0 %v2567
        %4089 = vmatprep.subr.mxu0 0.0
        %4090 = vmatpush1.msra.mxu0 %v2574
        %4091 = vmatprep.subr.mxu0 0.0
        %4092 = vmatpush1.msra.mxu0 %v2581
        %4093 = vmatprep.subr.mxu0 0.0
        %4094 = vmatpush1.msra.mxu0 %v2588
        %4095 = vmatprep.subr.mxu0 0.0
        %4096 = vmatpush1.msra.mxu0 %v2595
        %4097 = vmatprep.subr.mxu0 0.0
        %4098 = vmatpush1.msra.mxu0 %v2602
        %4099 = vmatprep.subr.mxu0 0.0
        %4100 = vmatpush1.msra.mxu0 %v2609
        %4101 = vmatprep.subr.mxu0 0.0
        %4102 = vmatpush1.msra.mxu0 %v2616
        %4103 = vmatprep.subr.mxu0 0.0
        %4104 = vmatpush1.msra.mxu0 %v2623
        %4105 = vmatprep.subr.mxu0 0.0
        %4106 = vmatpush1.msra.mxu0 %v2630
        %4107 = vmatprep.subr.mxu0 0.0
        %4108 = vmatpush1.msra.mxu0 %v2637
        %4109 = vmatprep.mubr.f32.mxu0 %v2185
        %4110 = vmatmul.mubr.f32.gmra.mrb[0].mxu0 %v2184
        %v4111 = vpop.f32.mrb[0].mxu0
        %v4112 = vadd.f32 %v4042, %v4111
        %v4113 = vpop.f32.mrb[0].mxu0
        %4114 = vdwg.mxu0
        %4115 = vmatprep.subr.mxu0 0.0
        %4116 = vmatpush1.msra.mxu0 %v2644
        %4117 = vmatprep.subr.mxu0 0.0
        %4118 = vmatpush1.msra.mxu0 %v2651
        %4119 = vmatprep.subr.mxu0 0.0
        %4120 = vmatpush1.msra.mxu0 %v2658
        %4121 = vmatprep.subr.mxu0 0.0
        %4122 = vmatpush1.msra.mxu0 %v2665
        %4123 = vmatprep.subr.mxu0 0.0
        %4124 = vmatpush1.msra.mxu0 %v2672
        %4125 = vmatprep.subr.mxu0 0.0
        %4126 = vmatpush1.msra.mxu0 %v2679
        %4127 = vmatprep.subr.mxu0 0.0
        %4128 = vmatpush1.msra.mxu0 %v2686
        %4129 = vmatprep.subr.mxu0 0.0
        %4130 = vmatpush1.msra.mxu0 %v2693
        %4131 = vmatprep.subr.mxu0 0.0
        %4132 = vmatpush1.msra.mxu0 %v2700
        %4133 = vmatprep.subr.mxu0 0.0
        %4134 = vmatpush1.msra.mxu0 %v2707
        %4135 = vmatprep.subr.mxu0 0.0
        %4136 = vmatpush1.msra.mxu0 %v2714
        %4137 = vmatprep.subr.mxu0 0.0
        %4138 = vmatpush1.msra.mxu0 %v2721
        %4139 = vmatprep.subr.mxu0 0.0
        %4140 = vmatpush1.msra.mxu0 %v2728
        %4141 = vmatprep.subr.mxu0 0.0
        %4142 = vmatpush1.msra.mxu0 %v2735
        %4143 = vmatprep.subr.mxu0 0.0
        %4144 = vmatpush1.msra.mxu0 %v2742
        %4145 = vmatprep.subr.mxu0 0.0
        %4146 = vmatpush1.msra.mxu0 %v2749
        %4147 = vmatprep.subr.mxu0 0.0
        %4148 = vmatpush1.msra.mxu0 %v2756
        %4149 = vmatprep.subr.mxu0 0.0
        %4150 = vmatpush1.msra.mxu0 %v2763
        %4151 = vmatprep.subr.mxu0 0.0
        %4152 = vmatpush1.msra.mxu0 %v2770
        %4153 = vmatprep.subr.mxu0 0.0
        %4154 = vmatpush1.msra.mxu0 %v2777
        %4155 = vmatprep.subr.mxu0 0.0
        %4156 = vmatpush1.msra.mxu0 %v2784
        %4157 = vmatprep.subr.mxu0 0.0
        %4158 = vmatpush1.msra.mxu0 %v2791
        %4159 = vmatprep.subr.mxu0 0.0
        %4160 = vmatpush1.msra.mxu0 %v2798
        %4161 = vmatprep.subr.mxu0 0.0
        %4162 = vmatpush1.msra.mxu0 %v2805
        %4163 = vmatprep.subr.mxu0 0.0
        %4164 = vmatpush1.msra.mxu0 %v2812
        %4165 = vmatprep.subr.mxu0 0.0
        %4166 = vmatpush1.msra.mxu0 %v2819
        %4167 = vmatprep.subr.mxu0 0.0
        %4168 = vmatpush1.msra.mxu0 %v2826
        %4169 = vmatprep.subr.mxu0 0.0
        %4170 = vmatpush1.msra.mxu0 %v2833
        %4171 = vmatprep.subr.mxu0 0.0
        %4172 = vmatpush1.msra.mxu0 %v2840
        %4173 = vmatprep.subr.mxu0 0.0
        %4174 = vmatpush1.msra.mxu0 %v2847
        %4175 = vmatprep.subr.mxu0 0.0
        %4176 = vmatpush1.msra.mxu0 %v2854
        %4177 = vmatprep.subr.mxu0 0.0
        %4178 = vmatpush1.msra.mxu0 %v2861
        %4179 = vmatprep.mubr.f32.mxu0 %v2187
        %4180 = vmatmul.mubr.f32.gmra.mrb[0].mxu0 %v2186
        %v4181 = vpop.f32.mrb[0].mxu0
        %v4182 = vadd.f32 %v4112, %v4181
        %v4183 = vpop.f32.mrb[0].mxu0
        %4184 = vdwg.mxu0
        %4185 = vmatprep.subr.mxu0 0.0
        %4186 = vmatpush1.msra.mxu0 %v2868
        %4187 = vmatprep.subr.mxu0 0.0
        %4188 = vmatpush1.msra.mxu0 %v2875
        %4189 = vmatprep.subr.mxu0 0.0
        %4190 = vmatpush1.msra.mxu0 %v2882
        %4191 = vmatprep.subr.mxu0 0.0
        %4192 = vmatpush1.msra.mxu0 %v2889
        %4193 = vmatprep.subr.mxu0 0.0
        %4194 = vmatpush1.msra.mxu0 %v2896
        %4195 = vmatprep.subr.mxu0 0.0
        %4196 = vmatpush1.msra.mxu0 %v2903
        %4197 = vmatprep.subr.mxu0 0.0
        %4198 = vmatpush1.msra.mxu0 %v2910
        %4199 = vmatprep.subr.mxu0 0.0
        %4200 = vmatpush1.msra.mxu0 %v2917
        %4201 = vmatprep.subr.mxu0 0.0
        %4202 = vmatpush1.msra.mxu0 %v2924
        %4203 = vmatprep.subr.mxu0 0.0
        %4204 = vmatpush1.msra.mxu0 %v2931
        %4205 = vmatprep.subr.mxu0 0.0
        %4206 = vmatpush1.msra.mxu0 %v2938
        %4207 = vmatprep.subr.mxu0 0.0
        %4208 = vmatpush1.msra.mxu0 %v2945
        %4209 = vmatprep.subr.mxu0 0.0
        %4210 = vmatpush1.msra.mxu0 %v2952
        %4211 = vmatprep.subr.mxu0 0.0
        %4212 = vmatpush1.msra.mxu0 %v2959
        %4213 = vmatprep.subr.mxu0 0.0
        %4214 = vmatpush1.msra.mxu0 %v2966
        %4215 = vmatprep.subr.mxu0 0.0
        %4216 = vmatpush1.msra.mxu0 %v2973
        %4217 = vmatprep.subr.mxu0 0.0
        %4218 = vmatpush1.msra.mxu0 %v2980
        %4219 = vmatprep.subr.mxu0 0.0
        %4220 = vmatpush1.msra.mxu0 %v2987
        %4221 = vmatprep.subr.mxu0 0.0
        %4222 = vmatpush1.msra.mxu0 %v2994
        %4223 = vmatprep.subr.mxu0 0.0
        %4224 = vmatpush1.msra.mxu0 %v3001
        %4225 = vmatprep.subr.mxu0 0.0
        %4226 = vmatpush1.msra.mxu0 %v3008
        %4227 = vmatprep.subr.mxu0 0.0
        %4228 = vmatpush1.msra.mxu0 %v3015
        %4229 = vmatprep.subr.mxu0 0.0
        %4230 = vmatpush1.msra.mxu0 %v3022
        %4231 = vmatprep.subr.mxu0 0.0
        %4232 = vmatpush1.msra.mxu0 %v3029
        %4233 = vmatprep.subr.mxu0 0.0
        %4234 = vmatpush1.msra.mxu0 %v3036
        %4235 = vmatprep.subr.mxu0 0.0
        %4236 = vmatpush1.msra.mxu0 %v3043
        %4237 = vmatprep.subr.mxu0 0.0
        %4238 = vmatpush1.msra.mxu0 %v3050
        %4239 = vmatprep.subr.mxu0 0.0
        %4240 = vmatpush1.msra.mxu0 %v3057
        %4241 = vmatprep.subr.mxu0 0.0
        %4242 = vmatpush1.msra.mxu0 %v3064
        %4243 = vmatprep.subr.mxu0 0.0
        %4244 = vmatpush1.msra.mxu0 %v3071
        %4245 = vmatprep.subr.mxu0 0.0
        %4246 = vmatpush1.msra.mxu0 %v3078
        %4247 = vmatprep.subr.mxu0 0.0
        %4248 = vmatpush1.msra.mxu0 %v3085
        %4249 = vmatprep.mubr.f32.mxu0 %v2189
        %4250 = vmatmul.mubr.f32.gmra.mrb[0].mxu0 %v2188
        %v4251 = vpop.f32.mrb[0].mxu0
        %v4252 = vadd.f32 %v4182, %v4251
        %v4253 = vpop.f32.mrb[0].mxu0
        %4254 = vdwg.mxu0
        %v4255 = vtanh.pop %v3403
        %v4256 = vtanh.pop %v3405
        %v4257 = vtanh.pop %v3687
        %v4258 = vtanh.pop %v3689
        %v4259 = vtanh.pop %v3971
        %v4260 = vtanh.pop %v3973
        %v4261 = vtanh.pop %v4252
        %4262 = vst [vmem:[%s536] sm:$0xff] %v4255
        %4263 = vst [vmem:[%s536 + $0x8] sm:$0xff] %v4256
        %4264 = vst [vmem:[%s536 + $0x10] sm:$0xff] %v4257
        %4265 = vst [vmem:[%s536 + $0x18] sm:$0xff] %v4258
        %4266 = vst [vmem:[%s536 + $0x20] sm:$0xff] %v4259
        %4267 = vst [vmem:[%s536 + $0x28] sm:$0xff] %v4260
        %4268 = vst [vmem:[%s536 + $0x30] sm:$0xff] %v4261
        %s4269 = sand.u32 %s277, 1
        %s4270 = scalar_lea.sflag [#allocation4], %s4269
        %s4271 = sand.u32 %s277, 1
        %s4272 = smul.addr %s4271, 56
        %s4273 = scalar_lea.vmem [#allocation20], %s4272
        // Predicated region
        $region109: #{tpu_custom_call.1} parent=63 // pred_check
          %p4274 = pneg %p287
        $region110: #{tpu_custom_call.1} parent=63 // pred_check_branch
          %4276 = sbr.rel (%p4274) target = $region112
        $region111: #{tpu_custom_call.1} parent=63 // pred_region
          %s4278 = ssub.s32 896, 896
          %4279 = vsyncadd %s4270, %s4278
          %s4280 = smul.addr %s33, 7
          %s4281 = smul.addr %s4280, 128
          %s4282 = scalar_lea.hbm %s11, %s4281
          %s4284 = sshll.u32 %s4273, 4
          %s4285 = int_to_ptr.vmem [resolvable:$true] %s4284
          %4287 = dma.vmem_to_hbm [thread:$0]  %s4285, 896, %s4282, %s4270
        $region112: #{tpu_custom_call.1} parent=63 // pred_fallthru
          _
      $region64: #{tpu_custom_call.1} parent=5 // pred_fallthru
        _
      %p4288 = scmp.le.s32.totalorder 2, %s28
      // Predicated region
      $region113: #{tpu_custom_call.1} parent=5 // pred_check
        %p4289 = pneg %p4288
      $region114: #{tpu_custom_call.1} parent=5 // pred_check_branch
        %4291 = sbr.rel (%p4289) target = $region116
      $region115: #{tpu_custom_call.1} parent=5 // pred_region
        %s4292 = ssub.s32 %s28, 2
        // Predicated region
        $region117: #{tpu_custom_call.1} parent=115 // pred_check
          %p4293 = pneg %p293
        $region118: #{tpu_custom_call.1} parent=115 // pred_check_branch
          %4295 = sbr.rel (%p4293) target = $region120
        $region119: #{tpu_custom_call.1} parent=115 // pred_region
          %s4296 = sand.u32 %s278, 1
          %s4297 = scalar_lea.sflag [#allocation4], %s4296
          %s4298 = sand.u32 %s278, 1
          %s4299 = smul.addr %s4298, 56
          %s4300 = scalar_lea.vmem [#allocation20], %s4299
          %4301 = dma.done %s4297, 896
        $region120: #{tpu_custom_call.1} parent=115 // pred_fallthru
          _
      $region116: #{tpu_custom_call.1} parent=5 // pred_fallthru
        _
    $region6: #{tpu_custom_call.1} parent=1 // loop_footer
      %s32 = sadd.s32 1, %s28
    $region7: #{tpu_custom_call.1} parent=1 // loop_footer_branch
      %27 = sbr.rel target = $region3
    $region8: #{tpu_custom_call.1} parent=1 // loop_exit
      _
    %4302 = vsyncpa [#allocation3], 1
    %s4303 = scalar_lea.sflag [#allocation3], 1
    %4304 = vsyncpa %s4303, 1
    %4305 = vsyncpa [#allocation6], 1
    %4306 = vsyncpa [#allocation9], 1
    %4307 = vsyncpa [#allocation12], 1
    %4308 = vsyncpa [#allocation15], 1
    %4309 = vsyncpa [#allocation18], 1
    %4310 = vsyncpa [#allocation4], 1
    %s4311 = scalar_lea.sflag [#allocation4], 1
    %4312 = vsyncpa %s4311, 1

</llo_original>
